<compile_context>
chip_gen: v5e
topology: v5e:2x2
jax: 0.10.0
libtpu: 0.0.40
codegen_flags: <defaults>
</compile_context>

<pallas_src>
import jax
import jax.numpy as jnp
from jax.experimental import pallas as pl
from jax.experimental.pallas import tpu as pltpu


def _round_up(x, m):
    return (x + m - 1) // m * m


# ----------------------------------------------------------------------------
# Fused Pallas kernel: whole Mnist forward for one batch tile.
# ----------------------------------------------------------------------------

def mnist_fused_kernel(x_ref, w1e_ref, w1o_ref, b1_ref, m2e_ref, m2o_ref,
                       b2_ref, wf1_ref, bf1_ref, wf2_ref, bf2_ref, out_ref):
    """x_ref: (28, TB, 28) bf16 input rows, TB = batch tile (multiple of 8).

    Activation matrices have rows ordered (spatial_row, batch) and
    channel/spatial-column pairs packed densely on lanes, so pooling and
    im2col only touch leading dims or do element-wise maxes.
    """
    tb = x_ref.shape[1]
    cdt = x_ref.dtype                     # MXU operand dtype (bf16)

    x = x_ref[...]                        # (28, TB, 28) bf16

    # ---- conv1 (+ folded BatchNorm) as ONE K=140 matmul per parity ---------
    # im2col slab: lane 28*di + col  ->  x[b, i+di, col]   (i = output row)
    slab = jnp.concatenate(
        [x[di:di + 24].reshape(24 * tb, 28) for di in range(5)], axis=-1)
    # even columns (j = 2k) and odd columns (j = 2k+1), each 12*20 = 240 lanes
    y1e = jnp.dot(slab, w1e_ref[...], preferred_element_type=jnp.float32)
    y1o = jnp.dot(slab, w1o_ref[...], preferred_element_type=jnp.float32)

    # ---- maxpool1 (2x2): W via elementwise even/odd max, H via row-pair max
    w1p = jnp.maximum(y1e, y1o).reshape(12, 2, tb, 240)
    p1 = jnp.maximum(w1p[:, 0], w1p[:, 1])            # (12, TB, 240)
    # bias (+BN shift) and ReLU6 commute with max-pool -> apply once post-pool
    p1 = jnp.clip(p1 + b1_ref[...], 0.0, 6.0)
    p1c = p1.astype(cdt)                               # single bf16 cast

    # ---- conv2: 5 banded matmuls (K = 240, dense), even/odd output columns -
    y2e = None
    y2o = None
    for di in range(5):
        xs = p1c[di:di + 8].reshape(8 * tb, 240)
        te = jnp.dot(xs, m2e_ref[di], preferred_element_type=jnp.float32)
        to = jnp.dot(xs, m2o_ref[di], preferred_element_type=jnp.float32)
        y2e = te if y2e is None else y2e + te
        y2o = to if y2o is None else y2o + to

    # ---- maxpool2 (2x2), then bias + ReLU6 ---------------------------------
    w2p = jnp.maximum(y2e, y2o).reshape(4, 2, tb, 200)
    p2 = jnp.maximum(w2p[:, 0], w2p[:, 1])             # (4, TB, 200)
    p2 = jnp.clip(p2 + b2_ref[...], 0.0, 6.0)
    p2c = p2.astype(cdt)                               # single bf16 cast

    # ---- fc1 + ReLU6: 4 banded matmuls (K = 200, dense); PyTorch (C,H,W)
    #      flatten order is folded into wf1 at prep time ----------------------
    h = None
    for p in range(4):
        t = jnp.dot(p2c[p], wf1_ref[p], preferred_element_type=jnp.float32)
        h = t if h is None else h + t
    h = jnp.clip(h + bf1_ref[...], 0.0, 6.0)           # (TB, 500)

    # ---- fc2 + log_softmax --------------------------------------------------
    logits = jnp.dot(h.astype(cdt), wf2_ref[...],
                     preferred_element_type=jnp.float32) + bf2_ref[...]
    m = jnp.max(logits, axis=-1, keepdims=True)
    sh = logits - m
    lse = jnp.log(jnp.sum(jnp.exp(sh), axis=-1, keepdims=True))
    out_ref[...] = (sh - lse).astype(out_ref.dtype)    # (TB, 10)


# ----------------------------------------------------------------------------
# Param preparation (runs once, outside the jitted forward):
#  - fold BatchNorm into conv1
#  - build even/odd "banded" conv matrices against the DENSE pooled layouts
#  - fold im2col (K=140) into conv1's weights
#  - fold the PyTorch (C,H,W) flatten order into fc1's weights
# ----------------------------------------------------------------------------

def prepare_params(p, eps=1e-5, compute_dtype=jnp.bfloat16):
    f32 = jnp.float32
    w1 = p["conv1_w"].astype(f32)[:, 0]                # (20, 5, 5)
    c1 = p["conv1_b"].astype(f32)                      # (20,)
    s = p["bn_gamma"].astype(f32) / jnp.sqrt(p["bn_var"].astype(f32) + eps)
    t = p["bn_beta"].astype(f32) - s * p["bn_mean"].astype(f32)
    w1f = w1 * s[:, None, None]                        # BN scale folded
    b1f = s * c1 + t                                   # BN shift folded

    # conv1: W1{e,o}[28*di + col, 20*k + o] = w1f[o, di, col - (2k+parity)]
    di = (jnp.arange(140) // 28)[:, None]              # (140, 1)
    col = (jnp.arange(140) % 28)[:, None]              # (140, 1)
    k = (jnp.arange(240) // 20)[None, :]               # (1, 240) pooled col
    o = (jnp.arange(240) % 20)[None, :]                # (1, 240) out channel

    def conv1_mat(parity):
        dj = col - (2 * k + parity)
        valid = (dj >= 0) & (dj <= 4)
        return jnp.where(valid, w1f[o, di, jnp.clip(dj, 0, 4)], 0.0)

    w1e = conv1_mat(0)                                 # (140, 240)
    w1o = conv1_mat(1)
    b1 = jnp.tile(b1f, 12)[None, :]                    # (1, 240)

    # conv2: M2{e,o}[band][20*k + ci, 50*m + co] = w2[co, ci, band, k-(2m+par)]
    w2 = p["conv2_w"].astype(f32)                      # (50, 20, 5, 5)
    k2 = (jnp.arange(240) // 20)[:, None]              # (240, 1) pool1 col
    ci = (jnp.arange(240) % 20)[:, None]               # (240, 1) in channel
    mo = (jnp.arange(200) // 50)[None, :]              # (1, 200) pooled col
    co = (jnp.arange(200) % 50)[None, :]               # (1, 200) out channel

    def conv2_mat(band, parity):
        w2d = w2[:, :, band, :]                        # (50, 20, 5)
        dj = k2 - (2 * mo + parity)
        valid = (dj >= 0) & (dj <= 4)
        return jnp.where(valid, w2d[co, ci, jnp.clip(dj, 0, 4)], 0.0)

    m2e = jnp.stack([conv2_mat(d, 0) for d in range(5)], axis=0)   # (5,240,200)
    m2o = jnp.stack([conv2_mat(d, 1) for d in range(5)], axis=0)
    b2 = jnp.tile(p["conv2_b"].astype(f32), 4)[None, :]            # (1, 200)

    # fc1: input lane 50*m + c of pooled row p maps to flat index c*16 + p*4 + m
    fc1_wT = p["fc1_w"].astype(f32).T                  # (800, 500)
    mm = jnp.arange(200) // 50
    cc = jnp.arange(200) % 50
    wf1 = jnp.stack([fc1_wT[cc * 16 + pp * 4 + mm, :] for pp in range(4)],
                    axis=0)                            # (4, 200, 500)
    bf1 = p["fc1_b"].astype(f32)[None, :]              # (1, 500)

    wf2 = p["fc2_w"].astype(f32).T                     # (500, 10)
    bf2 = p["fc2_b"].astype(f32)[None, :]              # (1, 10)

    return dict(
        w1e=w1e.astype(compute_dtype), w1o=w1o.astype(compute_dtype), b1=b1,
        m2e=m2e.astype(compute_dtype), m2o=m2o.astype(compute_dtype), b2=b2,
        wf1=wf1.astype(compute_dtype), bf1=bf1,
        wf2=wf2.astype(compute_dtype), bf2=bf2,
    )


# ----------------------------------------------------------------------------
# Forward wrapper
# ----------------------------------------------------------------------------

def make_mnist_forward(params, *, compute_dtype=jnp.bfloat16, max_batch_tile=128):
    prep = prepare_params(params, compute_dtype=compute_dtype)

    @jax.jit
    def forward(x_nchw):
        B = x_nchw.shape[0]
        x = x_nchw.astype(jnp.float32).reshape(B, 28, 28)
        # Batch tile: multiple of 8, capped at max_batch_tile, and chosen so
        # the "parallel" grid axis has >= 2 steps when the batch allows it
        # (both TensorCores on v7x get work; amortizes per-step overhead).
        tb = min(max_batch_tile, max(8, _round_up(pl.cdiv(B, 2), 8)))
        b_pad = _round_up(B, tb)
        if b_pad != B:
            x = jnp.pad(x, ((0, b_pad - B), (0, 0), (0, 0)))
        # Fuse the batch-major transpose with the bf16 cast (half the DMA).
        xh = jnp.transpose(x, (1, 0, 2)).astype(compute_dtype)  # (28, B_pad, 28)

        out = pl.pallas_call(
            mnist_fused_kernel,
            out_shape=jax.ShapeDtypeStruct((b_pad, 10), jnp.float32),
            grid=(b_pad // tb,),
            in_specs=[
                pl.BlockSpec((28, tb, 28), lambda g: (0, g, 0)),   # input tile
                pl.BlockSpec((140, 240), lambda g: (0, 0)),        # conv1 even W
                pl.BlockSpec((140, 240), lambda g: (0, 0)),        # conv1 odd  W
                pl.BlockSpec((1, 240), lambda g: (0, 0)),          # conv1 bias(+BN)
                pl.BlockSpec((5, 240, 200), lambda g: (0, 0, 0)),  # conv2 even bands
                pl.BlockSpec((5, 240, 200), lambda g: (0, 0, 0)),  # conv2 odd bands
                pl.BlockSpec((1, 200), lambda g: (0, 0)),          # conv2 bias
                pl.BlockSpec((4, 200, 500), lambda g: (0, 0, 0)),  # fc1 W (permuted)
                pl.BlockSpec((1, 500), lambda g: (0, 0)),          # fc1 bias
                pl.BlockSpec((500, 10), lambda g: (0, 0)),         # fc2 W
                pl.BlockSpec((1, 10), lambda g: (0, 0)),           # fc2 bias
            ],
            out_specs=pl.BlockSpec((tb, 10), lambda g: (g, 0)),
            compiler_params=pltpu.CompilerParams(
                dimension_semantics=("parallel",),
                vmem_limit_bytes=48 * 1024 * 1024),
        )(xh, prep["w1e"], prep["w1o"], prep["b1"],
          prep["m2e"], prep["m2o"], prep["b2"],
          prep["wf1"], prep["bf1"], prep["wf2"], prep["bf2"])
        return out[:B]

    return forward


# ----------------------------------------------------------------------------
# Pure-JAX reference (for correctness check) and param init
# ----------------------------------------------------------------------------

def mnist_reference(params, x_nchw, eps=1e-5):
    hp = jax.lax.Precision.HIGHEST
    dn = ("NCHW", "OIHW", "NCHW")
    x = x_nchw.astype(jnp.float32)
    y = jax.lax.conv_general_dilated(x, params["conv1_w"], (1, 1), "VALID",
                                     dimension_numbers=dn, precision=hp)
    y = y + params["conv1_b"][None, :, None, None]
    s = params["bn_gamma"] / jnp.sqrt(params["bn_var"] + eps)
    t = params["bn_beta"] - s * params["bn_mean"]
    y = y * s[None, :, None, None] + t[None, :, None, None]
    y = jnp.clip(y, 0.0, 6.0)
    y = jax.lax.reduce_window(y, -jnp.inf, jax.lax.max,
                              (1, 1, 2, 2), (1, 1, 2, 2), "VALID")
    y = jax.lax.conv_general_dilated(y, params["conv2_w"], (1, 1), "VALID",
                                     dimension_numbers=dn, precision=hp)
    y = jnp.clip(y + params["conv2_b"][None, :, None, None], 0.0, 6.0)
    y = jax.lax.reduce_window(y, -jnp.inf, jax.lax.max,
                              (1, 1, 2, 2), (1, 1, 2, 2), "VALID")
    y = y.reshape(x.shape[0], 4 * 4 * 50)
    y = jnp.clip(jnp.dot(y, params["fc1_w"].T, precision=hp) + params["fc1_b"],
                 0.0, 6.0)
    logits = jnp.dot(y, params["fc2_w"].T, precision=hp) + params["fc2_b"]
    return jax.nn.log_softmax(logits, axis=-1)


def init_params(key):
    ks = jax.random.split(key, 12)
    p = {}
    p["conv1_w"] = 0.1 * jax.random.normal(ks[0], (20, 1, 5, 5), jnp.float32)
    p["conv1_b"] = 0.1 * jax.random.normal(ks[1], (20,), jnp.float32)
    p["bn_gamma"] = 1.0 + 0.1 * jax.random.normal(ks[2], (20,), jnp.float32)
    p["bn_beta"] = 0.1 * jax.random.normal(ks[3], (20,), jnp.float32)
    p["bn_mean"] = 0.1 * jax.random.normal(ks[4], (20,), jnp.float32)
    p["bn_var"] = 0.5 + 0.1 * jnp.abs(jax.random.normal(ks[5], (20,), jnp.float32))
    p["conv2_w"] = 0.05 * jax.random.normal(ks[6], (50, 20, 5, 5), jnp.float32)
    p["conv2_b"] = 0.1 * jax.random.normal(ks[7], (50,), jnp.float32)
    p["fc1_w"] = 0.05 * jax.random.normal(ks[8], (500, 800), jnp.float32)  # (out,in)
    p["fc1_b"] = 0.1 * jax.random.normal(ks[9], (500,), jnp.float32)
    p["fc2_w"] = 0.05 * jax.random.normal(ks[10], (10, 500), jnp.float32)
    p["fc2_b"] = 0.1 * jax.random.normal(ks[11], (10,), jnp.float32)
    return p


if __name__ == "__main__":
    key = jax.random.PRNGKey(0)
    k_param, k_input = jax.random.split(key)
    params = init_params(k_param)
    x = jax.random.normal(k_input, (2, 1, 28, 28), jnp.float32)  # MNIST-shaped

    forward = make_mnist_forward(params)
    out = jax.block_until_ready(forward(x))

    assert out.shape == (2, 10), out.shape
    assert bool(jnp.all(jnp.isfinite(out)))
    # log_softmax rows must sum to 1 in prob space
    assert bool(jnp.allclose(jnp.sum(jnp.exp(out), axis=1), 1.0, atol=1e-3))

    # compare against a pure-JAX f32 reference (bf16 MXU operands => loose tol)
    ref = mnist_reference(params, x)
    err = float(jnp.max(jnp.abs(out - ref)))
    assert err < 0.1, f"max abs diff vs reference too large: {err}"

    print("KERNEL_OK")
</pallas_src>

<mosaic_0001>
module attributes {stable_mosaic.version = 11 : i64} {
  func.func @mnist_fused_kernel(%arg0: i32, %arg1: memref<28x8x28xbf16, #tpu.memory_space<vmem>>, %arg2: memref<140x240xbf16, #tpu.memory_space<vmem>>, %arg3: memref<140x240xbf16, #tpu.memory_space<vmem>>, %arg4: memref<1x240xf32, #tpu.memory_space<vmem>>, %arg5: memref<5x240x200xbf16, #tpu.memory_space<vmem>>, %arg6: memref<5x240x200xbf16, #tpu.memory_space<vmem>>, %arg7: memref<1x200xf32, #tpu.memory_space<vmem>>, %arg8: memref<4x200x500xbf16, #tpu.memory_space<vmem>>, %arg9: memref<1x500xf32, #tpu.memory_space<vmem>>, %arg10: memref<500x10xbf16, #tpu.memory_space<vmem>>, %arg11: memref<1x10xf32, #tpu.memory_space<vmem>>, %arg12: memref<8x10xf32, #tpu.memory_space<vmem>>) attributes {dimension_semantics = [#tpu.dimension_semantics<parallel>], iteration_bounds = array<i64: 1>, scalar_prefetch = 0 : i64, scratch_operands = 0 : i64, tpu.core_type = #tpu.core_type<tc>, window_params = [{transform_indices = @transform_0, window_bounds = array<i64: 28, 8, 28>}, {pipeline_mode = #tpu.pipeline_mode<synchronous>, transform_indices = @transform_1, window_bounds = array<i64: 140, 240>}, {pipeline_mode = #tpu.pipeline_mode<synchronous>, transform_indices = @transform_2, window_bounds = array<i64: 140, 240>}, {pipeline_mode = #tpu.pipeline_mode<synchronous>, transform_indices = @transform_3, window_bounds = array<i64: 1, 240>}, {pipeline_mode = #tpu.pipeline_mode<synchronous>, transform_indices = @transform_4, window_bounds = array<i64: 5, 240, 200>}, {pipeline_mode = #tpu.pipeline_mode<synchronous>, transform_indices = @transform_5, window_bounds = array<i64: 5, 240, 200>}, {pipeline_mode = #tpu.pipeline_mode<synchronous>, transform_indices = @transform_6, window_bounds = array<i64: 1, 200>}, {pipeline_mode = #tpu.pipeline_mode<synchronous>, transform_indices = @transform_7, window_bounds = array<i64: 4, 200, 500>}, {pipeline_mode = #tpu.pipeline_mode<synchronous>, transform_indices = @transform_8, window_bounds = array<i64: 1, 500>}, {pipeline_mode = #tpu.pipeline_mode<synchronous>, transform_indices = @transform_9, window_bounds = array<i64: 500, 10>}, {pipeline_mode = #tpu.pipeline_mode<synchronous>, transform_indices = @transform_10, window_bounds = array<i64: 1, 10>}, {transform_indices = @transform_11, window_bounds = array<i64: 8, 10>}]} {
    %c0 = arith.constant 0 : index
    %c0_0 = arith.constant 0 : index
    %c0_1 = arith.constant 0 : index
    %0 = vector.load %arg1[%c0, %c0_0, %c0_1] : memref<28x8x28xbf16, #tpu.memory_space<vmem>>, vector<28x8x28xbf16>
    %1 = vector.extract_strided_slice %0 {offsets = [0, 0, 0], sizes = [24, 8, 28], strides = [1, 1, 1]} : vector<28x8x28xbf16> to vector<24x8x28xbf16>
    %2 = vector.shape_cast %1 : vector<24x8x28xbf16> to vector<192x28xbf16>
    %3 = vector.extract_strided_slice %0 {offsets = [1, 0, 0], sizes = [24, 8, 28], strides = [1, 1, 1]} : vector<28x8x28xbf16> to vector<24x8x28xbf16>
    %4 = vector.shape_cast %3 : vector<24x8x28xbf16> to vector<192x28xbf16>
    %5 = vector.extract_strided_slice %0 {offsets = [2, 0, 0], sizes = [24, 8, 28], strides = [1, 1, 1]} : vector<28x8x28xbf16> to vector<24x8x28xbf16>
    %6 = vector.shape_cast %5 : vector<24x8x28xbf16> to vector<192x28xbf16>
    %7 = vector.extract_strided_slice %0 {offsets = [3, 0, 0], sizes = [24, 8, 28], strides = [1, 1, 1]} : vector<28x8x28xbf16> to vector<24x8x28xbf16>
    %8 = vector.shape_cast %7 : vector<24x8x28xbf16> to vector<192x28xbf16>
    %9 = vector.extract_strided_slice %0 {offsets = [4, 0, 0], sizes = [24, 8, 28], strides = [1, 1, 1]} : vector<28x8x28xbf16> to vector<24x8x28xbf16>
    %10 = vector.shape_cast %9 : vector<24x8x28xbf16> to vector<192x28xbf16>
    %11 = tpu.concatenate %2, %4, %6, %8, %10 in 1 : vector<192x28xbf16>, vector<192x28xbf16>, vector<192x28xbf16>, vector<192x28xbf16>, vector<192x28xbf16> -> vector<192x140xbf16>
    %c0_2 = arith.constant 0 : index
    %c0_3 = arith.constant 0 : index
    %12 = vector.load %arg2[%c0_2, %c0_3] : memref<140x240xbf16, #tpu.memory_space<vmem>>, vector<140x240xbf16>
    %cst = arith.constant dense<0.000000e+00> : vector<192x240xf32>
    %13 = tpu.matmul %11, %12, %cst {dimension_numbers = #tpu.dot_dimension_numbers<[1], [0], [0], [1], [0, 0, 1, 1], [], []>} : vector<192x140xbf16>, vector<140x240xbf16>, vector<192x240xf32> -> vector<192x240xf32>
    %c0_4 = arith.constant 0 : index
    %c0_5 = arith.constant 0 : index
    %14 = vector.load %arg3[%c0_4, %c0_5] : memref<140x240xbf16, #tpu.memory_space<vmem>>, vector<140x240xbf16>
    %cst_6 = arith.constant dense<0.000000e+00> : vector<192x240xf32>
    %15 = tpu.matmul %11, %14, %cst_6 {dimension_numbers = #tpu.dot_dimension_numbers<[1], [0], [0], [1], [0, 0, 1, 1], [], []>} : vector<192x140xbf16>, vector<140x240xbf16>, vector<192x240xf32> -> vector<192x240xf32>
    %16 = arith.maximumf %13, %15 : vector<192x240xf32>
    %17 = vector.shape_cast %16 : vector<192x240xf32> to vector<12x2x8x240xf32>
    %18 = vector.extract_strided_slice %17 {offsets = [0, 0, 0, 0], sizes = [12, 1, 8, 240], strides = [1, 1, 1, 1]} : vector<12x2x8x240xf32> to vector<12x1x8x240xf32>
    %19 = vector.shape_cast %18 : vector<12x1x8x240xf32> to vector<12x8x240xf32>
    %20 = vector.extract_strided_slice %17 {offsets = [0, 1, 0, 0], sizes = [12, 1, 8, 240], strides = [1, 1, 1, 1]} : vector<12x2x8x240xf32> to vector<12x1x8x240xf32>
    %21 = vector.shape_cast %20 : vector<12x1x8x240xf32> to vector<12x8x240xf32>
    %22 = arith.maximumf %19, %21 : vector<12x8x240xf32>
    %c0_7 = arith.constant 0 : index
    %c0_8 = arith.constant 0 : index
    %23 = vector.load %arg4[%c0_7, %c0_8] : memref<1x240xf32, #tpu.memory_space<vmem>>, vector<1x240xf32>
    %24 = vector.shape_cast %23 : vector<1x240xf32> to vector<1x1x240xf32>
    %25 = vector.broadcast %24 : vector<1x1x240xf32> to vector<12x8x240xf32>
    %26 = arith.addf %22, %25 : vector<12x8x240xf32>
    %cst_9 = arith.constant 0.000000e+00 : f32
    %cst_10 = arith.constant 6.000000e+00 : f32
    %27 = vector.broadcast %cst_9 : f32 to vector<12x8x240xf32>
    %28 = arith.maximumf %27, %26 : vector<12x8x240xf32>
    %29 = vector.broadcast %cst_10 : f32 to vector<12x8x240xf32>
    %30 = arith.minimumf %29, %28 : vector<12x8x240xf32>
    %31 = arith.truncf %30 : vector<12x8x240xf32> to vector<12x8x240xbf16>
    %32 = vector.extract_strided_slice %31 {offsets = [0, 0, 0], sizes = [8, 8, 240], strides = [1, 1, 1]} : vector<12x8x240xbf16> to vector<8x8x240xbf16>
    %33 = vector.shape_cast %32 : vector<8x8x240xbf16> to vector<64x240xbf16>
    %c0_11 = arith.constant 0 : index
    %c0_12 = arith.constant 0 : index
    %c0_13 = arith.constant 0 : index
    %34 = vector.load %arg5[%c0_11, %c0_12, %c0_13] : memref<5x240x200xbf16, #tpu.memory_space<vmem>>, vector<1x240x200xbf16>
    %35 = vector.shape_cast %34 : vector<1x240x200xbf16> to vector<240x200xbf16>
    %cst_14 = arith.constant dense<0.000000e+00> : vector<64x200xf32>
    %36 = tpu.matmul %33, %35, %cst_14 {dimension_numbers = #tpu.dot_dimension_numbers<[1], [0], [0], [1], [0, 0, 1, 1], [], []>} : vector<64x240xbf16>, vector<240x200xbf16>, vector<64x200xf32> -> vector<64x200xf32>
    %c0_15 = arith.constant 0 : index
    %c0_16 = arith.constant 0 : index
    %c0_17 = arith.constant 0 : index
    %37 = vector.load %arg6[%c0_15, %c0_16, %c0_17] : memref<5x240x200xbf16, #tpu.memory_space<vmem>>, vector<1x240x200xbf16>
    %38 = vector.shape_cast %37 : vector<1x240x200xbf16> to vector<240x200xbf16>
    %cst_18 = arith.constant dense<0.000000e+00> : vector<64x200xf32>
    %39 = tpu.matmul %33, %38, %cst_18 {dimension_numbers = #tpu.dot_dimension_numbers<[1], [0], [0], [1], [0, 0, 1, 1], [], []>} : vector<64x240xbf16>, vector<240x200xbf16>, vector<64x200xf32> -> vector<64x200xf32>
    %40 = vector.extract_strided_slice %31 {offsets = [1, 0, 0], sizes = [8, 8, 240], strides = [1, 1, 1]} : vector<12x8x240xbf16> to vector<8x8x240xbf16>
    %41 = vector.shape_cast %40 : vector<8x8x240xbf16> to vector<64x240xbf16>
    %c1 = arith.constant 1 : index
    %c0_19 = arith.constant 0 : index
    %c0_20 = arith.constant 0 : index
    %42 = vector.load %arg5[%c1, %c0_19, %c0_20] : memref<5x240x200xbf16, #tpu.memory_space<vmem>>, vector<1x240x200xbf16>
    %43 = vector.shape_cast %42 : vector<1x240x200xbf16> to vector<240x200xbf16>
    %cst_21 = arith.constant dense<0.000000e+00> : vector<64x200xf32>
    %44 = tpu.matmul %41, %43, %cst_21 {dimension_numbers = #tpu.dot_dimension_numbers<[1], [0], [0], [1], [0, 0, 1, 1], [], []>} : vector<64x240xbf16>, vector<240x200xbf16>, vector<64x200xf32> -> vector<64x200xf32>
    %c1_22 = arith.constant 1 : index
    %c0_23 = arith.constant 0 : index
    %c0_24 = arith.constant 0 : index
    %45 = vector.load %arg6[%c1_22, %c0_23, %c0_24] : memref<5x240x200xbf16, #tpu.memory_space<vmem>>, vector<1x240x200xbf16>
    %46 = vector.shape_cast %45 : vector<1x240x200xbf16> to vector<240x200xbf16>
    %cst_25 = arith.constant dense<0.000000e+00> : vector<64x200xf32>
    %47 = tpu.matmul %41, %46, %cst_25 {dimension_numbers = #tpu.dot_dimension_numbers<[1], [0], [0], [1], [0, 0, 1, 1], [], []>} : vector<64x240xbf16>, vector<240x200xbf16>, vector<64x200xf32> -> vector<64x200xf32>
    %48 = arith.addf %36, %44 : vector<64x200xf32>
    %49 = arith.addf %39, %47 : vector<64x200xf32>
    %50 = vector.extract_strided_slice %31 {offsets = [2, 0, 0], sizes = [8, 8, 240], strides = [1, 1, 1]} : vector<12x8x240xbf16> to vector<8x8x240xbf16>
    %51 = vector.shape_cast %50 : vector<8x8x240xbf16> to vector<64x240xbf16>
    %c2 = arith.constant 2 : index
    %c0_26 = arith.constant 0 : index
    %c0_27 = arith.constant 0 : index
    %52 = vector.load %arg5[%c2, %c0_26, %c0_27] : memref<5x240x200xbf16, #tpu.memory_space<vmem>>, vector<1x240x200xbf16>
    %53 = vector.shape_cast %52 : vector<1x240x200xbf16> to vector<240x200xbf16>
    %cst_28 = arith.constant dense<0.000000e+00> : vector<64x200xf32>
    %54 = tpu.matmul %51, %53, %cst_28 {dimension_numbers = #tpu.dot_dimension_numbers<[1], [0], [0], [1], [0, 0, 1, 1], [], []>} : vector<64x240xbf16>, vector<240x200xbf16>, vector<64x200xf32> -> vector<64x200xf32>
    %c2_29 = arith.constant 2 : index
    %c0_30 = arith.constant 0 : index
    %c0_31 = arith.constant 0 : index
    %55 = vector.load %arg6[%c2_29, %c0_30, %c0_31] : memref<5x240x200xbf16, #tpu.memory_space<vmem>>, vector<1x240x200xbf16>
    %56 = vector.shape_cast %55 : vector<1x240x200xbf16> to vector<240x200xbf16>
    %cst_32 = arith.constant dense<0.000000e+00> : vector<64x200xf32>
    %57 = tpu.matmul %51, %56, %cst_32 {dimension_numbers = #tpu.dot_dimension_numbers<[1], [0], [0], [1], [0, 0, 1, 1], [], []>} : vector<64x240xbf16>, vector<240x200xbf16>, vector<64x200xf32> -> vector<64x200xf32>
    %58 = arith.addf %48, %54 : vector<64x200xf32>
    %59 = arith.addf %49, %57 : vector<64x200xf32>
    %60 = vector.extract_strided_slice %31 {offsets = [3, 0, 0], sizes = [8, 8, 240], strides = [1, 1, 1]} : vector<12x8x240xbf16> to vector<8x8x240xbf16>
    %61 = vector.shape_cast %60 : vector<8x8x240xbf16> to vector<64x240xbf16>
    %c3 = arith.constant 3 : index
    %c0_33 = arith.constant 0 : index
    %c0_34 = arith.constant 0 : index
    %62 = vector.load %arg5[%c3, %c0_33, %c0_34] : memref<5x240x200xbf16, #tpu.memory_space<vmem>>, vector<1x240x200xbf16>
    %63 = vector.shape_cast %62 : vector<1x240x200xbf16> to vector<240x200xbf16>
    %cst_35 = arith.constant dense<0.000000e+00> : vector<64x200xf32>
    %64 = tpu.matmul %61, %63, %cst_35 {dimension_numbers = #tpu.dot_dimension_numbers<[1], [0], [0], [1], [0, 0, 1, 1], [], []>} : vector<64x240xbf16>, vector<240x200xbf16>, vector<64x200xf32> -> vector<64x200xf32>
    %c3_36 = arith.constant 3 : index
    %c0_37 = arith.constant 0 : index
    %c0_38 = arith.constant 0 : index
    %65 = vector.load %arg6[%c3_36, %c0_37, %c0_38] : memref<5x240x200xbf16, #tpu.memory_space<vmem>>, vector<1x240x200xbf16>
    %66 = vector.shape_cast %65 : vector<1x240x200xbf16> to vector<240x200xbf16>
    %cst_39 = arith.constant dense<0.000000e+00> : vector<64x200xf32>
    %67 = tpu.matmul %61, %66, %cst_39 {dimension_numbers = #tpu.dot_dimension_numbers<[1], [0], [0], [1], [0, 0, 1, 1], [], []>} : vector<64x240xbf16>, vector<240x200xbf16>, vector<64x200xf32> -> vector<64x200xf32>
    %68 = arith.addf %58, %64 : vector<64x200xf32>
    %69 = arith.addf %59, %67 : vector<64x200xf32>
    %70 = vector.extract_strided_slice %31 {offsets = [4, 0, 0], sizes = [8, 8, 240], strides = [1, 1, 1]} : vector<12x8x240xbf16> to vector<8x8x240xbf16>
    %71 = vector.shape_cast %70 : vector<8x8x240xbf16> to vector<64x240xbf16>
    %c4 = arith.constant 4 : index
    %c0_40 = arith.constant 0 : index
    %c0_41 = arith.constant 0 : index
    %72 = vector.load %arg5[%c4, %c0_40, %c0_41] : memref<5x240x200xbf16, #tpu.memory_space<vmem>>, vector<1x240x200xbf16>
    %73 = vector.shape_cast %72 : vector<1x240x200xbf16> to vector<240x200xbf16>
    %cst_42 = arith.constant dense<0.000000e+00> : vector<64x200xf32>
    %74 = tpu.matmul %71, %73, %cst_42 {dimension_numbers = #tpu.dot_dimension_numbers<[1], [0], [0], [1], [0, 0, 1, 1], [], []>} : vector<64x240xbf16>, vector<240x200xbf16>, vector<64x200xf32> -> vector<64x200xf32>
    %c4_43 = arith.constant 4 : index
    %c0_44 = arith.constant 0 : index
    %c0_45 = arith.constant 0 : index
    %75 = vector.load %arg6[%c4_43, %c0_44, %c0_45] : memref<5x240x200xbf16, #tpu.memory_space<vmem>>, vector<1x240x200xbf16>
    %76 = vector.shape_cast %75 : vector<1x240x200xbf16> to vector<240x200xbf16>
    %cst_46 = arith.constant dense<0.000000e+00> : vector<64x200xf32>
    %77 = tpu.matmul %71, %76, %cst_46 {dimension_numbers = #tpu.dot_dimension_numbers<[1], [0], [0], [1], [0, 0, 1, 1], [], []>} : vector<64x240xbf16>, vector<240x200xbf16>, vector<64x200xf32> -> vector<64x200xf32>
    %78 = arith.addf %68, %74 : vector<64x200xf32>
    %79 = arith.addf %69, %77 : vector<64x200xf32>
    %80 = arith.maximumf %78, %79 : vector<64x200xf32>
    %81 = vector.shape_cast %80 : vector<64x200xf32> to vector<4x2x8x200xf32>
    %82 = vector.extract_strided_slice %81 {offsets = [0, 0, 0, 0], sizes = [4, 1, 8, 200], strides = [1, 1, 1, 1]} : vector<4x2x8x200xf32> to vector<4x1x8x200xf32>
    %83 = vector.shape_cast %82 : vector<4x1x8x200xf32> to vector<4x8x200xf32>
    %84 = vector.extract_strided_slice %81 {offsets = [0, 1, 0, 0], sizes = [4, 1, 8, 200], strides = [1, 1, 1, 1]} : vector<4x2x8x200xf32> to vector<4x1x8x200xf32>
    %85 = vector.shape_cast %84 : vector<4x1x8x200xf32> to vector<4x8x200xf32>
    %86 = arith.maximumf %83, %85 : vector<4x8x200xf32>
    %c0_47 = arith.constant 0 : index
    %c0_48 = arith.constant 0 : index
    %87 = vector.load %arg7[%c0_47, %c0_48] : memref<1x200xf32, #tpu.memory_space<vmem>>, vector<1x200xf32>
    %88 = vector.shape_cast %87 : vector<1x200xf32> to vector<1x1x200xf32>
    %89 = vector.broadcast %88 : vector<1x1x200xf32> to vector<4x8x200xf32>
    %90 = arith.addf %86, %89 : vector<4x8x200xf32>
    %cst_49 = arith.constant 0.000000e+00 : f32
    %cst_50 = arith.constant 6.000000e+00 : f32
    %91 = vector.broadcast %cst_49 : f32 to vector<4x8x200xf32>
    %92 = arith.maximumf %91, %90 : vector<4x8x200xf32>
    %93 = vector.broadcast %cst_50 : f32 to vector<4x8x200xf32>
    %94 = arith.minimumf %93, %92 : vector<4x8x200xf32>
    %95 = arith.truncf %94 : vector<4x8x200xf32> to vector<4x8x200xbf16>
    %96 = vector.extract_strided_slice %95 {offsets = [0, 0, 0], sizes = [1, 8, 200], strides = [1, 1, 1]} : vector<4x8x200xbf16> to vector<1x8x200xbf16>
    %97 = vector.shape_cast %96 : vector<1x8x200xbf16> to vector<8x200xbf16>
    %c0_51 = arith.constant 0 : index
    %c0_52 = arith.constant 0 : index
    %c0_53 = arith.constant 0 : index
    %98 = vector.load %arg8[%c0_51, %c0_52, %c0_53] : memref<4x200x500xbf16, #tpu.memory_space<vmem>>, vector<1x200x500xbf16>
    %99 = vector.shape_cast %98 : vector<1x200x500xbf16> to vector<200x500xbf16>
    %cst_54 = arith.constant dense<0.000000e+00> : vector<8x500xf32>
    %100 = tpu.matmul %97, %99, %cst_54 {dimension_numbers = #tpu.dot_dimension_numbers<[1], [0], [0], [1], [0, 0, 1, 1], [], []>} : vector<8x200xbf16>, vector<200x500xbf16>, vector<8x500xf32> -> vector<8x500xf32>
    %101 = vector.extract_strided_slice %95 {offsets = [1, 0, 0], sizes = [1, 8, 200], strides = [1, 1, 1]} : vector<4x8x200xbf16> to vector<1x8x200xbf16>
    %102 = vector.shape_cast %101 : vector<1x8x200xbf16> to vector<8x200xbf16>
    %c1_55 = arith.constant 1 : index
    %c0_56 = arith.constant 0 : index
    %c0_57 = arith.constant 0 : index
    %103 = vector.load %arg8[%c1_55, %c0_56, %c0_57] : memref<4x200x500xbf16, #tpu.memory_space<vmem>>, vector<1x200x500xbf16>
    %104 = vector.shape_cast %103 : vector<1x200x500xbf16> to vector<200x500xbf16>
    %cst_58 = arith.constant dense<0.000000e+00> : vector<8x500xf32>
    %105 = tpu.matmul %102, %104, %cst_58 {dimension_numbers = #tpu.dot_dimension_numbers<[1], [0], [0], [1], [0, 0, 1, 1], [], []>} : vector<8x200xbf16>, vector<200x500xbf16>, vector<8x500xf32> -> vector<8x500xf32>
    %106 = arith.addf %100, %105 : vector<8x500xf32>
    %107 = vector.extract_strided_slice %95 {offsets = [2, 0, 0], sizes = [1, 8, 200], strides = [1, 1, 1]} : vector<4x8x200xbf16> to vector<1x8x200xbf16>
    %108 = vector.shape_cast %107 : vector<1x8x200xbf16> to vector<8x200xbf16>
    %c2_59 = arith.constant 2 : index
    %c0_60 = arith.constant 0 : index
    %c0_61 = arith.constant 0 : index
    %109 = vector.load %arg8[%c2_59, %c0_60, %c0_61] : memref<4x200x500xbf16, #tpu.memory_space<vmem>>, vector<1x200x500xbf16>
    %110 = vector.shape_cast %109 : vector<1x200x500xbf16> to vector<200x500xbf16>
    %cst_62 = arith.constant dense<0.000000e+00> : vector<8x500xf32>
    %111 = tpu.matmul %108, %110, %cst_62 {dimension_numbers = #tpu.dot_dimension_numbers<[1], [0], [0], [1], [0, 0, 1, 1], [], []>} : vector<8x200xbf16>, vector<200x500xbf16>, vector<8x500xf32> -> vector<8x500xf32>
    %112 = arith.addf %106, %111 : vector<8x500xf32>
    %113 = vector.extract_strided_slice %95 {offsets = [3, 0, 0], sizes = [1, 8, 200], strides = [1, 1, 1]} : vector<4x8x200xbf16> to vector<1x8x200xbf16>
    %114 = vector.shape_cast %113 : vector<1x8x200xbf16> to vector<8x200xbf16>
    %c3_63 = arith.constant 3 : index
    %c0_64 = arith.constant 0 : index
    %c0_65 = arith.constant 0 : index
    %115 = vector.load %arg8[%c3_63, %c0_64, %c0_65] : memref<4x200x500xbf16, #tpu.memory_space<vmem>>, vector<1x200x500xbf16>
    %116 = vector.shape_cast %115 : vector<1x200x500xbf16> to vector<200x500xbf16>
    %cst_66 = arith.constant dense<0.000000e+00> : vector<8x500xf32>
    %117 = tpu.matmul %114, %116, %cst_66 {dimension_numbers = #tpu.dot_dimension_numbers<[1], [0], [0], [1], [0, 0, 1, 1], [], []>} : vector<8x200xbf16>, vector<200x500xbf16>, vector<8x500xf32> -> vector<8x500xf32>
    %118 = arith.addf %112, %117 : vector<8x500xf32>
    %c0_67 = arith.constant 0 : index
    %c0_68 = arith.constant 0 : index
    %119 = vector.load %arg9[%c0_67, %c0_68] : memref<1x500xf32, #tpu.memory_space<vmem>>, vector<1x500xf32>
    %120 = vector.broadcast %119 : vector<1x500xf32> to vector<8x500xf32>
    %121 = arith.addf %118, %120 : vector<8x500xf32>
    %cst_69 = arith.constant 0.000000e+00 : f32
    %cst_70 = arith.constant 6.000000e+00 : f32
    %122 = vector.broadcast %cst_69 : f32 to vector<8x500xf32>
    %123 = arith.maximumf %122, %121 : vector<8x500xf32>
    %124 = vector.broadcast %cst_70 : f32 to vector<8x500xf32>
    %125 = arith.minimumf %124, %123 : vector<8x500xf32>
    %126 = arith.truncf %125 : vector<8x500xf32> to vector<8x500xbf16>
    %c0_71 = arith.constant 0 : index
    %c0_72 = arith.constant 0 : index
    %127 = vector.load %arg10[%c0_71, %c0_72] : memref<500x10xbf16, #tpu.memory_space<vmem>>, vector<500x10xbf16>
    %cst_73 = arith.constant dense<0.000000e+00> : vector<8x10xf32>
    %128 = tpu.matmul %126, %127, %cst_73 {dimension_numbers = #tpu.dot_dimension_numbers<[1], [0], [0], [1], [0, 0, 1, 1], [], []>} : vector<8x500xbf16>, vector<500x10xbf16>, vector<8x10xf32> -> vector<8x10xf32>
    %c0_74 = arith.constant 0 : index
    %c0_75 = arith.constant 0 : index
    %129 = vector.load %arg11[%c0_74, %c0_75] : memref<1x10xf32, #tpu.memory_space<vmem>>, vector<1x10xf32>
    %130 = vector.broadcast %129 : vector<1x10xf32> to vector<8x10xf32>
    %131 = arith.addf %128, %130 : vector<8x10xf32>
    %cst_76 = arith.constant dense<0xFF800000> : vector<8xf32>
    %132 = vector.multi_reduction <maximumf>, %131, %cst_76 [1] : vector<8x10xf32> to vector<8xf32>
    %133 = vector.shape_cast %132 : vector<8xf32> to vector<8x1xf32>
    %134 = vector.broadcast %133 : vector<8x1xf32> to vector<8x10xf32>
    %135 = arith.subf %131, %134 : vector<8x10xf32>
    %136 = math.exp %135 : vector<8x10xf32>
    %cst_77 = arith.constant dense<0.000000e+00> : vector<8xf32>
    %137 = vector.multi_reduction <add>, %136, %cst_77 [1] : vector<8x10xf32> to vector<8xf32>
    %138 = vector.shape_cast %137 : vector<8xf32> to vector<8x1xf32>
    %139 = math.log %138 : vector<8x1xf32>
    %140 = vector.broadcast %139 : vector<8x1xf32> to vector<8x10xf32>
    %141 = arith.subf %135, %140 : vector<8x10xf32>
    %c0_78 = arith.constant 0 : index
    %c0_79 = arith.constant 0 : index
    %142 = vector.load %arg12[%c0_78, %c0_79] : memref<8x10xf32, #tpu.memory_space<vmem>>, vector<8x10xf32>
    tpu.vector_store %arg12[%c0_78, %c0_79], %141 {strides = array<i32>} : memref<8x10xf32, #tpu.memory_space<vmem>>, vector<8x10xf32>,
    return
  }
  func.func @transform_0(%arg0: i32) -> (i32, i32, i32) {
    %c0_i32 = arith.constant 0 : i32
    %c0_i32_0 = arith.constant 0 : i32
    %c0_i32_1 = arith.constant 0 : i32
    return %c0_i32, %arg0, %c0_i32_0 : i32, i32, i32
  }
  func.func @transform_1(%arg0: i32) -> (i32, i32) {
    %c0_i32 = arith.constant 0 : i32
    %c0_i32_0 = arith.constant 0 : i32
    %c0_i32_1 = arith.constant 0 : i32
    return %c0_i32, %c0_i32_0 : i32, i32
  }
  func.func @transform_2(%arg0: i32) -> (i32, i32) {
    %c0_i32 = arith.constant 0 : i32
    %c0_i32_0 = arith.constant 0 : i32
    %c0_i32_1 = arith.constant 0 : i32
    return %c0_i32, %c0_i32_0 : i32, i32
  }
  func.func @transform_3(%arg0: i32) -> (i32, i32) {
    %c0_i32 = arith.constant 0 : i32
    %c0_i32_0 = arith.constant 0 : i32
    %c0_i32_1 = arith.constant 0 : i32
    return %c0_i32, %c0_i32_0 : i32, i32
  }
  func.func @transform_4(%arg0: i32) -> (i32, i32, i32) {
    %c0_i32 = arith.constant 0 : i32
    %c0_i32_0 = arith.constant 0 : i32
    %c0_i32_1 = arith.constant 0 : i32
    %c0_i32_2 = arith.constant 0 : i32
    return %c0_i32, %c0_i32_0, %c0_i32_1 : i32, i32, i32
  }
  func.func @transform_5(%arg0: i32) -> (i32, i32, i32) {
    %c0_i32 = arith.constant 0 : i32
    %c0_i32_0 = arith.constant 0 : i32
    %c0_i32_1 = arith.constant 0 : i32
    %c0_i32_2 = arith.constant 0 : i32
    return %c0_i32, %c0_i32_0, %c0_i32_1 : i32, i32, i32
  }
  func.func @transform_6(%arg0: i32) -> (i32, i32) {
    %c0_i32 = arith.constant 0 : i32
    %c0_i32_0 = arith.constant 0 : i32
    %c0_i32_1 = arith.constant 0 : i32
    return %c0_i32, %c0_i32_0 : i32, i32
  }
  func.func @transform_7(%arg0: i32) -> (i32, i32, i32) {
    %c0_i32 = arith.constant 0 : i32
    %c0_i32_0 = arith.constant 0 : i32
    %c0_i32_1 = arith.constant 0 : i32
    %c0_i32_2 = arith.constant 0 : i32
    return %c0_i32, %c0_i32_0, %c0_i32_1 : i32, i32, i32
  }
  func.func @transform_8(%arg0: i32) -> (i32, i32) {
    %c0_i32 = arith.constant 0 : i32
    %c0_i32_0 = arith.constant 0 : i32
    %c0_i32_1 = arith.constant 0 : i32
    return %c0_i32, %c0_i32_0 : i32, i32
  }
  func.func @transform_9(%arg0: i32) -> (i32, i32) {
    %c0_i32 = arith.constant 0 : i32
    %c0_i32_0 = arith.constant 0 : i32
    %c0_i32_1 = arith.constant 0 : i32
    return %c0_i32, %c0_i32_0 : i32, i32
  }
  func.func @transform_10(%arg0: i32) -> (i32, i32) {
    %c0_i32 = arith.constant 0 : i32
    %c0_i32_0 = arith.constant 0 : i32
    %c0_i32_1 = arith.constant 0 : i32
    return %c0_i32, %c0_i32_0 : i32, i32
  }
  func.func @transform_11(%arg0: i32) -> (i32, i32) {
    %c0_i32 = arith.constant 0 : i32
    %c0_i32_0 = arith.constant 0 : i32
    return %arg0, %c0_i32 : i32, i32
  }
}

</mosaic_0001>

<llo_original>
// kernel: forward.1
$region0: #{forward.1}
  #allocation0 [shape = 'u32[]', space=smem, size = 0x4, offset = 0x4, fixed_abs, tag = 'smem constant byte address 0x4 - core index']
  #allocation1 [shape = 'u32[72,128]{1,0:T(1,128)}', space=vmem, size = 0x9000, scoped, tag = 'internal scratch']
  %s0 = inlined_call_operand.vmem [shape: bf16[28,8,28], index: 0, kind: input, shape index: {}]
  %s1 = inlined_call_operand.hbm [shape: bf16[140,240], index: 1, kind: input, shape index: {}]
  %s2 = inlined_call_operand.vmem [shape: bf16[140,240], index: 2, kind: input, shape index: {}]
  %s3 = inlined_call_operand.vmem [shape: f32[1,240], index: 3, kind: input, shape index: {}]
  %s4 = inlined_call_operand.hbm [shape: bf16[5,240,200], index: 4, kind: input, shape index: {}]
  %s5 = inlined_call_operand.hbm [shape: bf16[5,240,200], index: 5, kind: input, shape index: {}]
  %s6 = inlined_call_operand.vmem [shape: f32[1,200], index: 6, kind: input, shape index: {}]
  %s7 = inlined_call_operand.hbm [shape: bf16[4,200,500], index: 7, kind: input, shape index: {}]
  %s8 = inlined_call_operand.vmem [shape: f32[1,500], index: 8, kind: input, shape index: {}]
  %s9 = inlined_call_operand.hbm [shape: bf16[500,10], index: 9, kind: input, shape index: {}]
  %s10 = inlined_call_operand.vmem [shape: f32[1,10], index: 10, kind: input, shape index: {}]
  %s11 = inlined_call_operand.vmem [shape: f32[8,10], index: 11, kind: output, shape index: {}]
  %s12 = sld [smem:[#allocation0]]
  $region74: #{forward.1} parent=0
    _
  %s14 = ssub.s32 1, %s12
  %s15 = scalar_select 0, %s14, %s12
  $region1: #{forward.1} parent=0
    #allocation2 [shape = 'u8[73728]{0}', space=vmem, size = 0x12000, scoped, tag = 'input window, operand 1, single buffered']
    #allocation3 [shape = 's32[1]{0}', space=sflag, size = 0x4, scoped, tag = 'scoped memory for forward.1']
    #allocation4 [shape = 'u8[614400]{0}', space=vmem, size = 0x96000, scoped, tag = 'input window, operand 4, single buffered']
    #allocation5 [shape = 's32[1]{0}', space=sflag, size = 0x4, scoped, tag = 'scoped memory for forward.1']
    #allocation6 [shape = 'u8[614400]{0}', space=vmem, size = 0x96000, scoped, tag = 'input window, operand 5, single buffered']
    #allocation7 [shape = 'u8[819200]{0}', space=vmem, size = 0xc8000, scoped, tag = 'input window, operand 7, single buffered']
    #allocation8 [shape = 's32[1]{0}', space=sflag, size = 0x4, scoped, tag = 'scoped memory for forward.1']
    #allocation9 [shape = 'u8[129024]{0}', space=vmem, size = 0x1f800, scoped, tag = 'input window, operand 9, single buffered']
    %16 = vsyncpa [#allocation3], 0
    %17 = vsyncpa [#allocation5], 0
    %18 = vsyncpa [#allocation8], 0
    // Predicated region
    $region2: #{forward.1} parent=1 // pred_check
      _
    $region3: #{forward.1} parent=1 // pred_check_branch
      %20 = sbr.rel (0) target = $region5
    $region4: #{forward.1} parent=1 // pred_region
      _
    $region5: #{forward.1} parent=1 // pred_fallthru
      _
    // Predicated region
    $region6: #{forward.1} parent=1 // pred_check
      _
    $region7: #{forward.1} parent=1 // pred_check_branch
      %22 = sbr.rel (0) target = $region9
    $region8: #{forward.1} parent=1 // pred_region
      %24 = vsyncadd [#allocation3], 0
      %s25 = sshll.u32 %s1, 4
      %s26 = int_to_ptr.hbm [resolvable:$true] %s25
      %s27 = sshll.u32 [#allocation2], 4
      %s28 = int_to_ptr.vmem [resolvable:$true] %s27
      %33 = dma.hbm_to_vmem [thread:$0]  %s26, 2304, %s28, [#allocation3], 128, 128, 8
    $region9: #{forward.1} parent=1 // pred_fallthru
      _
    // Predicated region
    $region10: #{forward.1} parent=1 // pred_check
      _
    $region11: #{forward.1} parent=1 // pred_check_branch
      %35 = sbr.rel (0) target = $region13
    $region12: #{forward.1} parent=1 // pred_region
      _
    $region13: #{forward.1} parent=1 // pred_fallthru
      _
    // Predicated region
    $region14: #{forward.1} parent=1 // pred_check
      _
    $region15: #{forward.1} parent=1 // pred_check_branch
      %37 = sbr.rel (0) target = $region17
    $region16: #{forward.1} parent=1 // pred_region
      _
    $region17: #{forward.1} parent=1 // pred_fallthru
      _
    // Predicated region
    $region18: #{forward.1} parent=1 // pred_check
      _
    $region19: #{forward.1} parent=1 // pred_check_branch
      %39 = sbr.rel (0) target = $region21
    $region20: #{forward.1} parent=1 // pred_region
      %41 = vsyncadd [#allocation5], 0
      %s42 = sshll.u32 %s4, 4
      %s43 = int_to_ptr.hbm [resolvable:$true] %s42
      %s44 = sshll.u32 [#allocation4], 4
      %s45 = int_to_ptr.vmem [resolvable:$true] %s44
      %50 = dma.hbm_to_vmem [thread:$0]  %s43, 19200, %s45, [#allocation5], 128, 128, 8
    $region21: #{forward.1} parent=1 // pred_fallthru
      _
    // Predicated region
    $region22: #{forward.1} parent=1 // pred_check
      _
    $region23: #{forward.1} parent=1 // pred_check_branch
      %52 = sbr.rel (0) target = $region25
    $region24: #{forward.1} parent=1 // pred_region
      %54 = vsyncadd [#allocation5], 0
      %s55 = sshll.u32 %s5, 4
      %s56 = int_to_ptr.hbm [resolvable:$true] %s55
      %s57 = sshll.u32 [#allocation6], 4
      %s58 = int_to_ptr.vmem [resolvable:$true] %s57
      %63 = dma.hbm_to_vmem [thread:$0]  %s56, 19200, %s58, [#allocation5], 128, 128, 8
    $region25: #{forward.1} parent=1 // pred_fallthru
      _
    // Predicated region
    $region26: #{forward.1} parent=1 // pred_check
      _
    $region27: #{forward.1} parent=1 // pred_check_branch
      %65 = sbr.rel (0) target = $region29
    $region28: #{forward.1} parent=1 // pred_region
      _
    $region29: #{forward.1} parent=1 // pred_fallthru
      _
    // Predicated region
    $region30: #{forward.1} parent=1 // pred_check
      _
    $region31: #{forward.1} parent=1 // pred_check_branch
      %67 = sbr.rel (0) target = $region33
    $region32: #{forward.1} parent=1 // pred_region
      %69 = vsyncadd [#allocation8], 0
      %s70 = sshll.u32 %s7, 4
      %s71 = int_to_ptr.hbm [resolvable:$true] %s70
      %s72 = sshll.u32 [#allocation7], 4
      %s73 = int_to_ptr.vmem [resolvable:$true] %s72
      %78 = dma.hbm_to_vmem [thread:$0]  %s71, 25600, %s73, [#allocation8], 256, 256, 16
    $region33: #{forward.1} parent=1 // pred_fallthru
      _
    // Predicated region
    $region34: #{forward.1} parent=1 // pred_check
      _
    $region35: #{forward.1} parent=1 // pred_check_branch
      %80 = sbr.rel (0) target = $region37
    $region36: #{forward.1} parent=1 // pred_region
      _
    $region37: #{forward.1} parent=1 // pred_fallthru
      _
    // Predicated region
    $region38: #{forward.1} parent=1 // pred_check
      _
    $region39: #{forward.1} parent=1 // pred_check_branch
      %82 = sbr.rel (0) target = $region41
    $region40: #{forward.1} parent=1 // pred_region
      %84 = vsyncadd [#allocation8], 0
      %s85 = sshll.u32 %s9, 4
      %s86 = int_to_ptr.hbm [resolvable:$true] %s85
      %s87 = sshll.u32 [#allocation9], 4
      %s88 = int_to_ptr.vmem [resolvable:$true] %s87
      %93 = dma.hbm_to_vmem [thread:$0]  %s86, 4032, %s88, [#allocation8], 64, 64, 4
    $region41: #{forward.1} parent=1 // pred_fallthru
      _
    // Predicated region
    $region42: #{forward.1} parent=1 // pred_check
      _
    $region43: #{forward.1} parent=1 // pred_check_branch
      %95 = sbr.rel (0) target = $region45
    $region44: #{forward.1} parent=1 // pred_region
      _
    $region45: #{forward.1} parent=1 // pred_fallthru
      _
    // Predicated region
    $region46: #{forward.1} parent=1 // pred_check
      _
    $region47: #{forward.1} parent=1 // pred_check_branch
      %97 = sbr.rel (0) target = $region49
    $region48: #{forward.1} parent=1 // pred_region
      %99 = dma.done [#allocation3], 2304
    $region49: #{forward.1} parent=1 // pred_fallthru
      _
    // Predicated region
    $region50: #{forward.1} parent=1 // pred_check
      _
    $region51: #{forward.1} parent=1 // pred_check_branch
      %101 = sbr.rel (0) target = $region53
    $region52: #{forward.1} parent=1 // pred_region
      %103 = dma.done [#allocation5], 19200
    $region53: #{forward.1} parent=1 // pred_fallthru
      _
    // Predicated region
    $region54: #{forward.1} parent=1 // pred_check
      _
    $region55: #{forward.1} parent=1 // pred_check_branch
      %105 = sbr.rel (0) target = $region57
    $region56: #{forward.1} parent=1 // pred_region
      %107 = dma.done [#allocation5], 19200
    $region57: #{forward.1} parent=1 // pred_fallthru
      _
    // Predicated region
    $region58: #{forward.1} parent=1 // pred_check
      _
    $region59: #{forward.1} parent=1 // pred_check_branch
      %109 = sbr.rel (0) target = $region61
    $region60: #{forward.1} parent=1 // pred_region
      %111 = dma.done [#allocation8], 25600
    $region61: #{forward.1} parent=1 // pred_fallthru
      _
    // Predicated region
    $region62: #{forward.1} parent=1 // pred_check
      _
    $region63: #{forward.1} parent=1 // pred_check_branch
      %113 = sbr.rel (0) target = $region65
    $region64: #{forward.1} parent=1 // pred_region
      %115 = dma.done [#allocation8], 4032
    $region65: #{forward.1} parent=1 // pred_fallthru
      _
    %v117 = vld [vmem:[%s0] sm:$0xf]
    %v118 = vld [vmem:[%s0 + $0x4] sm:$0xf]
    %v119 = vld [vmem:[%s0 + $0x8] sm:$0xf]
    %v120 = vld [vmem:[%s0 + $0xc] sm:$0xf]
    %v121 = vld [vmem:[%s0 + $0x10] sm:$0xf]
    %v122 = vld [vmem:[%s0 + $0x14] sm:$0xf]
    %v123 = vld [vmem:[%s0 + $0x18] sm:$0xf]
    %v124 = vld [vmem:[%s0 + $0x1c] sm:$0xf]
    %v125 = vld [vmem:[%s0 + $0x20] sm:$0xf]
    %v126 = vld [vmem:[%s0 + $0x24] sm:$0xf]
    %v127 = vld [vmem:[%s0 + $0x28] sm:$0xf]
    %v128 = vld [vmem:[%s0 + $0x2c] sm:$0xf]
    %v129 = vld [vmem:[%s0 + $0x30] sm:$0xf]
    %v130 = vld [vmem:[%s0 + $0x34] sm:$0xf]
    %v131 = vld [vmem:[%s0 + $0x38] sm:$0xf]
    %v132 = vld [vmem:[%s0 + $0x3c] sm:$0xf]
    %v133 = vld [vmem:[%s0 + $0x40] sm:$0xf]
    %v134 = vld [vmem:[%s0 + $0x44] sm:$0xf]
    %v135 = vld [vmem:[%s0 + $0x48] sm:$0xf]
    %v136 = vld [vmem:[%s0 + $0x4c] sm:$0xf]
    %v137 = vld [vmem:[%s0 + $0x50] sm:$0xf]
    %v138 = vld [vmem:[%s0 + $0x54] sm:$0xf]
    %v139 = vld [vmem:[%s0 + $0x58] sm:$0xf]
    %v140 = vld [vmem:[%s0 + $0x5c] sm:$0xf]
    %v141 = vld [vmem:[%s0 + $0x60] sm:$0xf]
    %v142 = vld [vmem:[%s0 + $0x64] sm:$0xf]
    %v143 = vld [vmem:[%s0 + $0x68] sm:$0xf]
    %v144 = vld [vmem:[%s0 + $0x6c] sm:$0xf]
    %v169 = vunpack.c.l.b16 %v117
    %v170 = vunpack.c.l.b16 %v118
    %v171 = vunpack.c.l.b16 %v119
    %v172 = vunpack.c.l.b16 %v120
    %v173 = vunpack.c.l.b16 %v121
    %v174 = vunpack.c.l.b16 %v122
    %v175 = vunpack.c.l.b16 %v123
    %v176 = vunpack.c.l.b16 %v124
    %v177 = vunpack.c.l.b16 %v125
    %v178 = vunpack.c.l.b16 %v126
    %v179 = vunpack.c.l.b16 %v127
    %v180 = vunpack.c.l.b16 %v128
    %v181 = vunpack.c.l.b16 %v129
    %v182 = vunpack.c.l.b16 %v130
    %v183 = vunpack.c.l.b16 %v131
    %v184 = vunpack.c.l.b16 %v132
    %v185 = vunpack.c.l.b16 %v133
    %v186 = vunpack.c.l.b16 %v134
    %v187 = vunpack.c.l.b16 %v135
    %v188 = vunpack.c.l.b16 %v136
    %v189 = vunpack.c.l.b16 %v137
    %v190 = vunpack.c.l.b16 %v138
    %v191 = vunpack.c.l.b16 %v139
    %v192 = vunpack.c.l.b16 %v140
    %v193 = vpack.c.b16 %v170, %v169
    %v194 = vpack.c.b16 %v172, %v171
    %v195 = vpack.c.b16 %v174, %v173
    %v196 = vpack.c.b16 %v176, %v175
    %v197 = vpack.c.b16 %v178, %v177
    %v198 = vpack.c.b16 %v180, %v179
    %v199 = vpack.c.b16 %v182, %v181
    %v200 = vpack.c.b16 %v184, %v183
    %v201 = vpack.c.b16 %v186, %v185
    %v202 = vpack.c.b16 %v188, %v187
    %v203 = vpack.c.b16 %v190, %v189
    %v204 = vpack.c.b16 %v192, %v191
    %v206 = vunpack.c.l.b16 %v141
    %v207 = vpack.c.b16 %v171, %v170
    %v208 = vpack.c.b16 %v173, %v172
    %v209 = vpack.c.b16 %v175, %v174
    %v210 = vpack.c.b16 %v177, %v176
    %v211 = vpack.c.b16 %v179, %v178
    %v212 = vpack.c.b16 %v181, %v180
    %v213 = vpack.c.b16 %v183, %v182
    %v214 = vpack.c.b16 %v185, %v184
    %v215 = vpack.c.b16 %v187, %v186
    %v216 = vpack.c.b16 %v189, %v188
    %v217 = vpack.c.b16 %v191, %v190
    %v218 = vpack.c.b16 %v206, %v192
    %219 = vrot.lane.b32.xlu0 %v207, 28
    %v220 = vpop.permute.xlu0 %219
    %221 = vrot.lane.b32.xlu0 %v208, 28
    %v222 = vpop.permute.xlu0 %221
    %223 = vrot.lane.b32.xlu0 %v209, 28
    %v224 = vpop.permute.xlu0 %223
    %225 = vrot.lane.b32.xlu0 %v210, 28
    %v226 = vpop.permute.xlu0 %225
    %227 = vrot.lane.b32.xlu0 %v211, 28
    %v228 = vpop.permute.xlu0 %227
    %229 = vrot.lane.b32.xlu0 %v212, 28
    %v230 = vpop.permute.xlu0 %229
    %231 = vrot.lane.b32.xlu0 %v213, 28
    %v232 = vpop.permute.xlu0 %231
    %233 = vrot.lane.b32.xlu0 %v214, 28
    %v234 = vpop.permute.xlu0 %233
    %235 = vrot.lane.b32.xlu0 %v215, 28
    %v236 = vpop.permute.xlu0 %235
    %237 = vrot.lane.b32.xlu0 %v216, 28
    %v238 = vpop.permute.xlu0 %237
    %239 = vrot.lane.b32.xlu0 %v217, 28
    %v240 = vpop.permute.xlu0 %239
    %241 = vrot.lane.b32.xlu0 %v218, 28
    %v242 = vpop.permute.xlu0 %241
    %v244 = vunpack.c.l.b16 %v142
    %v245 = vpack.c.b16 %v244, %v206
    %246 = vrot.lane.b32.xlu0 %v194, 56
    %v247 = vpop.permute.xlu0 %246
    %248 = vrot.lane.b32.xlu0 %v195, 56
    %v249 = vpop.permute.xlu0 %248
    %250 = vrot.lane.b32.xlu0 %v196, 56
    %v251 = vpop.permute.xlu0 %250
    %252 = vrot.lane.b32.xlu0 %v197, 56
    %v253 = vpop.permute.xlu0 %252
    %254 = vrot.lane.b32.xlu0 %v198, 56
    %v255 = vpop.permute.xlu0 %254
    %256 = vrot.lane.b32.xlu0 %v199, 56
    %v257 = vpop.permute.xlu0 %256
    %258 = vrot.lane.b32.xlu0 %v200, 56
    %v259 = vpop.permute.xlu0 %258
    %260 = vrot.lane.b32.xlu0 %v201, 56
    %v261 = vpop.permute.xlu0 %260
    %262 = vrot.lane.b32.xlu0 %v202, 56
    %v263 = vpop.permute.xlu0 %262
    %264 = vrot.lane.b32.xlu0 %v203, 56
    %v265 = vpop.permute.xlu0 %264
    %266 = vrot.lane.b32.xlu0 %v204, 56
    %v267 = vpop.permute.xlu0 %266
    %268 = vrot.lane.b32.xlu0 %v245, 56
    %v269 = vpop.permute.xlu0 %268
    %v271 = vunpack.c.l.b16 %v143
    %v272 = vpack.c.b16 %v271, %v244
    %273 = vrot.lane.b32.xlu0 %v208, 84
    %v274 = vpop.permute.xlu0 %273
    %275 = vrot.lane.b32.xlu0 %v209, 84
    %v276 = vpop.permute.xlu0 %275
    %277 = vrot.lane.b32.xlu0 %v210, 84
    %v278 = vpop.permute.xlu0 %277
    %279 = vrot.lane.b32.xlu0 %v211, 84
    %v280 = vpop.permute.xlu0 %279
    %281 = vrot.lane.b32.xlu0 %v212, 84
    %v282 = vpop.permute.xlu0 %281
    %283 = vrot.lane.b32.xlu0 %v213, 84
    %v284 = vpop.permute.xlu0 %283
    %285 = vrot.lane.b32.xlu0 %v214, 84
    %v286 = vpop.permute.xlu0 %285
    %287 = vrot.lane.b32.xlu0 %v215, 84
    %v288 = vpop.permute.xlu0 %287
    %289 = vrot.lane.b32.xlu0 %v216, 84
    %v290 = vpop.permute.xlu0 %289
    %291 = vrot.lane.b32.xlu0 %v217, 84
    %v292 = vpop.permute.xlu0 %291
    %293 = vrot.lane.b32.xlu0 %v218, 84
    %v294 = vpop.permute.xlu0 %293
    %295 = vrot.lane.b32.xlu0 %v272, 84
    %v296 = vpop.permute.xlu0 %295
    %v298 = vunpack.c.l.b16 %v144
    %v299 = vpack.c.b16 %v298, %v271
    %300 = vrot.lane.b32.xlu0 %v195, 112
    %v301 = vpop.permute.xlu0 %300
    %302 = vrot.lane.b32.xlu0 %v196, 112
    %v303 = vpop.permute.xlu0 %302
    %304 = vrot.lane.b32.xlu0 %v197, 112
    %v305 = vpop.permute.xlu0 %304
    %306 = vrot.lane.b32.xlu0 %v198, 112
    %v307 = vpop.permute.xlu0 %306
    %308 = vrot.lane.b32.xlu0 %v199, 112
    %v309 = vpop.permute.xlu0 %308
    %310 = vrot.lane.b32.xlu0 %v200, 112
    %v311 = vpop.permute.xlu0 %310
    %312 = vrot.lane.b32.xlu0 %v201, 112
    %v313 = vpop.permute.xlu0 %312
    %314 = vrot.lane.b32.xlu0 %v202, 112
    %v315 = vpop.permute.xlu0 %314
    %316 = vrot.lane.b32.xlu0 %v203, 112
    %v317 = vpop.permute.xlu0 %316
    %318 = vrot.lane.b32.xlu0 %v204, 112
    %v319 = vpop.permute.xlu0 %318
    %320 = vrot.lane.b32.xlu0 %v245, 112
    %v321 = vpop.permute.xlu0 %320
    %322 = vrot.lane.b32.xlu0 %v299, 112
    %v323 = vpop.permute.xlu0 %322
    %vm324 = vcmask 228352
    %v327 = vsel %vm324, %v193, %v220
    %v330 = vsel %vm324, %v194, %v222
    %v333 = vsel %vm324, %v195, %v224
    %v336 = vsel %vm324, %v196, %v226
    %v339 = vsel %vm324, %v197, %v228
    %v342 = vsel %vm324, %v198, %v230
    %v345 = vsel %vm324, %v199, %v232
    %v348 = vsel %vm324, %v200, %v234
    %v351 = vsel %vm324, %v201, %v236
    %v354 = vsel %vm324, %v202, %v238
    %v357 = vsel %vm324, %v203, %v240
    %v360 = vsel %vm324, %v204, %v242
    %vm361 = vcmask 457728
    %v363 = vsel %vm361, %v327, %v247
    %v365 = vsel %vm361, %v330, %v249
    %v367 = vsel %vm361, %v333, %v251
    %v369 = vsel %vm361, %v336, %v253
    %v371 = vsel %vm361, %v339, %v255
    %v373 = vsel %vm361, %v342, %v257
    %v375 = vsel %vm361, %v345, %v259
    %v377 = vsel %vm361, %v348, %v261
    %v379 = vsel %vm361, %v351, %v263
    %v381 = vsel %vm361, %v354, %v265
    %v383 = vsel %vm361, %v357, %v267
    %v385 = vsel %vm361, %v360, %v269
    %vm386 = vcmask 687104
    %v388 = vsel %vm386, %v363, %v274
    %v390 = vsel %vm386, %v365, %v276
    %v392 = vsel %vm386, %v367, %v278
    %v394 = vsel %vm386, %v369, %v280
    %v396 = vsel %vm386, %v371, %v282
    %v398 = vsel %vm386, %v373, %v284
    %v400 = vsel %vm386, %v375, %v286
    %v402 = vsel %vm386, %v377, %v288
    %v404 = vsel %vm386, %v379, %v290
    %v406 = vsel %vm386, %v381, %v292
    %v408 = vsel %vm386, %v383, %v294
    %v410 = vsel %vm386, %v385, %v296
    %vm411 = vcmask 916480
    %v413 = vsel %vm411, %v388, %v301
    %v416 = vsel %vm411, %v390, %v303
    %v419 = vsel %vm411, %v392, %v305
    %v422 = vsel %vm411, %v394, %v307
    %v425 = vsel %vm411, %v396, %v309
    %v428 = vsel %vm411, %v398, %v311
    %v431 = vsel %vm411, %v400, %v313
    %v434 = vsel %vm411, %v402, %v315
    %v437 = vsel %vm411, %v404, %v317
    %v440 = vsel %vm411, %v406, %v319
    %v443 = vsel %vm411, %v408, %v321
    %v446 = vsel %vm411, %v410, %v323
    %v448 = vld [vmem:[#allocation2] sm:$0xff]
    %v449 = vld [vmem:[#allocation2 + $0x8] sm:$0xff]
    %v450 = vld [vmem:[#allocation2 + $0x10] sm:$0xff]
    %v451 = vld [vmem:[#allocation2 + $0x18] sm:$0xff]
    %v452 = vld [vmem:[#allocation2 + $0x20] sm:$0xff]
    %v453 = vld [vmem:[#allocation2 + $0x28] sm:$0xff]
    %v454 = vld [vmem:[#allocation2 + $0x30] sm:$0xff]
    %v455 = vld [vmem:[#allocation2 + $0x38] sm:$0xff]
    %v456 = vld [vmem:[#allocation2 + $0x40] sm:$0xff]
    %v457 = vld [vmem:[#allocation2 + $0x48] sm:$0xff]
    %v458 = vld [vmem:[#allocation2 + $0x50] sm:$0xff]
    %v459 = vld [vmem:[#allocation2 + $0x58] sm:$0xff]
    %v460 = vld [vmem:[#allocation2 + $0x60] sm:$0xff]
    %v461 = vld [vmem:[#allocation2 + $0x68] sm:$0xff]
    %v462 = vld [vmem:[#allocation2 + $0x70] sm:$0xff]
    %v463 = vld [vmem:[#allocation2 + $0x78] sm:$0xff]
    %v464 = vld [vmem:[#allocation2 + $0x80] sm:$0xff]
    %v465 = vld [vmem:[#allocation2 + $0x88] sm:$0x33]
    %v484 = vunpack.c.l.b16 %v448
    %v485 = vunpack.c.h.b16 %v448
    %v486 = vunpack.c.l.b16 %v449
    %v487 = vunpack.c.h.b16 %v449
    %v488 = vunpack.c.l.b16 %v450
    %v489 = vunpack.c.h.b16 %v450
    %v490 = vunpack.c.l.b16 %v451
    %v491 = vunpack.c.h.b16 %v451
    %v492 = vunpack.c.l.b16 %v452
    %v493 = vunpack.c.h.b16 %v452
    %v494 = vunpack.c.l.b16 %v453
    %v495 = vunpack.c.h.b16 %v453
    %v496 = vunpack.c.l.b16 %v454
    %v497 = vunpack.c.h.b16 %v454
    %v498 = vunpack.c.l.b16 %v455
    %v499 = vunpack.c.h.b16 %v455
    %v500 = vunpack.c.l.b16 %v456
    %v501 = vunpack.c.h.b16 %v456
    %v502 = vunpack.c.l.b16 %v457
    %v503 = vunpack.c.h.b16 %v457
    %v504 = vunpack.c.l.b16 %v458
    %v505 = vunpack.c.h.b16 %v458
    %v506 = vunpack.c.l.b16 %v459
    %v507 = vunpack.c.h.b16 %v459
    %v508 = vunpack.c.l.b16 %v460
    %v509 = vunpack.c.h.b16 %v460
    %v510 = vunpack.c.l.b16 %v461
    %v511 = vunpack.c.h.b16 %v461
    %v512 = vunpack.c.l.b16 %v462
    %v513 = vunpack.c.h.b16 %v462
    %v514 = vunpack.c.l.b16 %v463
    %v515 = vunpack.c.h.b16 %v463
    %v516 = vunpack.c.l.b16 %v464
    %v517 = vunpack.c.h.b16 %v464
    %v518 = vunpack.c.l.b16 %v465
    %v519 = vunpack.c.h.b16 %v465
    %v520 = vpack.c.b16 %v486, %v484
    %v521 = vpack.c.b16 %v487, %v485
    %v522 = vpack.c.b16 %v490, %v488
    %v523 = vpack.c.b16 %v491, %v489
    %v524 = vpack.c.b16 %v494, %v492
    %v525 = vpack.c.b16 %v495, %v493
    %v526 = vpack.c.b16 %v498, %v496
    %v527 = vpack.c.b16 %v499, %v497
    %v528 = vpack.c.b16 %v502, %v500
    %v529 = vpack.c.b16 %v503, %v501
    %v530 = vpack.c.b16 %v506, %v504
    %v531 = vpack.c.b16 %v507, %v505
    %v532 = vpack.c.b16 %v510, %v508
    %v533 = vpack.c.b16 %v511, %v509
    %v534 = vpack.c.b16 %v514, %v512
    %v535 = vpack.c.b16 %v515, %v513
    %v536 = vpack.c.b16 %v518, %v516
    %v537 = vpack.c.b16 %v519, %v517
    %vm554 = vcmask 97280
    %v555 = vsel %vm554, %v301, 0
    %v557 = vsel %vm554, %v303, 0
    %v559 = vsel %vm554, %v305, 0
    %v561 = vsel %vm554, %v307, 0
    %v563 = vsel %vm554, %v309, 0
    %v565 = vsel %vm554, %v311, 0
    %v567 = vsel %vm554, %v313, 0
    %v569 = vsel %vm554, %v315, 0
    %v571 = vsel %vm554, %v317, 0
    %v573 = vsel %vm554, %v319, 0
    %v575 = vsel %vm554, %v321, 0
    %v577 = vsel %vm554, %v323, 0
    %vm579 = vcmask 1045504
    %v581 = vsel %vm579, %v536, 0
    %v584 = vsel %vm579, %v537, 0
    %586 = vmatpush.bf16.msra.mxu0 %v534
    %587 = vmatpush.bf16.msra.mxu0 %v532
    %588 = vmatpush.bf16.msra.mxu0 %v530
    %589 = vmatpush.bf16.msra.mxu0 %v528
    %590 = vmatpush.bf16.msra.mxu0 %v526
    %591 = vmatpush.bf16.msra.mxu0 %v524
    %592 = vmatpush.bf16.msra.mxu0 %v522
    %593 = vmatpush.bf16.msra.mxu0 %v520
    %594 = vmatmul.bf16.gmra.mxu0 %v413
    %v595 = vpop.f32.mrf.mxu0
    %v596 = vadd.f32 0.0, %v595
    %v597 = vpop.f32.mrf.mxu0
    %v598 = vadd.f32 0.0, %v597
    %599 = vmatmul.bf16.gmra.mxu0 %v416
    %v600 = vpop.f32.mrf.mxu0
    %v601 = vadd.f32 0.0, %v600
    %v602 = vpop.f32.mrf.mxu0
    %v603 = vadd.f32 0.0, %v602
    %604 = vmatmul.bf16.gmra.mxu0 %v419
    %v605 = vpop.f32.mrf.mxu0
    %v606 = vadd.f32 0.0, %v605
    %v607 = vpop.f32.mrf.mxu0
    %v608 = vadd.f32 0.0, %v607
    %609 = vmatmul.bf16.gmra.mxu0 %v422
    %v610 = vpop.f32.mrf.mxu0
    %v611 = vadd.f32 0.0, %v610
    %v612 = vpop.f32.mrf.mxu0
    %v613 = vadd.f32 0.0, %v612
    %614 = vmatmul.bf16.gmra.mxu0 %v425
    %v615 = vpop.f32.mrf.mxu0
    %v616 = vadd.f32 0.0, %v615
    %v617 = vpop.f32.mrf.mxu0
    %v618 = vadd.f32 0.0, %v617
    %619 = vmatmul.bf16.gmra.mxu0 %v428
    %v620 = vpop.f32.mrf.mxu0
    %v621 = vadd.f32 0.0, %v620
    %v622 = vpop.f32.mrf.mxu0
    %v623 = vadd.f32 0.0, %v622
    %624 = vmatmul.bf16.gmra.mxu0 %v431
    %v625 = vpop.f32.mrf.mxu0
    %v626 = vadd.f32 0.0, %v625
    %v627 = vpop.f32.mrf.mxu0
    %v628 = vadd.f32 0.0, %v627
    %629 = vmatmul.bf16.gmra.mxu0 %v434
    %v630 = vpop.f32.mrf.mxu0
    %v631 = vadd.f32 0.0, %v630
    %v632 = vpop.f32.mrf.mxu0
    %v633 = vadd.f32 0.0, %v632
    %634 = vmatmul.bf16.gmra.mxu0 %v437
    %v635 = vpop.f32.mrf.mxu0
    %v636 = vadd.f32 0.0, %v635
    %v637 = vpop.f32.mrf.mxu0
    %v638 = vadd.f32 0.0, %v637
    %639 = vmatmul.bf16.gmra.mxu0 %v440
    %v640 = vpop.f32.mrf.mxu0
    %v641 = vadd.f32 0.0, %v640
    %v642 = vpop.f32.mrf.mxu0
    %v643 = vadd.f32 0.0, %v642
    %644 = vmatmul.bf16.gmra.mxu0 %v443
    %v645 = vpop.f32.mrf.mxu0
    %v646 = vadd.f32 0.0, %v645
    %v647 = vpop.f32.mrf.mxu0
    %v648 = vadd.f32 0.0, %v647
    %649 = vmatmul.bf16.gmra.mxu0 %v446
    %v650 = vpop.f32.mrf.mxu0
    %v651 = vadd.f32 0.0, %v650
    %v652 = vpop.f32.mrf.mxu0
    %v653 = vadd.f32 0.0, %v652
    %654 = vdwg.mxu0
    %655 = vmatpush.bf16.msra.mxu0 0
    %656 = vmatpush.bf16.msra.mxu0 0
    %657 = vmatpush.bf16.msra.mxu0 0
    %658 = vmatpush.bf16.msra.mxu0 0
    %659 = vmatpush.bf16.msra.mxu0 0
    %660 = vmatpush.bf16.msra.mxu0 0
    %661 = vmatpush.bf16.msra.mxu0 0
    %662 = vmatpush.bf16.msra.mxu0 %v581
    %663 = vmatmul.bf16.gmra.mxu0 %v555
    %v664 = vpop.f32.mrf.mxu0
    %v665 = vadd.f32 %v596, %v664
    %v666 = vpop.f32.mrf.mxu0
    %v667 = vadd.f32 %v598, %v666
    %668 = vmatmul.bf16.gmra.mxu0 %v557
    %v669 = vpop.f32.mrf.mxu0
    %v670 = vadd.f32 %v601, %v669
    %v671 = vpop.f32.mrf.mxu0
    %v672 = vadd.f32 %v603, %v671
    %673 = vmatmul.bf16.gmra.mxu0 %v559
    %v674 = vpop.f32.mrf.mxu0
    %v675 = vadd.f32 %v606, %v674
    %v676 = vpop.f32.mrf.mxu0
    %v677 = vadd.f32 %v608, %v676
    %678 = vmatmul.bf16.gmra.mxu0 %v561
    %v679 = vpop.f32.mrf.mxu0
    %v680 = vadd.f32 %v611, %v679
    %v681 = vpop.f32.mrf.mxu0
    %v682 = vadd.f32 %v613, %v681
    %683 = vmatmul.bf16.gmra.mxu0 %v563
    %v684 = vpop.f32.mrf.mxu0
    %v685 = vadd.f32 %v616, %v684
    %v686 = vpop.f32.mrf.mxu0
    %v687 = vadd.f32 %v618, %v686
    %688 = vmatmul.bf16.gmra.mxu0 %v565
    %v689 = vpop.f32.mrf.mxu0
    %v690 = vadd.f32 %v621, %v689
    %v691 = vpop.f32.mrf.mxu0
    %v692 = vadd.f32 %v623, %v691
    %693 = vmatmul.bf16.gmra.mxu0 %v567
    %v694 = vpop.f32.mrf.mxu0
    %v695 = vadd.f32 %v626, %v694
    %v696 = vpop.f32.mrf.mxu0
    %v697 = vadd.f32 %v628, %v696
    %698 = vmatmul.bf16.gmra.mxu0 %v569
    %v699 = vpop.f32.mrf.mxu0
    %v700 = vadd.f32 %v631, %v699
    %v701 = vpop.f32.mrf.mxu0
    %v702 = vadd.f32 %v633, %v701
    %703 = vmatmul.bf16.gmra.mxu0 %v571
    %v704 = vpop.f32.mrf.mxu0
    %v705 = vadd.f32 %v636, %v704
    %v706 = vpop.f32.mrf.mxu0
    %v707 = vadd.f32 %v638, %v706
    %708 = vmatmul.bf16.gmra.mxu0 %v573
    %v709 = vpop.f32.mrf.mxu0
    %v710 = vadd.f32 %v641, %v709
    %v711 = vpop.f32.mrf.mxu0
    %v712 = vadd.f32 %v643, %v711
    %713 = vmatmul.bf16.gmra.mxu0 %v575
    %v714 = vpop.f32.mrf.mxu0
    %v715 = vadd.f32 %v646, %v714
    %v716 = vpop.f32.mrf.mxu0
    %v717 = vadd.f32 %v648, %v716
    %718 = vmatmul.bf16.gmra.mxu0 %v577
    %v719 = vpop.f32.mrf.mxu0
    %v720 = vadd.f32 %v651, %v719
    %v721 = vpop.f32.mrf.mxu0
    %v722 = vadd.f32 %v653, %v721
    %723 = vdwg.mxu0
    %724 = vmatpush.bf16.msra.mxu0 %v535
    %725 = vmatpush.bf16.msra.mxu0 %v533
    %726 = vmatpush.bf16.msra.mxu0 %v531
    %727 = vmatpush.bf16.msra.mxu0 %v529
    %728 = vmatpush.bf16.msra.mxu0 %v527
    %729 = vmatpush.bf16.msra.mxu0 %v525
    %730 = vmatpush.bf16.msra.mxu0 %v523
    %731 = vmatpush.bf16.msra.mxu0 %v521
    %732 = vmatmul.bf16.gmra.mxu0 %v413
    %v733 = vpop.f32.mrf.mxu0
    %v734 = vadd.f32 0.0, %v733
    %v735 = vpop.f32.mrf.mxu0
    %v736 = vadd.f32 0.0, %v735
    %737 = vmatmul.bf16.gmra.mxu0 %v416
    %v738 = vpop.f32.mrf.mxu0
    %v739 = vadd.f32 0.0, %v738
    %v740 = vpop.f32.mrf.mxu0
    %v741 = vadd.f32 0.0, %v740
    %742 = vmatmul.bf16.gmra.mxu0 %v419
    %v743 = vpop.f32.mrf.mxu0
    %v744 = vadd.f32 0.0, %v743
    %v745 = vpop.f32.mrf.mxu0
    %v746 = vadd.f32 0.0, %v745
    %747 = vmatmul.bf16.gmra.mxu0 %v422
    %v748 = vpop.f32.mrf.mxu0
    %v749 = vadd.f32 0.0, %v748
    %v750 = vpop.f32.mrf.mxu0
    %v751 = vadd.f32 0.0, %v750
    %752 = vmatmul.bf16.gmra.mxu0 %v425
    %v753 = vpop.f32.mrf.mxu0
    %v754 = vadd.f32 0.0, %v753
    %v755 = vpop.f32.mrf.mxu0
    %v756 = vadd.f32 0.0, %v755
    %757 = vmatmul.bf16.gmra.mxu0 %v428
    %v758 = vpop.f32.mrf.mxu0
    %v759 = vadd.f32 0.0, %v758
    %v760 = vpop.f32.mrf.mxu0
    %v761 = vadd.f32 0.0, %v760
    %762 = vmatmul.bf16.gmra.mxu0 %v431
    %v763 = vpop.f32.mrf.mxu0
    %v764 = vadd.f32 0.0, %v763
    %v765 = vpop.f32.mrf.mxu0
    %v766 = vadd.f32 0.0, %v765
    %767 = vmatmul.bf16.gmra.mxu0 %v434
    %v768 = vpop.f32.mrf.mxu0
    %v769 = vadd.f32 0.0, %v768
    %v770 = vpop.f32.mrf.mxu0
    %v771 = vadd.f32 0.0, %v770
    %772 = vmatmul.bf16.gmra.mxu0 %v437
    %v773 = vpop.f32.mrf.mxu0
    %v774 = vadd.f32 0.0, %v773
    %v775 = vpop.f32.mrf.mxu0
    %v776 = vadd.f32 0.0, %v775
    %777 = vmatmul.bf16.gmra.mxu0 %v440
    %v778 = vpop.f32.mrf.mxu0
    %v779 = vadd.f32 0.0, %v778
    %v780 = vpop.f32.mrf.mxu0
    %v781 = vadd.f32 0.0, %v780
    %782 = vmatmul.bf16.gmra.mxu0 %v443
    %v783 = vpop.f32.mrf.mxu0
    %v784 = vadd.f32 0.0, %v783
    %v785 = vpop.f32.mrf.mxu0
    %v786 = vadd.f32 0.0, %v785
    %787 = vmatmul.bf16.gmra.mxu0 %v446
    %v788 = vpop.f32.mrf.mxu0
    %v789 = vadd.f32 0.0, %v788
    %v790 = vpop.f32.mrf.mxu0
    %v791 = vadd.f32 0.0, %v790
    %792 = vdwg.mxu0
    %793 = vmatpush.bf16.msra.mxu0 0
    %794 = vmatpush.bf16.msra.mxu0 0
    %795 = vmatpush.bf16.msra.mxu0 0
    %796 = vmatpush.bf16.msra.mxu0 0
    %797 = vmatpush.bf16.msra.mxu0 0
    %798 = vmatpush.bf16.msra.mxu0 0
    %799 = vmatpush.bf16.msra.mxu0 0
    %800 = vmatpush.bf16.msra.mxu0 %v584
    %801 = vmatmul.bf16.gmra.mxu0 %v555
    %v802 = vpop.f32.mrf.mxu0
    %v803 = vadd.f32 %v734, %v802
    %v804 = vpop.f32.mrf.mxu0
    %v805 = vadd.f32 %v736, %v804
    %806 = vmatmul.bf16.gmra.mxu0 %v557
    %v807 = vpop.f32.mrf.mxu0
    %v808 = vadd.f32 %v739, %v807
    %v809 = vpop.f32.mrf.mxu0
    %v810 = vadd.f32 %v741, %v809
    %811 = vmatmul.bf16.gmra.mxu0 %v559
    %v812 = vpop.f32.mrf.mxu0
    %v813 = vadd.f32 %v744, %v812
    %v814 = vpop.f32.mrf.mxu0
    %v815 = vadd.f32 %v746, %v814
    %816 = vmatmul.bf16.gmra.mxu0 %v561
    %v817 = vpop.f32.mrf.mxu0
    %v818 = vadd.f32 %v749, %v817
    %v819 = vpop.f32.mrf.mxu0
    %v820 = vadd.f32 %v751, %v819
    %821 = vmatmul.bf16.gmra.mxu0 %v563
    %v822 = vpop.f32.mrf.mxu0
    %v823 = vadd.f32 %v754, %v822
    %v824 = vpop.f32.mrf.mxu0
    %v825 = vadd.f32 %v756, %v824
    %826 = vmatmul.bf16.gmra.mxu0 %v565
    %v827 = vpop.f32.mrf.mxu0
    %v828 = vadd.f32 %v759, %v827
    %v829 = vpop.f32.mrf.mxu0
    %v830 = vadd.f32 %v761, %v829
    %831 = vmatmul.bf16.gmra.mxu0 %v567
    %v832 = vpop.f32.mrf.mxu0
    %v833 = vadd.f32 %v764, %v832
    %v834 = vpop.f32.mrf.mxu0
    %v835 = vadd.f32 %v766, %v834
    %836 = vmatmul.bf16.gmra.mxu0 %v569
    %v837 = vpop.f32.mrf.mxu0
    %v838 = vadd.f32 %v769, %v837
    %v839 = vpop.f32.mrf.mxu0
    %v840 = vadd.f32 %v771, %v839
    %841 = vmatmul.bf16.gmra.mxu0 %v571
    %v842 = vpop.f32.mrf.mxu0
    %v843 = vadd.f32 %v774, %v842
    %v844 = vpop.f32.mrf.mxu0
    %v845 = vadd.f32 %v776, %v844
    %846 = vmatmul.bf16.gmra.mxu0 %v573
    %v847 = vpop.f32.mrf.mxu0
    %v848 = vadd.f32 %v779, %v847
    %v849 = vpop.f32.mrf.mxu0
    %v850 = vadd.f32 %v781, %v849
    %851 = vmatmul.bf16.gmra.mxu0 %v575
    %v852 = vpop.f32.mrf.mxu0
    %v853 = vadd.f32 %v784, %v852
    %v854 = vpop.f32.mrf.mxu0
    %v855 = vadd.f32 %v786, %v854
    %856 = vmatmul.bf16.gmra.mxu0 %v577
    %v857 = vpop.f32.mrf.mxu0
    %v858 = vadd.f32 %v789, %v857
    %v859 = vpop.f32.mrf.mxu0
    %v860 = vadd.f32 %v791, %v859
    %861 = vdwg.mxu0
    %v862 = vld [vmem:[%s2] sm:$0xff]
    %v863 = vld [vmem:[%s2 + $0x8] sm:$0xff]
    %v864 = vld [vmem:[%s2 + $0x10] sm:$0xff]
    %v865 = vld [vmem:[%s2 + $0x18] sm:$0xff]
    %v866 = vld [vmem:[%s2 + $0x20] sm:$0xff]
    %v867 = vld [vmem:[%s2 + $0x28] sm:$0xff]
    %v868 = vld [vmem:[%s2 + $0x30] sm:$0xff]
    %v869 = vld [vmem:[%s2 + $0x38] sm:$0xff]
    %v870 = vld [vmem:[%s2 + $0x40] sm:$0xff]
    %v871 = vld [vmem:[%s2 + $0x48] sm:$0xff]
    %v872 = vld [vmem:[%s2 + $0x50] sm:$0xff]
    %v873 = vld [vmem:[%s2 + $0x58] sm:$0xff]
    %v874 = vld [vmem:[%s2 + $0x60] sm:$0xff]
    %v875 = vld [vmem:[%s2 + $0x68] sm:$0xff]
    %v876 = vld [vmem:[%s2 + $0x70] sm:$0xff]
    %v877 = vld [vmem:[%s2 + $0x78] sm:$0xff]
    %v878 = vld [vmem:[%s2 + $0x80] sm:$0xff]
    %v879 = vld [vmem:[%s2 + $0x88] sm:$0x33]
    %v898 = vunpack.c.l.b16 %v862
    %v899 = vunpack.c.h.b16 %v862
    %v900 = vunpack.c.l.b16 %v863
    %v901 = vunpack.c.h.b16 %v863
    %v902 = vunpack.c.l.b16 %v864
    %v903 = vunpack.c.h.b16 %v864
    %v904 = vunpack.c.l.b16 %v865
    %v905 = vunpack.c.h.b16 %v865
    %v906 = vunpack.c.l.b16 %v866
    %v907 = vunpack.c.h.b16 %v866
    %v908 = vunpack.c.l.b16 %v867
    %v909 = vunpack.c.h.b16 %v867
    %v910 = vunpack.c.l.b16 %v868
    %v911 = vunpack.c.h.b16 %v868
    %v912 = vunpack.c.l.b16 %v869
    %v913 = vunpack.c.h.b16 %v869
    %v914 = vunpack.c.l.b16 %v870
    %v915 = vunpack.c.h.b16 %v870
    %v916 = vunpack.c.l.b16 %v871
    %v917 = vunpack.c.h.b16 %v871
    %v918 = vunpack.c.l.b16 %v872
    %v919 = vunpack.c.h.b16 %v872
    %v920 = vunpack.c.l.b16 %v873
    %v921 = vunpack.c.h.b16 %v873
    %v922 = vunpack.c.l.b16 %v874
    %v923 = vunpack.c.h.b16 %v874
    %v924 = vunpack.c.l.b16 %v875
    %v925 = vunpack.c.h.b16 %v875
    %v926 = vunpack.c.l.b16 %v876
    %v927 = vunpack.c.h.b16 %v876
    %v928 = vunpack.c.l.b16 %v877
    %v929 = vunpack.c.h.b16 %v877
    %v930 = vunpack.c.l.b16 %v878
    %v931 = vunpack.c.h.b16 %v878
    %v932 = vunpack.c.l.b16 %v879
    %v933 = vunpack.c.h.b16 %v879
    %v934 = vpack.c.b16 %v900, %v898
    %v935 = vpack.c.b16 %v901, %v899
    %v936 = vpack.c.b16 %v904, %v902
    %v937 = vpack.c.b16 %v905, %v903
    %v938 = vpack.c.b16 %v908, %v906
    %v939 = vpack.c.b16 %v909, %v907
    %v940 = vpack.c.b16 %v912, %v910
    %v941 = vpack.c.b16 %v913, %v911
    %v942 = vpack.c.b16 %v916, %v914
    %v943 = vpack.c.b16 %v917, %v915
    %v944 = vpack.c.b16 %v920, %v918
    %v945 = vpack.c.b16 %v921, %v919
    %v946 = vpack.c.b16 %v924, %v922
    %v947 = vpack.c.b16 %v925, %v923
    %v948 = vpack.c.b16 %v928, %v926
    %v949 = vpack.c.b16 %v929, %v927
    %v950 = vpack.c.b16 %v932, %v930
    %v951 = vpack.c.b16 %v933, %v931
    %v969 = vsel %vm579, %v950, 0
    %v972 = vsel %vm579, %v951, 0
    %974 = vmatpush.bf16.msra.mxu0 %v948
    %975 = vmatpush.bf16.msra.mxu0 %v946
    %976 = vmatpush.bf16.msra.mxu0 %v944
    %977 = vmatpush.bf16.msra.mxu0 %v942
    %978 = vmatpush.bf16.msra.mxu0 %v940
    %979 = vmatpush.bf16.msra.mxu0 %v938
    %980 = vmatpush.bf16.msra.mxu0 %v936
    %981 = vmatpush.bf16.msra.mxu0 %v934
    %982 = vmatmul.bf16.gmra.mxu0 %v413
    %v983 = vpop.f32.mrf.mxu0
    %v984 = vadd.f32 0.0, %v983
    %v985 = vpop.f32.mrf.mxu0
    %v986 = vadd.f32 0.0, %v985
    %987 = vmatmul.bf16.gmra.mxu0 %v416
    %v988 = vpop.f32.mrf.mxu0
    %v989 = vadd.f32 0.0, %v988
    %v990 = vpop.f32.mrf.mxu0
    %v991 = vadd.f32 0.0, %v990
    %992 = vmatmul.bf16.gmra.mxu0 %v419
    %v993 = vpop.f32.mrf.mxu0
    %v994 = vadd.f32 0.0, %v993
    %v995 = vpop.f32.mrf.mxu0
    %v996 = vadd.f32 0.0, %v995
    %997 = vmatmul.bf16.gmra.mxu0 %v422
    %v998 = vpop.f32.mrf.mxu0
    %v999 = vadd.f32 0.0, %v998
    %v1000 = vpop.f32.mrf.mxu0
    %v1001 = vadd.f32 0.0, %v1000
    %1002 = vmatmul.bf16.gmra.mxu0 %v425
    %v1003 = vpop.f32.mrf.mxu0
    %v1004 = vadd.f32 0.0, %v1003
    %v1005 = vpop.f32.mrf.mxu0
    %v1006 = vadd.f32 0.0, %v1005
    %1007 = vmatmul.bf16.gmra.mxu0 %v428
    %v1008 = vpop.f32.mrf.mxu0
    %v1009 = vadd.f32 0.0, %v1008
    %v1010 = vpop.f32.mrf.mxu0
    %v1011 = vadd.f32 0.0, %v1010
    %1012 = vmatmul.bf16.gmra.mxu0 %v431
    %v1013 = vpop.f32.mrf.mxu0
    %v1014 = vadd.f32 0.0, %v1013
    %v1015 = vpop.f32.mrf.mxu0
    %v1016 = vadd.f32 0.0, %v1015
    %1017 = vmatmul.bf16.gmra.mxu0 %v434
    %v1018 = vpop.f32.mrf.mxu0
    %v1019 = vadd.f32 0.0, %v1018
    %v1020 = vpop.f32.mrf.mxu0
    %v1021 = vadd.f32 0.0, %v1020
    %1022 = vmatmul.bf16.gmra.mxu0 %v437
    %v1023 = vpop.f32.mrf.mxu0
    %v1024 = vadd.f32 0.0, %v1023
    %v1025 = vpop.f32.mrf.mxu0
    %v1026 = vadd.f32 0.0, %v1025
    %1027 = vmatmul.bf16.gmra.mxu0 %v440
    %v1028 = vpop.f32.mrf.mxu0
    %v1029 = vadd.f32 0.0, %v1028
    %v1030 = vpop.f32.mrf.mxu0
    %v1031 = vadd.f32 0.0, %v1030
    %1032 = vmatmul.bf16.gmra.mxu0 %v443
    %v1033 = vpop.f32.mrf.mxu0
    %v1034 = vadd.f32 0.0, %v1033
    %v1035 = vpop.f32.mrf.mxu0
    %v1036 = vadd.f32 0.0, %v1035
    %1037 = vmatmul.bf16.gmra.mxu0 %v446
    %v1038 = vpop.f32.mrf.mxu0
    %v1039 = vadd.f32 0.0, %v1038
    %v1040 = vpop.f32.mrf.mxu0
    %v1041 = vadd.f32 0.0, %v1040
    %1042 = vdwg.mxu0
    %1043 = vmatpush.bf16.msra.mxu0 0
    %1044 = vmatpush.bf16.msra.mxu0 0
    %1045 = vmatpush.bf16.msra.mxu0 0
    %1046 = vmatpush.bf16.msra.mxu0 0
    %1047 = vmatpush.bf16.msra.mxu0 0
    %1048 = vmatpush.bf16.msra.mxu0 0
    %1049 = vmatpush.bf16.msra.mxu0 0
    %1050 = vmatpush.bf16.msra.mxu0 %v969
    %1051 = vmatmul.bf16.gmra.mxu0 %v555
    %v1052 = vpop.f32.mrf.mxu0
    %v1053 = vadd.f32 %v984, %v1052
    %v1054 = vpop.f32.mrf.mxu0
    %v1055 = vadd.f32 %v986, %v1054
    %1056 = vmatmul.bf16.gmra.mxu0 %v557
    %v1057 = vpop.f32.mrf.mxu0
    %v1058 = vadd.f32 %v989, %v1057
    %v1059 = vpop.f32.mrf.mxu0
    %v1060 = vadd.f32 %v991, %v1059
    %1061 = vmatmul.bf16.gmra.mxu0 %v559
    %v1062 = vpop.f32.mrf.mxu0
    %v1063 = vadd.f32 %v994, %v1062
    %v1064 = vpop.f32.mrf.mxu0
    %v1065 = vadd.f32 %v996, %v1064
    %1066 = vmatmul.bf16.gmra.mxu0 %v561
    %v1067 = vpop.f32.mrf.mxu0
    %v1068 = vadd.f32 %v999, %v1067
    %v1069 = vpop.f32.mrf.mxu0
    %v1070 = vadd.f32 %v1001, %v1069
    %1071 = vmatmul.bf16.gmra.mxu0 %v563
    %v1072 = vpop.f32.mrf.mxu0
    %v1073 = vadd.f32 %v1004, %v1072
    %v1074 = vpop.f32.mrf.mxu0
    %v1075 = vadd.f32 %v1006, %v1074
    %1076 = vmatmul.bf16.gmra.mxu0 %v565
    %v1077 = vpop.f32.mrf.mxu0
    %v1078 = vadd.f32 %v1009, %v1077
    %v1079 = vpop.f32.mrf.mxu0
    %v1080 = vadd.f32 %v1011, %v1079
    %1081 = vmatmul.bf16.gmra.mxu0 %v567
    %v1082 = vpop.f32.mrf.mxu0
    %v1083 = vadd.f32 %v1014, %v1082
    %v1084 = vpop.f32.mrf.mxu0
    %v1085 = vadd.f32 %v1016, %v1084
    %1086 = vmatmul.bf16.gmra.mxu0 %v569
    %v1087 = vpop.f32.mrf.mxu0
    %v1088 = vadd.f32 %v1019, %v1087
    %v1089 = vpop.f32.mrf.mxu0
    %v1090 = vadd.f32 %v1021, %v1089
    %1091 = vmatmul.bf16.gmra.mxu0 %v571
    %v1092 = vpop.f32.mrf.mxu0
    %v1093 = vadd.f32 %v1024, %v1092
    %v1094 = vpop.f32.mrf.mxu0
    %v1095 = vadd.f32 %v1026, %v1094
    %1096 = vmatmul.bf16.gmra.mxu0 %v573
    %v1097 = vpop.f32.mrf.mxu0
    %v1098 = vadd.f32 %v1029, %v1097
    %v1099 = vpop.f32.mrf.mxu0
    %v1100 = vadd.f32 %v1031, %v1099
    %1101 = vmatmul.bf16.gmra.mxu0 %v575
    %v1102 = vpop.f32.mrf.mxu0
    %v1103 = vadd.f32 %v1034, %v1102
    %v1104 = vpop.f32.mrf.mxu0
    %v1105 = vadd.f32 %v1036, %v1104
    %1106 = vmatmul.bf16.gmra.mxu0 %v577
    %v1107 = vpop.f32.mrf.mxu0
    %v1108 = vadd.f32 %v1039, %v1107
    %v1109 = vpop.f32.mrf.mxu0
    %v1110 = vadd.f32 %v1041, %v1109
    %1111 = vdwg.mxu0
    %1112 = vmatpush.bf16.msra.mxu0 %v949
    %1113 = vmatpush.bf16.msra.mxu0 %v947
    %1114 = vmatpush.bf16.msra.mxu0 %v945
    %1115 = vmatpush.bf16.msra.mxu0 %v943
    %1116 = vmatpush.bf16.msra.mxu0 %v941
    %1117 = vmatpush.bf16.msra.mxu0 %v939
    %1118 = vmatpush.bf16.msra.mxu0 %v937
    %1119 = vmatpush.bf16.msra.mxu0 %v935
    %1120 = vmatmul.bf16.gmra.mxu0 %v413
    %v1121 = vpop.f32.mrf.mxu0
    %v1122 = vadd.f32 0.0, %v1121
    %v1123 = vpop.f32.mrf.mxu0
    %v1124 = vadd.f32 0.0, %v1123
    %1125 = vmatmul.bf16.gmra.mxu0 %v416
    %v1126 = vpop.f32.mrf.mxu0
    %v1127 = vadd.f32 0.0, %v1126
    %v1128 = vpop.f32.mrf.mxu0
    %v1129 = vadd.f32 0.0, %v1128
    %1130 = vmatmul.bf16.gmra.mxu0 %v419
    %v1131 = vpop.f32.mrf.mxu0
    %v1132 = vadd.f32 0.0, %v1131
    %v1133 = vpop.f32.mrf.mxu0
    %v1134 = vadd.f32 0.0, %v1133
    %1135 = vmatmul.bf16.gmra.mxu0 %v422
    %v1136 = vpop.f32.mrf.mxu0
    %v1137 = vadd.f32 0.0, %v1136
    %v1138 = vpop.f32.mrf.mxu0
    %v1139 = vadd.f32 0.0, %v1138
    %1140 = vmatmul.bf16.gmra.mxu0 %v425
    %v1141 = vpop.f32.mrf.mxu0
    %v1142 = vadd.f32 0.0, %v1141
    %v1143 = vpop.f32.mrf.mxu0
    %v1144 = vadd.f32 0.0, %v1143
    %1145 = vmatmul.bf16.gmra.mxu0 %v428
    %v1146 = vpop.f32.mrf.mxu0
    %v1147 = vadd.f32 0.0, %v1146
    %v1148 = vpop.f32.mrf.mxu0
    %v1149 = vadd.f32 0.0, %v1148
    %1150 = vmatmul.bf16.gmra.mxu0 %v431
    %v1151 = vpop.f32.mrf.mxu0
    %v1152 = vadd.f32 0.0, %v1151
    %v1153 = vpop.f32.mrf.mxu0
    %v1154 = vadd.f32 0.0, %v1153
    %1155 = vmatmul.bf16.gmra.mxu0 %v434
    %v1156 = vpop.f32.mrf.mxu0
    %v1157 = vadd.f32 0.0, %v1156
    %v1158 = vpop.f32.mrf.mxu0
    %v1159 = vadd.f32 0.0, %v1158
    %1160 = vmatmul.bf16.gmra.mxu0 %v437
    %v1161 = vpop.f32.mrf.mxu0
    %v1162 = vadd.f32 0.0, %v1161
    %v1163 = vpop.f32.mrf.mxu0
    %v1164 = vadd.f32 0.0, %v1163
    %1165 = vmatmul.bf16.gmra.mxu0 %v440
    %v1166 = vpop.f32.mrf.mxu0
    %v1167 = vadd.f32 0.0, %v1166
    %v1168 = vpop.f32.mrf.mxu0
    %v1169 = vadd.f32 0.0, %v1168
    %1170 = vmatmul.bf16.gmra.mxu0 %v443
    %v1171 = vpop.f32.mrf.mxu0
    %v1172 = vadd.f32 0.0, %v1171
    %v1173 = vpop.f32.mrf.mxu0
    %v1174 = vadd.f32 0.0, %v1173
    %1175 = vmatmul.bf16.gmra.mxu0 %v446
    %v1176 = vpop.f32.mrf.mxu0
    %v1177 = vadd.f32 0.0, %v1176
    %v1178 = vpop.f32.mrf.mxu0
    %v1179 = vadd.f32 0.0, %v1178
    %1180 = vdwg.mxu0
    %1181 = vmatpush.bf16.msra.mxu0 0
    %1182 = vmatpush.bf16.msra.mxu0 0
    %1183 = vmatpush.bf16.msra.mxu0 0
    %1184 = vmatpush.bf16.msra.mxu0 0
    %1185 = vmatpush.bf16.msra.mxu0 0
    %1186 = vmatpush.bf16.msra.mxu0 0
    %1187 = vmatpush.bf16.msra.mxu0 0
    %1188 = vmatpush.bf16.msra.mxu0 %v972
    %1189 = vmatmul.bf16.gmra.mxu0 %v555
    %v1190 = vpop.f32.mrf.mxu0
    %v1191 = vadd.f32 %v1122, %v1190
    %v1192 = vpop.f32.mrf.mxu0
    %v1193 = vadd.f32 %v1124, %v1192
    %1194 = vmatmul.bf16.gmra.mxu0 %v557
    %v1195 = vpop.f32.mrf.mxu0
    %v1196 = vadd.f32 %v1127, %v1195
    %v1197 = vpop.f32.mrf.mxu0
    %v1198 = vadd.f32 %v1129, %v1197
    %1199 = vmatmul.bf16.gmra.mxu0 %v559
    %v1200 = vpop.f32.mrf.mxu0
    %v1201 = vadd.f32 %v1132, %v1200
    %v1202 = vpop.f32.mrf.mxu0
    %v1203 = vadd.f32 %v1134, %v1202
    %1204 = vmatmul.bf16.gmra.mxu0 %v561
    %v1205 = vpop.f32.mrf.mxu0
    %v1206 = vadd.f32 %v1137, %v1205
    %v1207 = vpop.f32.mrf.mxu0
    %v1208 = vadd.f32 %v1139, %v1207
    %1209 = vmatmul.bf16.gmra.mxu0 %v563
    %v1210 = vpop.f32.mrf.mxu0
    %v1211 = vadd.f32 %v1142, %v1210
    %v1212 = vpop.f32.mrf.mxu0
    %v1213 = vadd.f32 %v1144, %v1212
    %1214 = vmatmul.bf16.gmra.mxu0 %v565
    %v1215 = vpop.f32.mrf.mxu0
    %v1216 = vadd.f32 %v1147, %v1215
    %v1217 = vpop.f32.mrf.mxu0
    %v1218 = vadd.f32 %v1149, %v1217
    %1219 = vmatmul.bf16.gmra.mxu0 %v567
    %v1220 = vpop.f32.mrf.mxu0
    %v1221 = vadd.f32 %v1152, %v1220
    %v1222 = vpop.f32.mrf.mxu0
    %v1223 = vadd.f32 %v1154, %v1222
    %1224 = vmatmul.bf16.gmra.mxu0 %v569
    %v1225 = vpop.f32.mrf.mxu0
    %v1226 = vadd.f32 %v1157, %v1225
    %v1227 = vpop.f32.mrf.mxu0
    %v1228 = vadd.f32 %v1159, %v1227
    %1229 = vmatmul.bf16.gmra.mxu0 %v571
    %v1230 = vpop.f32.mrf.mxu0
    %v1231 = vadd.f32 %v1162, %v1230
    %v1232 = vpop.f32.mrf.mxu0
    %v1233 = vadd.f32 %v1164, %v1232
    %1234 = vmatmul.bf16.gmra.mxu0 %v573
    %v1235 = vpop.f32.mrf.mxu0
    %v1236 = vadd.f32 %v1167, %v1235
    %v1237 = vpop.f32.mrf.mxu0
    %v1238 = vadd.f32 %v1169, %v1237
    %1239 = vmatmul.bf16.gmra.mxu0 %v575
    %v1240 = vpop.f32.mrf.mxu0
    %v1241 = vadd.f32 %v1172, %v1240
    %v1242 = vpop.f32.mrf.mxu0
    %v1243 = vadd.f32 %v1174, %v1242
    %1244 = vmatmul.bf16.gmra.mxu0 %v577
    %v1245 = vpop.f32.mrf.mxu0
    %v1246 = vadd.f32 %v1177, %v1245
    %v1247 = vpop.f32.mrf.mxu0
    %v1248 = vadd.f32 %v1179, %v1247
    %1249 = vdwg.mxu0
    %v1250 = vmax.f32 %v665, %v1053
    %v1251 = vmax.f32 %v803, %v1191
    %v1252 = vmax.f32 %v667, %v1055
    %v1253 = vmax.f32 %v805, %v1193
    %v1254 = vmax.f32 %v670, %v1058
    %v1255 = vmax.f32 %v808, %v1196
    %v1256 = vmax.f32 %v672, %v1060
    %v1257 = vmax.f32 %v810, %v1198
    %v1258 = vmax.f32 %v675, %v1063
    %v1259 = vmax.f32 %v813, %v1201
    %v1260 = vmax.f32 %v677, %v1065
    %v1261 = vmax.f32 %v815, %v1203
    %v1262 = vmax.f32 %v680, %v1068
    %v1263 = vmax.f32 %v818, %v1206
    %v1264 = vmax.f32 %v682, %v1070
    %v1265 = vmax.f32 %v820, %v1208
    %v1266 = vmax.f32 %v685, %v1073
    %v1267 = vmax.f32 %v823, %v1211
    %v1268 = vmax.f32 %v687, %v1075
    %v1269 = vmax.f32 %v825, %v1213
    %v1270 = vmax.f32 %v690, %v1078
    %v1271 = vmax.f32 %v828, %v1216
    %v1272 = vmax.f32 %v692, %v1080
    %v1273 = vmax.f32 %v830, %v1218
    %v1274 = vmax.f32 %v695, %v1083
    %v1275 = vmax.f32 %v833, %v1221
    %v1276 = vmax.f32 %v697, %v1085
    %v1277 = vmax.f32 %v835, %v1223
    %v1278 = vmax.f32 %v700, %v1088
    %v1279 = vmax.f32 %v838, %v1226
    %v1280 = vmax.f32 %v702, %v1090
    %v1281 = vmax.f32 %v840, %v1228
    %v1282 = vmax.f32 %v705, %v1093
    %v1283 = vmax.f32 %v843, %v1231
    %v1284 = vmax.f32 %v707, %v1095
    %v1285 = vmax.f32 %v845, %v1233
    %v1286 = vmax.f32 %v710, %v1098
    %v1287 = vmax.f32 %v848, %v1236
    %v1288 = vmax.f32 %v712, %v1100
    %v1289 = vmax.f32 %v850, %v1238
    %v1290 = vmax.f32 %v715, %v1103
    %v1291 = vmax.f32 %v853, %v1241
    %v1292 = vmax.f32 %v717, %v1105
    %v1293 = vmax.f32 %v855, %v1243
    %v1294 = vmax.f32 %v720, %v1108
    %v1295 = vmax.f32 %v858, %v1246
    %v1296 = vmax.f32 %v722, %v1110
    %v1297 = vmax.f32 %v860, %v1248
    %v1298 = vmax.f32 %v1250, %v1252
    %v1299 = vmax.f32 %v1251, %v1253
    %v1300 = vmax.f32 %v1254, %v1256
    %v1301 = vmax.f32 %v1255, %v1257
    %v1302 = vmax.f32 %v1258, %v1260
    %v1303 = vmax.f32 %v1259, %v1261
    %v1304 = vmax.f32 %v1262, %v1264
    %v1305 = vmax.f32 %v1263, %v1265
    %v1306 = vmax.f32 %v1266, %v1268
    %v1307 = vmax.f32 %v1267, %v1269
    %v1308 = vmax.f32 %v1270, %v1272
    %v1309 = vmax.f32 %v1271, %v1273
    %v1310 = vmax.f32 %v1274, %v1276
    %v1311 = vmax.f32 %v1275, %v1277
    %v1312 = vmax.f32 %v1278, %v1280
    %v1313 = vmax.f32 %v1279, %v1281
    %v1314 = vmax.f32 %v1282, %v1284
    %v1315 = vmax.f32 %v1283, %v1285
    %v1316 = vmax.f32 %v1286, %v1288
    %v1317 = vmax.f32 %v1287, %v1289
    %v1318 = vmax.f32 %v1290, %v1292
    %v1319 = vmax.f32 %v1291, %v1293
    %v1320 = vmax.f32 %v1294, %v1296
    %v1321 = vmax.f32 %v1295, %v1297
    %v1322 = vld [vmem:[%s3] sm:$0x3]
    %v1324 = vperm.slane %v1322, 0
    %v1325 = vperm.slane %v1322, 1
    %v1328 = vadd.f32 %v1298, %v1324
    %v1329 = vadd.f32 %v1299, %v1325
    %v1330 = vadd.f32 %v1300, %v1324
    %v1331 = vadd.f32 %v1301, %v1325
    %v1332 = vadd.f32 %v1302, %v1324
    %v1333 = vadd.f32 %v1303, %v1325
    %v1334 = vadd.f32 %v1304, %v1324
    %v1335 = vadd.f32 %v1305, %v1325
    %v1336 = vadd.f32 %v1306, %v1324
    %v1337 = vadd.f32 %v1307, %v1325
    %v1338 = vadd.f32 %v1308, %v1324
    %v1339 = vadd.f32 %v1309, %v1325
    %v1340 = vadd.f32 %v1310, %v1324
    %v1341 = vadd.f32 %v1311, %v1325
    %v1342 = vadd.f32 %v1312, %v1324
    %v1343 = vadd.f32 %v1313, %v1325
    %v1344 = vadd.f32 %v1314, %v1324
    %v1345 = vadd.f32 %v1315, %v1325
    %v1346 = vadd.f32 %v1316, %v1324
    %v1347 = vadd.f32 %v1317, %v1325
    %v1348 = vadd.f32 %v1318, %v1324
    %v1349 = vadd.f32 %v1319, %v1325
    %v1350 = vadd.f32 %v1320, %v1324
    %v1351 = vadd.f32 %v1321, %v1325
    %v1352 = vmax.f32 %v1328, 0.0
    %v1353 = vmax.f32 %v1329, 0.0
    %v1354 = vmax.f32 %v1330, 0.0
    %v1355 = vmax.f32 %v1331, 0.0
    %v1356 = vmax.f32 %v1332, 0.0
    %v1357 = vmax.f32 %v1333, 0.0
    %v1358 = vmax.f32 %v1334, 0.0
    %v1359 = vmax.f32 %v1335, 0.0
    %v1360 = vmax.f32 %v1336, 0.0
    %v1361 = vmax.f32 %v1337, 0.0
    %v1362 = vmax.f32 %v1338, 0.0
    %v1363 = vmax.f32 %v1339, 0.0
    %v1364 = vmax.f32 %v1340, 0.0
    %v1365 = vmax.f32 %v1341, 0.0
    %v1366 = vmax.f32 %v1342, 0.0
    %v1367 = vmax.f32 %v1343, 0.0
    %v1368 = vmax.f32 %v1344, 0.0
    %v1369 = vmax.f32 %v1345, 0.0
    %v1370 = vmax.f32 %v1346, 0.0
    %v1371 = vmax.f32 %v1347, 0.0
    %v1372 = vmax.f32 %v1348, 0.0
    %v1373 = vmax.f32 %v1349, 0.0
    %v1374 = vmax.f32 %v1350, 0.0
    %v1375 = vmax.f32 %v1351, 0.0
    %v1376 = vmin.f32 %v1352, 6.0
    %v1377 = vmin.f32 %v1353, 6.0
    %v1378 = vmin.f32 %v1354, 6.0
    %v1379 = vmin.f32 %v1355, 6.0
    %v1380 = vmin.f32 %v1356, 6.0
    %v1381 = vmin.f32 %v1357, 6.0
    %v1382 = vmin.f32 %v1358, 6.0
    %v1383 = vmin.f32 %v1359, 6.0
    %v1384 = vmin.f32 %v1360, 6.0
    %v1385 = vmin.f32 %v1361, 6.0
    %v1386 = vmin.f32 %v1362, 6.0
    %v1387 = vmin.f32 %v1363, 6.0
    %v1388 = vmin.f32 %v1364, 6.0
    %v1389 = vmin.f32 %v1365, 6.0
    %v1390 = vmin.f32 %v1366, 6.0
    %v1391 = vmin.f32 %v1367, 6.0
    %v1392 = vmin.f32 %v1368, 6.0
    %v1393 = vmin.f32 %v1369, 6.0
    %v1394 = vmin.f32 %v1370, 6.0
    %v1395 = vmin.f32 %v1371, 6.0
    %v1396 = vmin.f32 %v1372, 6.0
    %v1397 = vmin.f32 %v1373, 6.0
    %v1398 = vmin.f32 %v1374, 6.0
    %v1399 = vmin.f32 %v1375, 6.0
    %v1400 = vpack.c.bf16 %v1377, %v1376
    %v1401 = vpack.c.bf16 %v1379, %v1378
    %v1402 = vpack.c.bf16 %v1381, %v1380
    %v1403 = vpack.c.bf16 %v1383, %v1382
    %v1404 = vpack.c.bf16 %v1385, %v1384
    %v1405 = vpack.c.bf16 %v1387, %v1386
    %v1406 = vpack.c.bf16 %v1389, %v1388
    %v1407 = vpack.c.bf16 %v1391, %v1390
    %v1408 = vpack.c.bf16 %v1393, %v1392
    %v1409 = vpack.c.bf16 %v1395, %v1394
    %v1410 = vpack.c.bf16 %v1397, %v1396
    %v1411 = vpack.c.bf16 %v1399, %v1398
    %v1412 = vld [vmem:[#allocation4] sm:$0xff]
    %v1413 = vld [vmem:[#allocation4 + $0x8] sm:$0xff]
    %v1414 = vld [vmem:[#allocation4 + $0x10] sm:$0xff]
    %v1415 = vld [vmem:[#allocation4 + $0x18] sm:$0xff]
    %v1416 = vld [vmem:[#allocation4 + $0x20] sm:$0xff]
    %v1417 = vld [vmem:[#allocation4 + $0x28] sm:$0xff]
    %v1418 = vld [vmem:[#allocation4 + $0x30] sm:$0xff]
    %v1419 = vld [vmem:[#allocation4 + $0x38] sm:$0xff]
    %v1420 = vld [vmem:[#allocation4 + $0x40] sm:$0xff]
    %v1421 = vld [vmem:[#allocation4 + $0x48] sm:$0xff]
    %v1422 = vld [vmem:[#allocation4 + $0x50] sm:$0xff]
    %v1423 = vld [vmem:[#allocation4 + $0x58] sm:$0xff]
    %v1424 = vld [vmem:[#allocation4 + $0x60] sm:$0xff]
    %v1425 = vld [vmem:[#allocation4 + $0x68] sm:$0xff]
    %v1426 = vld [vmem:[#allocation4 + $0x70] sm:$0xff]
    %v1427 = vld [vmem:[#allocation4 + $0x78] sm:$0xff]
    %v1428 = vld [vmem:[#allocation4 + $0x80] sm:$0xff]
    %v1429 = vld [vmem:[#allocation4 + $0x88] sm:$0xff]
    %v1430 = vld [vmem:[#allocation4 + $0x90] sm:$0xff]
    %v1431 = vld [vmem:[#allocation4 + $0x98] sm:$0xff]
    %v1432 = vld [vmem:[#allocation4 + $0xa0] sm:$0xff]
    %v1433 = vld [vmem:[#allocation4 + $0xa8] sm:$0xff]
    %v1434 = vld [vmem:[#allocation4 + $0xb0] sm:$0xff]
    %v1435 = vld [vmem:[#allocation4 + $0xb8] sm:$0xff]
    %v1436 = vld [vmem:[#allocation4 + $0xc0] sm:$0xff]
    %v1437 = vld [vmem:[#allocation4 + $0xc8] sm:$0xff]
    %v1438 = vld [vmem:[#allocation4 + $0xd0] sm:$0xff]
    %v1439 = vld [vmem:[#allocation4 + $0xd8] sm:$0xff]
    %v1440 = vld [vmem:[#allocation4 + $0xe0] sm:$0xff]
    %v1441 = vld [vmem:[#allocation4 + $0xe8] sm:$0xff]
    %v1442 = vld [vmem:[#allocation6] sm:$0xff]
    %v1443 = vld [vmem:[#allocation6 + $0x8] sm:$0xff]
    %v1444 = vld [vmem:[#allocation6 + $0x10] sm:$0xff]
    %v1445 = vld [vmem:[#allocation6 + $0x18] sm:$0xff]
    %v1446 = vld [vmem:[#allocation6 + $0x20] sm:$0xff]
    %v1447 = vld [vmem:[#allocation6 + $0x28] sm:$0xff]
    %v1448 = vld [vmem:[#allocation6 + $0x30] sm:$0xff]
    %v1449 = vld [vmem:[#allocation6 + $0x38] sm:$0xff]
    %v1450 = vld [vmem:[#allocation6 + $0x40] sm:$0xff]
    %v1451 = vld [vmem:[#allocation6 + $0x48] sm:$0xff]
    %v1452 = vld [vmem:[#allocation6 + $0x50] sm:$0xff]
    %v1453 = vld [vmem:[#allocation6 + $0x58] sm:$0xff]
    %v1454 = vld [vmem:[#allocation6 + $0x60] sm:$0xff]
    %v1455 = vld [vmem:[#allocation6 + $0x68] sm:$0xff]
    %v1456 = vld [vmem:[#allocation6 + $0x70] sm:$0xff]
    %v1457 = vld [vmem:[#allocation6 + $0x78] sm:$0xff]
    %v1458 = vld [vmem:[#allocation6 + $0x80] sm:$0xff]
    %v1459 = vld [vmem:[#allocation6 + $0x88] sm:$0xff]
    %v1460 = vld [vmem:[#allocation6 + $0x90] sm:$0xff]
    %v1461 = vld [vmem:[#allocation6 + $0x98] sm:$0xff]
    %v1462 = vld [vmem:[#allocation6 + $0xa0] sm:$0xff]
    %v1463 = vld [vmem:[#allocation6 + $0xa8] sm:$0xff]
    %v1464 = vld [vmem:[#allocation6 + $0xb0] sm:$0xff]
    %v1465 = vld [vmem:[#allocation6 + $0xb8] sm:$0xff]
    %v1466 = vld [vmem:[#allocation6 + $0xc0] sm:$0xff]
    %v1467 = vld [vmem:[#allocation6 + $0xc8] sm:$0xff]
    %v1468 = vld [vmem:[#allocation6 + $0xd0] sm:$0xff]
    %v1469 = vld [vmem:[#allocation6 + $0xd8] sm:$0xff]
    %v1470 = vld [vmem:[#allocation6 + $0xe0] sm:$0xff]
    %v1471 = vld [vmem:[#allocation6 + $0xe8] sm:$0xff]
    %s1472 = scalar_lea.vmem [#allocation4], 240
    %v1473 = vld [vmem:[%s1472] sm:$0xff]
    %v1474 = vld [vmem:[%s1472 + $0x8] sm:$0xff]
    %v1475 = vld [vmem:[%s1472 + $0x10] sm:$0xff]
    %v1476 = vld [vmem:[%s1472 + $0x18] sm:$0xff]
    %v1477 = vld [vmem:[%s1472 + $0x20] sm:$0xff]
    %v1478 = vld [vmem:[%s1472 + $0x28] sm:$0xff]
    %v1479 = vld [vmem:[%s1472 + $0x30] sm:$0xff]
    %v1480 = vld [vmem:[%s1472 + $0x38] sm:$0xff]
    %v1481 = vld [vmem:[%s1472 + $0x40] sm:$0xff]
    %v1482 = vld [vmem:[%s1472 + $0x48] sm:$0xff]
    %v1483 = vld [vmem:[%s1472 + $0x50] sm:$0xff]
    %v1484 = vld [vmem:[%s1472 + $0x58] sm:$0xff]
    %v1485 = vld [vmem:[%s1472 + $0x60] sm:$0xff]
    %v1486 = vld [vmem:[%s1472 + $0x68] sm:$0xff]
    %v1487 = vld [vmem:[%s1472 + $0x70] sm:$0xff]
    %v1488 = vld [vmem:[%s1472 + $0x78] sm:$0xff]
    %v1489 = vld [vmem:[%s1472 + $0x80] sm:$0xff]
    %v1490 = vld [vmem:[%s1472 + $0x88] sm:$0xff]
    %v1491 = vld [vmem:[%s1472 + $0x90] sm:$0xff]
    %v1492 = vld [vmem:[%s1472 + $0x98] sm:$0xff]
    %v1493 = vld [vmem:[%s1472 + $0xa0] sm:$0xff]
    %v1494 = vld [vmem:[%s1472 + $0xa8] sm:$0xff]
    %v1495 = vld [vmem:[%s1472 + $0xb0] sm:$0xff]
    %v1496 = vld [vmem:[%s1472 + $0xb8] sm:$0xff]
    %v1497 = vld [vmem:[%s1472 + $0xc0] sm:$0xff]
    %v1498 = vld [vmem:[%s1472 + $0xc8] sm:$0xff]
    %v1499 = vld [vmem:[%s1472 + $0xd0] sm:$0xff]
    %v1500 = vld [vmem:[%s1472 + $0xd8] sm:$0xff]
    %v1501 = vld [vmem:[%s1472 + $0xe0] sm:$0xff]
    %v1502 = vld [vmem:[%s1472 + $0xe8] sm:$0xff]
    %v1511 = vunpack.c.l.b16 %v1401
    %v1512 = vunpack.c.h.b16 %v1401
    %v1513 = vunpack.c.l.b16 %v1402
    %v1514 = vunpack.c.h.b16 %v1402
    %v1515 = vunpack.c.l.b16 %v1403
    %v1516 = vunpack.c.h.b16 %v1403
    %v1517 = vunpack.c.l.b16 %v1404
    %v1518 = vunpack.c.h.b16 %v1404
    %v1519 = vunpack.c.l.b16 %v1405
    %v1520 = vunpack.c.h.b16 %v1405
    %v1521 = vunpack.c.l.b16 %v1406
    %v1522 = vunpack.c.h.b16 %v1406
    %v1523 = vunpack.c.l.b16 %v1407
    %v1524 = vunpack.c.h.b16 %v1407
    %v1525 = vunpack.c.l.b16 %v1408
    %v1526 = vunpack.c.h.b16 %v1408
    %v1527 = vpack.c.b16 %v1513, %v1511
    %v1528 = vpack.c.b16 %v1514, %v1512
    %v1529 = vpack.c.b16 %v1517, %v1515
    %v1530 = vpack.c.b16 %v1518, %v1516
    %v1531 = vpack.c.b16 %v1521, %v1519
    %v1532 = vpack.c.b16 %v1522, %v1520
    %v1533 = vpack.c.b16 %v1525, %v1523
    %v1534 = vpack.c.b16 %v1526, %v1524
    %v1569 = vunpack.c.l.b16 %v1473
    %v1570 = vunpack.c.h.b16 %v1473
    %v1571 = vunpack.c.l.b16 %v1474
    %v1572 = vunpack.c.h.b16 %v1474
    %v1573 = vunpack.c.l.b16 %v1475
    %v1574 = vunpack.c.h.b16 %v1475
    %v1575 = vunpack.c.l.b16 %v1476
    %v1576 = vunpack.c.h.b16 %v1476
    %v1577 = vunpack.c.l.b16 %v1477
    %v1578 = vunpack.c.h.b16 %v1477
    %v1579 = vunpack.c.l.b16 %v1478
    %v1580 = vunpack.c.h.b16 %v1478
    %v1581 = vunpack.c.l.b16 %v1479
    %v1582 = vunpack.c.h.b16 %v1479
    %v1583 = vunpack.c.l.b16 %v1480
    %v1584 = vunpack.c.h.b16 %v1480
    %v1585 = vunpack.c.l.b16 %v1481
    %v1586 = vunpack.c.h.b16 %v1481
    %v1587 = vunpack.c.l.b16 %v1482
    %v1588 = vunpack.c.h.b16 %v1482
    %v1589 = vunpack.c.l.b16 %v1483
    %v1590 = vunpack.c.h.b16 %v1483
    %v1591 = vunpack.c.l.b16 %v1484
    %v1592 = vunpack.c.h.b16 %v1484
    %v1593 = vunpack.c.l.b16 %v1485
    %v1594 = vunpack.c.h.b16 %v1485
    %v1595 = vunpack.c.l.b16 %v1486
    %v1596 = vunpack.c.h.b16 %v1486
    %v1597 = vunpack.c.l.b16 %v1487
    %v1598 = vunpack.c.h.b16 %v1487
    %v1599 = vunpack.c.l.b16 %v1488
    %v1600 = vunpack.c.h.b16 %v1488
    %v1601 = vunpack.c.l.b16 %v1489
    %v1602 = vunpack.c.h.b16 %v1489
    %v1603 = vunpack.c.l.b16 %v1490
    %v1604 = vunpack.c.h.b16 %v1490
    %v1605 = vunpack.c.l.b16 %v1491
    %v1606 = vunpack.c.h.b16 %v1491
    %v1607 = vunpack.c.l.b16 %v1492
    %v1608 = vunpack.c.h.b16 %v1492
    %v1609 = vunpack.c.l.b16 %v1493
    %v1610 = vunpack.c.h.b16 %v1493
    %v1611 = vunpack.c.l.b16 %v1494
    %v1612 = vunpack.c.h.b16 %v1494
    %v1613 = vunpack.c.l.b16 %v1495
    %v1614 = vunpack.c.h.b16 %v1495
    %v1615 = vunpack.c.l.b16 %v1496
    %v1616 = vunpack.c.h.b16 %v1496
    %v1617 = vunpack.c.l.b16 %v1497
    %v1618 = vunpack.c.h.b16 %v1497
    %v1619 = vunpack.c.l.b16 %v1498
    %v1620 = vunpack.c.h.b16 %v1498
    %v1621 = vunpack.c.l.b16 %v1499
    %v1622 = vunpack.c.h.b16 %v1499
    %v1623 = vunpack.c.l.b16 %v1500
    %v1624 = vunpack.c.h.b16 %v1500
    %v1625 = vunpack.c.l.b16 %v1501
    %v1626 = vunpack.c.h.b16 %v1501
    %v1627 = vunpack.c.l.b16 %v1502
    %v1628 = vunpack.c.h.b16 %v1502
    %v1629 = vpack.c.b16 %v1571, %v1569
    %v1630 = vpack.c.b16 %v1572, %v1570
    %v1631 = vpack.c.b16 %v1575, %v1573
    %v1632 = vpack.c.b16 %v1576, %v1574
    %v1633 = vpack.c.b16 %v1579, %v1577
    %v1634 = vpack.c.b16 %v1580, %v1578
    %v1635 = vpack.c.b16 %v1583, %v1581
    %v1636 = vpack.c.b16 %v1584, %v1582
    %v1637 = vpack.c.b16 %v1587, %v1585
    %v1638 = vpack.c.b16 %v1588, %v1586
    %v1639 = vpack.c.b16 %v1591, %v1589
    %v1640 = vpack.c.b16 %v1592, %v1590
    %v1641 = vpack.c.b16 %v1595, %v1593
    %v1642 = vpack.c.b16 %v1596, %v1594
    %v1643 = vpack.c.b16 %v1599, %v1597
    %v1644 = vpack.c.b16 %v1600, %v1598
    %v1645 = vpack.c.b16 %v1603, %v1601
    %v1646 = vpack.c.b16 %v1604, %v1602
    %v1647 = vpack.c.b16 %v1607, %v1605
    %v1648 = vpack.c.b16 %v1608, %v1606
    %v1649 = vpack.c.b16 %v1611, %v1609
    %v1650 = vpack.c.b16 %v1612, %v1610
    %v1651 = vpack.c.b16 %v1615, %v1613
    %v1652 = vpack.c.b16 %v1616, %v1614
    %v1653 = vpack.c.b16 %v1619, %v1617
    %v1654 = vpack.c.b16 %v1620, %v1618
    %v1655 = vpack.c.b16 %v1623, %v1621
    %v1656 = vpack.c.b16 %v1624, %v1622
    %v1657 = vpack.c.b16 %v1627, %v1625
    %v1658 = vpack.c.b16 %v1628, %v1626
    %v1690 = vsel %vm411, %v1528, 0
    %v1693 = vsel %vm411, %v1530, 0
    %v1696 = vsel %vm411, %v1532, 0
    %v1699 = vsel %vm411, %v1534, 0
    %1701 = vmatpush.bf16.msra.mxu0 %v1643
    %1702 = vmatpush.bf16.msra.mxu0 %v1641
    %1703 = vmatpush.bf16.msra.mxu0 %v1639
    %1704 = vmatpush.bf16.msra.mxu0 %v1637
    %1705 = vmatpush.bf16.msra.mxu0 %v1635
    %1706 = vmatpush.bf16.msra.mxu0 %v1633
    %1707 = vmatpush.bf16.msra.mxu0 %v1631
    %1708 = vmatpush.bf16.msra.mxu0 %v1629
    %1709 = vmatmul.bf16.gmra.mxu0 %v1527
    %v1710 = vpop.f32.mrf.mxu0
    %v1711 = vadd.f32 0.0, %v1710
    %v1712 = vpop.f32.mrf.mxu0
    %v1713 = vadd.f32 0.0, %v1712
    %1714 = vmatmul.bf16.gmra.mxu0 %v1529
    %v1715 = vpop.f32.mrf.mxu0
    %v1716 = vadd.f32 0.0, %v1715
    %v1717 = vpop.f32.mrf.mxu0
    %v1718 = vadd.f32 0.0, %v1717
    %1719 = vmatmul.bf16.gmra.mxu0 %v1531
    %v1720 = vpop.f32.mrf.mxu0
    %v1721 = vadd.f32 0.0, %v1720
    %v1722 = vpop.f32.mrf.mxu0
    %v1723 = vadd.f32 0.0, %v1722
    %1724 = vmatmul.bf16.gmra.mxu0 %v1533
    %v1725 = vpop.f32.mrf.mxu0
    %v1726 = vadd.f32 0.0, %v1725
    %v1727 = vpop.f32.mrf.mxu0
    %v1728 = vadd.f32 0.0, %v1727
    %1729 = vdwg.mxu0
    %1730 = vmatpush.bf16.msra.mxu0 0
    %1731 = vmatpush.bf16.msra.mxu0 %v1657
    %1732 = vmatpush.bf16.msra.mxu0 %v1655
    %1733 = vmatpush.bf16.msra.mxu0 %v1653
    %1734 = vmatpush.bf16.msra.mxu0 %v1651
    %1735 = vmatpush.bf16.msra.mxu0 %v1649
    %1736 = vmatpush.bf16.msra.mxu0 %v1647
    %1737 = vmatpush.bf16.msra.mxu0 %v1645
    %1738 = vmatmul.bf16.gmra.mxu0 %v1690
    %v1739 = vpop.f32.mrf.mxu0
    %v1740 = vadd.f32 %v1711, %v1739
    %v1741 = vpop.f32.mrf.mxu0
    %v1742 = vadd.f32 %v1713, %v1741
    %1743 = vmatmul.bf16.gmra.mxu0 %v1693
    %v1744 = vpop.f32.mrf.mxu0
    %v1745 = vadd.f32 %v1716, %v1744
    %v1746 = vpop.f32.mrf.mxu0
    %v1747 = vadd.f32 %v1718, %v1746
    %1748 = vmatmul.bf16.gmra.mxu0 %v1696
    %v1749 = vpop.f32.mrf.mxu0
    %v1750 = vadd.f32 %v1721, %v1749
    %v1751 = vpop.f32.mrf.mxu0
    %v1752 = vadd.f32 %v1723, %v1751
    %1753 = vmatmul.bf16.gmra.mxu0 %v1699
    %v1754 = vpop.f32.mrf.mxu0
    %v1755 = vadd.f32 %v1726, %v1754
    %v1756 = vpop.f32.mrf.mxu0
    %v1757 = vadd.f32 %v1728, %v1756
    %1758 = vdwg.mxu0
    %1759 = vmatpush.bf16.msra.mxu0 %v1644
    %1760 = vmatpush.bf16.msra.mxu0 %v1642
    %1761 = vmatpush.bf16.msra.mxu0 %v1640
    %1762 = vmatpush.bf16.msra.mxu0 %v1638
    %1763 = vmatpush.bf16.msra.mxu0 %v1636
    %1764 = vmatpush.bf16.msra.mxu0 %v1634
    %1765 = vmatpush.bf16.msra.mxu0 %v1632
    %1766 = vmatpush.bf16.msra.mxu0 %v1630
    %1767 = vmatmul.bf16.gmra.mxu0 %v1527
    %v1768 = vpop.f32.mrf.mxu0
    %v1769 = vadd.f32 0.0, %v1768
    %v1770 = vpop.f32.mrf.mxu0
    %v1771 = vadd.f32 0.0, %v1770
    %1772 = vmatmul.bf16.gmra.mxu0 %v1529
    %v1773 = vpop.f32.mrf.mxu0
    %v1774 = vadd.f32 0.0, %v1773
    %v1775 = vpop.f32.mrf.mxu0
    %v1776 = vadd.f32 0.0, %v1775
    %1777 = vmatmul.bf16.gmra.mxu0 %v1531
    %v1778 = vpop.f32.mrf.mxu0
    %v1779 = vadd.f32 0.0, %v1778
    %v1780 = vpop.f32.mrf.mxu0
    %v1781 = vadd.f32 0.0, %v1780
    %1782 = vmatmul.bf16.gmra.mxu0 %v1533
    %v1783 = vpop.f32.mrf.mxu0
    %v1784 = vadd.f32 0.0, %v1783
    %v1785 = vpop.f32.mrf.mxu0
    %v1786 = vadd.f32 0.0, %v1785
    %1787 = vdwg.mxu0
    %1788 = vmatpush.bf16.msra.mxu0 0
    %1789 = vmatpush.bf16.msra.mxu0 %v1658
    %1790 = vmatpush.bf16.msra.mxu0 %v1656
    %1791 = vmatpush.bf16.msra.mxu0 %v1654
    %1792 = vmatpush.bf16.msra.mxu0 %v1652
    %1793 = vmatpush.bf16.msra.mxu0 %v1650
    %1794 = vmatpush.bf16.msra.mxu0 %v1648
    %1795 = vmatpush.bf16.msra.mxu0 %v1646
    %1796 = vmatmul.bf16.gmra.mxu0 %v1690
    %v1797 = vpop.f32.mrf.mxu0
    %v1798 = vadd.f32 %v1769, %v1797
    %v1799 = vpop.f32.mrf.mxu0
    %v1800 = vadd.f32 %v1771, %v1799
    %1801 = vmatmul.bf16.gmra.mxu0 %v1693
    %v1802 = vpop.f32.mrf.mxu0
    %v1803 = vadd.f32 %v1774, %v1802
    %v1804 = vpop.f32.mrf.mxu0
    %v1805 = vadd.f32 %v1776, %v1804
    %1806 = vmatmul.bf16.gmra.mxu0 %v1696
    %v1807 = vpop.f32.mrf.mxu0
    %v1808 = vadd.f32 %v1779, %v1807
    %v1809 = vpop.f32.mrf.mxu0
    %v1810 = vadd.f32 %v1781, %v1809
    %1811 = vmatmul.bf16.gmra.mxu0 %v1699
    %v1812 = vpop.f32.mrf.mxu0
    %v1813 = vadd.f32 %v1784, %v1812
    %v1814 = vpop.f32.mrf.mxu0
    %v1815 = vadd.f32 %v1786, %v1814
    %1816 = vdwg.mxu0
    %s1817 = scalar_lea.vmem [#allocation6], 240
    %v1818 = vld [vmem:[%s1817] sm:$0xff]
    %v1819 = vld [vmem:[%s1817 + $0x8] sm:$0xff]
    %v1820 = vld [vmem:[%s1817 + $0x10] sm:$0xff]
    %v1821 = vld [vmem:[%s1817 + $0x18] sm:$0xff]
    %v1822 = vld [vmem:[%s1817 + $0x20] sm:$0xff]
    %v1823 = vld [vmem:[%s1817 + $0x28] sm:$0xff]
    %v1824 = vld [vmem:[%s1817 + $0x30] sm:$0xff]
    %v1825 = vld [vmem:[%s1817 + $0x38] sm:$0xff]
    %v1826 = vld [vmem:[%s1817 + $0x40] sm:$0xff]
    %v1827 = vld [vmem:[%s1817 + $0x48] sm:$0xff]
    %v1828 = vld [vmem:[%s1817 + $0x50] sm:$0xff]
    %v1829 = vld [vmem:[%s1817 + $0x58] sm:$0xff]
    %v1830 = vld [vmem:[%s1817 + $0x60] sm:$0xff]
    %v1831 = vld [vmem:[%s1817 + $0x68] sm:$0xff]
    %v1832 = vld [vmem:[%s1817 + $0x70] sm:$0xff]
    %v1833 = vld [vmem:[%s1817 + $0x78] sm:$0xff]
    %v1834 = vld [vmem:[%s1817 + $0x80] sm:$0xff]
    %v1835 = vld [vmem:[%s1817 + $0x88] sm:$0xff]
    %v1836 = vld [vmem:[%s1817 + $0x90] sm:$0xff]
    %v1837 = vld [vmem:[%s1817 + $0x98] sm:$0xff]
    %v1838 = vld [vmem:[%s1817 + $0xa0] sm:$0xff]
    %v1839 = vld [vmem:[%s1817 + $0xa8] sm:$0xff]
    %v1840 = vld [vmem:[%s1817 + $0xb0] sm:$0xff]
    %v1841 = vld [vmem:[%s1817 + $0xb8] sm:$0xff]
    %v1842 = vld [vmem:[%s1817 + $0xc0] sm:$0xff]
    %v1843 = vld [vmem:[%s1817 + $0xc8] sm:$0xff]
    %v1844 = vld [vmem:[%s1817 + $0xd0] sm:$0xff]
    %v1845 = vld [vmem:[%s1817 + $0xd8] sm:$0xff]
    %v1846 = vld [vmem:[%s1817 + $0xe0] sm:$0xff]
    %v1847 = vld [vmem:[%s1817 + $0xe8] sm:$0xff]
    %v1878 = vunpack.c.l.b16 %v1818
    %v1879 = vunpack.c.h.b16 %v1818
    %v1880 = vunpack.c.l.b16 %v1819
    %v1881 = vunpack.c.h.b16 %v1819
    %v1882 = vunpack.c.l.b16 %v1820
    %v1883 = vunpack.c.h.b16 %v1820
    %v1884 = vunpack.c.l.b16 %v1821
    %v1885 = vunpack.c.h.b16 %v1821
    %v1886 = vunpack.c.l.b16 %v1822
    %v1887 = vunpack.c.h.b16 %v1822
    %v1888 = vunpack.c.l.b16 %v1823
    %v1889 = vunpack.c.h.b16 %v1823
    %v1890 = vunpack.c.l.b16 %v1824
    %v1891 = vunpack.c.h.b16 %v1824
    %v1892 = vunpack.c.l.b16 %v1825
    %v1893 = vunpack.c.h.b16 %v1825
    %v1894 = vunpack.c.l.b16 %v1826
    %v1895 = vunpack.c.h.b16 %v1826
    %v1896 = vunpack.c.l.b16 %v1827
    %v1897 = vunpack.c.h.b16 %v1827
    %v1898 = vunpack.c.l.b16 %v1828
    %v1899 = vunpack.c.h.b16 %v1828
    %v1900 = vunpack.c.l.b16 %v1829
    %v1901 = vunpack.c.h.b16 %v1829
    %v1902 = vunpack.c.l.b16 %v1830
    %v1903 = vunpack.c.h.b16 %v1830
    %v1904 = vunpack.c.l.b16 %v1831
    %v1905 = vunpack.c.h.b16 %v1831
    %v1906 = vunpack.c.l.b16 %v1832
    %v1907 = vunpack.c.h.b16 %v1832
    %v1908 = vunpack.c.l.b16 %v1833
    %v1909 = vunpack.c.h.b16 %v1833
    %v1910 = vunpack.c.l.b16 %v1834
    %v1911 = vunpack.c.h.b16 %v1834
    %v1912 = vunpack.c.l.b16 %v1835
    %v1913 = vunpack.c.h.b16 %v1835
    %v1914 = vunpack.c.l.b16 %v1836
    %v1915 = vunpack.c.h.b16 %v1836
    %v1916 = vunpack.c.l.b16 %v1837
    %v1917 = vunpack.c.h.b16 %v1837
    %v1918 = vunpack.c.l.b16 %v1838
    %v1919 = vunpack.c.h.b16 %v1838
    %v1920 = vunpack.c.l.b16 %v1839
    %v1921 = vunpack.c.h.b16 %v1839
    %v1922 = vunpack.c.l.b16 %v1840
    %v1923 = vunpack.c.h.b16 %v1840
    %v1924 = vunpack.c.l.b16 %v1841
    %v1925 = vunpack.c.h.b16 %v1841
    %v1926 = vunpack.c.l.b16 %v1842
    %v1927 = vunpack.c.h.b16 %v1842
    %v1928 = vunpack.c.l.b16 %v1843
    %v1929 = vunpack.c.h.b16 %v1843
    %v1930 = vunpack.c.l.b16 %v1844
    %v1931 = vunpack.c.h.b16 %v1844
    %v1932 = vunpack.c.l.b16 %v1845
    %v1933 = vunpack.c.h.b16 %v1845
    %v1934 = vunpack.c.l.b16 %v1846
    %v1935 = vunpack.c.h.b16 %v1846
    %v1936 = vunpack.c.l.b16 %v1847
    %v1937 = vunpack.c.h.b16 %v1847
    %v1938 = vpack.c.b16 %v1880, %v1878
    %v1939 = vpack.c.b16 %v1881, %v1879
    %v1940 = vpack.c.b16 %v1884, %v1882
    %v1941 = vpack.c.b16 %v1885, %v1883
    %v1942 = vpack.c.b16 %v1888, %v1886
    %v1943 = vpack.c.b16 %v1889, %v1887
    %v1944 = vpack.c.b16 %v1892, %v1890
    %v1945 = vpack.c.b16 %v1893, %v1891
    %v1946 = vpack.c.b16 %v1896, %v1894
    %v1947 = vpack.c.b16 %v1897, %v1895
    %v1948 = vpack.c.b16 %v1900, %v1898
    %v1949 = vpack.c.b16 %v1901, %v1899
    %v1950 = vpack.c.b16 %v1904, %v1902
    %v1951 = vpack.c.b16 %v1905, %v1903
    %v1952 = vpack.c.b16 %v1908, %v1906
    %v1953 = vpack.c.b16 %v1909, %v1907
    %v1954 = vpack.c.b16 %v1912, %v1910
    %v1955 = vpack.c.b16 %v1913, %v1911
    %v1956 = vpack.c.b16 %v1916, %v1914
    %v1957 = vpack.c.b16 %v1917, %v1915
    %v1958 = vpack.c.b16 %v1920, %v1918
    %v1959 = vpack.c.b16 %v1921, %v1919
    %v1960 = vpack.c.b16 %v1924, %v1922
    %v1961 = vpack.c.b16 %v1925, %v1923
    %v1962 = vpack.c.b16 %v1928, %v1926
    %v1963 = vpack.c.b16 %v1929, %v1927
    %v1964 = vpack.c.b16 %v1932, %v1930
    %v1965 = vpack.c.b16 %v1933, %v1931
    %v1966 = vpack.c.b16 %v1936, %v1934
    %v1967 = vpack.c.b16 %v1937, %v1935
    %1998 = vmatpush.bf16.msra.mxu0 %v1952
    %1999 = vmatpush.bf16.msra.mxu0 %v1950
    %2000 = vmatpush.bf16.msra.mxu0 %v1948
    %2001 = vmatpush.bf16.msra.mxu0 %v1946
    %2002 = vmatpush.bf16.msra.mxu0 %v1944
    %2003 = vmatpush.bf16.msra.mxu0 %v1942
    %2004 = vmatpush.bf16.msra.mxu0 %v1940
    %2005 = vmatpush.bf16.msra.mxu0 %v1938
    %2006 = vmatmul.bf16.gmra.mxu0 %v1527
    %v2007 = vpop.f32.mrf.mxu0
    %v2008 = vadd.f32 0.0, %v2007
    %v2009 = vpop.f32.mrf.mxu0
    %v2010 = vadd.f32 0.0, %v2009
    %2011 = vmatmul.bf16.gmra.mxu0 %v1529
    %v2012 = vpop.f32.mrf.mxu0
    %v2013 = vadd.f32 0.0, %v2012
    %v2014 = vpop.f32.mrf.mxu0
    %v2015 = vadd.f32 0.0, %v2014
    %2016 = vmatmul.bf16.gmra.mxu0 %v1531
    %v2017 = vpop.f32.mrf.mxu0
    %v2018 = vadd.f32 0.0, %v2017
    %v2019 = vpop.f32.mrf.mxu0
    %v2020 = vadd.f32 0.0, %v2019
    %2021 = vmatmul.bf16.gmra.mxu0 %v1533
    %v2022 = vpop.f32.mrf.mxu0
    %v2023 = vadd.f32 0.0, %v2022
    %v2024 = vpop.f32.mrf.mxu0
    %v2025 = vadd.f32 0.0, %v2024
    %2026 = vdwg.mxu0
    %2027 = vmatpush.bf16.msra.mxu0 0
    %2028 = vmatpush.bf16.msra.mxu0 %v1966
    %2029 = vmatpush.bf16.msra.mxu0 %v1964
    %2030 = vmatpush.bf16.msra.mxu0 %v1962
    %2031 = vmatpush.bf16.msra.mxu0 %v1960
    %2032 = vmatpush.bf16.msra.mxu0 %v1958
    %2033 = vmatpush.bf16.msra.mxu0 %v1956
    %2034 = vmatpush.bf16.msra.mxu0 %v1954
    %2035 = vmatmul.bf16.gmra.mxu0 %v1690
    %v2036 = vpop.f32.mrf.mxu0
    %v2037 = vadd.f32 %v2008, %v2036
    %v2038 = vpop.f32.mrf.mxu0
    %v2039 = vadd.f32 %v2010, %v2038
    %2040 = vmatmul.bf16.gmra.mxu0 %v1693
    %v2041 = vpop.f32.mrf.mxu0
    %v2042 = vadd.f32 %v2013, %v2041
    %v2043 = vpop.f32.mrf.mxu0
    %v2044 = vadd.f32 %v2015, %v2043
    %2045 = vmatmul.bf16.gmra.mxu0 %v1696
    %v2046 = vpop.f32.mrf.mxu0
    %v2047 = vadd.f32 %v2018, %v2046
    %v2048 = vpop.f32.mrf.mxu0
    %v2049 = vadd.f32 %v2020, %v2048
    %2050 = vmatmul.bf16.gmra.mxu0 %v1699
    %v2051 = vpop.f32.mrf.mxu0
    %v2052 = vadd.f32 %v2023, %v2051
    %v2053 = vpop.f32.mrf.mxu0
    %v2054 = vadd.f32 %v2025, %v2053
    %2055 = vdwg.mxu0
    %2056 = vmatpush.bf16.msra.mxu0 %v1953
    %2057 = vmatpush.bf16.msra.mxu0 %v1951
    %2058 = vmatpush.bf16.msra.mxu0 %v1949
    %2059 = vmatpush.bf16.msra.mxu0 %v1947
    %2060 = vmatpush.bf16.msra.mxu0 %v1945
    %2061 = vmatpush.bf16.msra.mxu0 %v1943
    %2062 = vmatpush.bf16.msra.mxu0 %v1941
    %2063 = vmatpush.bf16.msra.mxu0 %v1939
    %2064 = vmatmul.bf16.gmra.mxu0 %v1527
    %v2065 = vpop.f32.mrf.mxu0
    %v2066 = vadd.f32 0.0, %v2065
    %v2067 = vpop.f32.mrf.mxu0
    %v2068 = vadd.f32 0.0, %v2067
    %2069 = vmatmul.bf16.gmra.mxu0 %v1529
    %v2070 = vpop.f32.mrf.mxu0
    %v2071 = vadd.f32 0.0, %v2070
    %v2072 = vpop.f32.mrf.mxu0
    %v2073 = vadd.f32 0.0, %v2072
    %2074 = vmatmul.bf16.gmra.mxu0 %v1531
    %v2075 = vpop.f32.mrf.mxu0
    %v2076 = vadd.f32 0.0, %v2075
    %v2077 = vpop.f32.mrf.mxu0
    %v2078 = vadd.f32 0.0, %v2077
    %2079 = vmatmul.bf16.gmra.mxu0 %v1533
    %v2080 = vpop.f32.mrf.mxu0
    %v2081 = vadd.f32 0.0, %v2080
    %v2082 = vpop.f32.mrf.mxu0
    %v2083 = vadd.f32 0.0, %v2082
    %2084 = vdwg.mxu0
    %2085 = vmatpush.bf16.msra.mxu0 0
    %2086 = vmatpush.bf16.msra.mxu0 %v1967
    %2087 = vmatpush.bf16.msra.mxu0 %v1965
    %2088 = vmatpush.bf16.msra.mxu0 %v1963
    %2089 = vmatpush.bf16.msra.mxu0 %v1961
    %2090 = vmatpush.bf16.msra.mxu0 %v1959
    %2091 = vmatpush.bf16.msra.mxu0 %v1957
    %2092 = vmatpush.bf16.msra.mxu0 %v1955
    %2093 = vmatmul.bf16.gmra.mxu0 %v1690
    %v2094 = vpop.f32.mrf.mxu0
    %v2095 = vadd.f32 %v2066, %v2094
    %v2096 = vpop.f32.mrf.mxu0
    %v2097 = vadd.f32 %v2068, %v2096
    %2098 = vmatmul.bf16.gmra.mxu0 %v1693
    %v2099 = vpop.f32.mrf.mxu0
    %v2100 = vadd.f32 %v2071, %v2099
    %v2101 = vpop.f32.mrf.mxu0
    %v2102 = vadd.f32 %v2073, %v2101
    %2103 = vmatmul.bf16.gmra.mxu0 %v1696
    %v2104 = vpop.f32.mrf.mxu0
    %v2105 = vadd.f32 %v2076, %v2104
    %v2106 = vpop.f32.mrf.mxu0
    %v2107 = vadd.f32 %v2078, %v2106
    %2108 = vmatmul.bf16.gmra.mxu0 %v1699
    %v2109 = vpop.f32.mrf.mxu0
    %v2110 = vadd.f32 %v2081, %v2109
    %v2111 = vpop.f32.mrf.mxu0
    %v2112 = vadd.f32 %v2083, %v2111
    %2113 = vdwg.mxu0
    %v2115 = vunpack.c.l.b16 %v1400
    %v2116 = vunpack.c.h.b16 %v1400
    %v2117 = vpack.c.b16 %v1511, %v2115
    %v2118 = vpack.c.b16 %v1512, %v2116
    %v2119 = vpack.c.b16 %v1515, %v1513
    %v2120 = vpack.c.b16 %v1516, %v1514
    %v2121 = vpack.c.b16 %v1519, %v1517
    %v2122 = vpack.c.b16 %v1520, %v1518
    %v2123 = vpack.c.b16 %v1523, %v1521
    %v2124 = vpack.c.b16 %v1524, %v1522
    %v2159 = vunpack.c.l.b16 %v1412
    %v2160 = vunpack.c.h.b16 %v1412
    %v2161 = vunpack.c.l.b16 %v1413
    %v2162 = vunpack.c.h.b16 %v1413
    %v2163 = vunpack.c.l.b16 %v1414
    %v2164 = vunpack.c.h.b16 %v1414
    %v2165 = vunpack.c.l.b16 %v1415
    %v2166 = vunpack.c.h.b16 %v1415
    %v2167 = vunpack.c.l.b16 %v1416
    %v2168 = vunpack.c.h.b16 %v1416
    %v2169 = vunpack.c.l.b16 %v1417
    %v2170 = vunpack.c.h.b16 %v1417
    %v2171 = vunpack.c.l.b16 %v1418
    %v2172 = vunpack.c.h.b16 %v1418
    %v2173 = vunpack.c.l.b16 %v1419
    %v2174 = vunpack.c.h.b16 %v1419
    %v2175 = vunpack.c.l.b16 %v1420
    %v2176 = vunpack.c.h.b16 %v1420
    %v2177 = vunpack.c.l.b16 %v1421
    %v2178 = vunpack.c.h.b16 %v1421
    %v2179 = vunpack.c.l.b16 %v1422
    %v2180 = vunpack.c.h.b16 %v1422
    %v2181 = vunpack.c.l.b16 %v1423
    %v2182 = vunpack.c.h.b16 %v1423
    %v2183 = vunpack.c.l.b16 %v1424
    %v2184 = vunpack.c.h.b16 %v1424
    %v2185 = vunpack.c.l.b16 %v1425
    %v2186 = vunpack.c.h.b16 %v1425
    %v2187 = vunpack.c.l.b16 %v1426
    %v2188 = vunpack.c.h.b16 %v1426
    %v2189 = vunpack.c.l.b16 %v1427
    %v2190 = vunpack.c.h.b16 %v1427
    %v2191 = vunpack.c.l.b16 %v1428
    %v2192 = vunpack.c.h.b16 %v1428
    %v2193 = vunpack.c.l.b16 %v1429
    %v2194 = vunpack.c.h.b16 %v1429
    %v2195 = vunpack.c.l.b16 %v1430
    %v2196 = vunpack.c.h.b16 %v1430
    %v2197 = vunpack.c.l.b16 %v1431
    %v2198 = vunpack.c.h.b16 %v1431
    %v2199 = vunpack.c.l.b16 %v1432
    %v2200 = vunpack.c.h.b16 %v1432
    %v2201 = vunpack.c.l.b16 %v1433
    %v2202 = vunpack.c.h.b16 %v1433
    %v2203 = vunpack.c.l.b16 %v1434
    %v2204 = vunpack.c.h.b16 %v1434
    %v2205 = vunpack.c.l.b16 %v1435
    %v2206 = vunpack.c.h.b16 %v1435
    %v2207 = vunpack.c.l.b16 %v1436
    %v2208 = vunpack.c.h.b16 %v1436
    %v2209 = vunpack.c.l.b16 %v1437
    %v2210 = vunpack.c.h.b16 %v1437
    %v2211 = vunpack.c.l.b16 %v1438
    %v2212 = vunpack.c.h.b16 %v1438
    %v2213 = vunpack.c.l.b16 %v1439
    %v2214 = vunpack.c.h.b16 %v1439
    %v2215 = vunpack.c.l.b16 %v1440
    %v2216 = vunpack.c.h.b16 %v1440
    %v2217 = vunpack.c.l.b16 %v1441
    %v2218 = vunpack.c.h.b16 %v1441
    %v2219 = vpack.c.b16 %v2161, %v2159
    %v2220 = vpack.c.b16 %v2162, %v2160
    %v2221 = vpack.c.b16 %v2165, %v2163
    %v2222 = vpack.c.b16 %v2166, %v2164
    %v2223 = vpack.c.b16 %v2169, %v2167
    %v2224 = vpack.c.b16 %v2170, %v2168
    %v2225 = vpack.c.b16 %v2173, %v2171
    %v2226 = vpack.c.b16 %v2174, %v2172
    %v2227 = vpack.c.b16 %v2177, %v2175
    %v2228 = vpack.c.b16 %v2178, %v2176
    %v2229 = vpack.c.b16 %v2181, %v2179
    %v2230 = vpack.c.b16 %v2182, %v2180
    %v2231 = vpack.c.b16 %v2185, %v2183
    %v2232 = vpack.c.b16 %v2186, %v2184
    %v2233 = vpack.c.b16 %v2189, %v2187
    %v2234 = vpack.c.b16 %v2190, %v2188
    %v2235 = vpack.c.b16 %v2193, %v2191
    %v2236 = vpack.c.b16 %v2194, %v2192
    %v2237 = vpack.c.b16 %v2197, %v2195
    %v2238 = vpack.c.b16 %v2198, %v2196
    %v2239 = vpack.c.b16 %v2201, %v2199
    %v2240 = vpack.c.b16 %v2202, %v2200
    %v2241 = vpack.c.b16 %v2205, %v2203
    %v2242 = vpack.c.b16 %v2206, %v2204
    %v2243 = vpack.c.b16 %v2209, %v2207
    %v2244 = vpack.c.b16 %v2210, %v2208
    %v2245 = vpack.c.b16 %v2213, %v2211
    %v2246 = vpack.c.b16 %v2214, %v2212
    %v2247 = vpack.c.b16 %v2217, %v2215
    %v2248 = vpack.c.b16 %v2218, %v2216
    %v2280 = vsel %vm411, %v2118, 0
    %v2283 = vsel %vm411, %v2120, 0
    %v2286 = vsel %vm411, %v2122, 0
    %v2289 = vsel %vm411, %v2124, 0
    %2291 = vmatpush.bf16.msra.mxu0 %v2233
    %2292 = vmatpush.bf16.msra.mxu0 %v2231
    %2293 = vmatpush.bf16.msra.mxu0 %v2229
    %2294 = vmatpush.bf16.msra.mxu0 %v2227
    %2295 = vmatpush.bf16.msra.mxu0 %v2225
    %2296 = vmatpush.bf16.msra.mxu0 %v2223
    %2297 = vmatpush.bf16.msra.mxu0 %v2221
    %2298 = vmatpush.bf16.msra.mxu0 %v2219
    %2299 = vmatmul.bf16.gmra.mxu0 %v2117
    %v2300 = vpop.f32.mrf.mxu0
    %v2301 = vadd.f32 %v1740, %v2300
    %v2302 = vpop.f32.mrf.mxu0
    %v2303 = vadd.f32 %v1742, %v2302
    %2304 = vmatmul.bf16.gmra.mxu0 %v2119
    %v2305 = vpop.f32.mrf.mxu0
    %v2306 = vadd.f32 %v1745, %v2305
    %v2307 = vpop.f32.mrf.mxu0
    %v2308 = vadd.f32 %v1747, %v2307
    %2309 = vmatmul.bf16.gmra.mxu0 %v2121
    %v2310 = vpop.f32.mrf.mxu0
    %v2311 = vadd.f32 %v1750, %v2310
    %v2312 = vpop.f32.mrf.mxu0
    %v2313 = vadd.f32 %v1752, %v2312
    %2314 = vmatmul.bf16.gmra.mxu0 %v2123
    %v2315 = vpop.f32.mrf.mxu0
    %v2316 = vadd.f32 %v1755, %v2315
    %v2317 = vpop.f32.mrf.mxu0
    %v2318 = vadd.f32 %v1757, %v2317
    %2319 = vdwg.mxu0
    %2320 = vmatpush.bf16.msra.mxu0 0
    %2321 = vmatpush.bf16.msra.mxu0 %v2247
    %2322 = vmatpush.bf16.msra.mxu0 %v2245
    %2323 = vmatpush.bf16.msra.mxu0 %v2243
    %2324 = vmatpush.bf16.msra.mxu0 %v2241
    %2325 = vmatpush.bf16.msra.mxu0 %v2239
    %2326 = vmatpush.bf16.msra.mxu0 %v2237
    %2327 = vmatpush.bf16.msra.mxu0 %v2235
    %2328 = vmatmul.bf16.gmra.mxu0 %v2280
    %v2329 = vpop.f32.mrf.mxu0
    %v2330 = vadd.f32 %v2301, %v2329
    %v2331 = vpop.f32.mrf.mxu0
    %v2332 = vadd.f32 %v2303, %v2331
    %2333 = vmatmul.bf16.gmra.mxu0 %v2283
    %v2334 = vpop.f32.mrf.mxu0
    %v2335 = vadd.f32 %v2306, %v2334
    %v2336 = vpop.f32.mrf.mxu0
    %v2337 = vadd.f32 %v2308, %v2336
    %2338 = vmatmul.bf16.gmra.mxu0 %v2286
    %v2339 = vpop.f32.mrf.mxu0
    %v2340 = vadd.f32 %v2311, %v2339
    %v2341 = vpop.f32.mrf.mxu0
    %v2342 = vadd.f32 %v2313, %v2341
    %2343 = vmatmul.bf16.gmra.mxu0 %v2289
    %v2344 = vpop.f32.mrf.mxu0
    %v2345 = vadd.f32 %v2316, %v2344
    %v2346 = vpop.f32.mrf.mxu0
    %v2347 = vadd.f32 %v2318, %v2346
    %2348 = vdwg.mxu0
    %2349 = vmatpush.bf16.msra.mxu0 %v2234
    %2350 = vmatpush.bf16.msra.mxu0 %v2232
    %2351 = vmatpush.bf16.msra.mxu0 %v2230
    %2352 = vmatpush.bf16.msra.mxu0 %v2228
    %2353 = vmatpush.bf16.msra.mxu0 %v2226
    %2354 = vmatpush.bf16.msra.mxu0 %v2224
    %2355 = vmatpush.bf16.msra.mxu0 %v2222
    %2356 = vmatpush.bf16.msra.mxu0 %v2220
    %2357 = vmatmul.bf16.gmra.mxu0 %v2117
    %v2358 = vpop.f32.mrf.mxu0
    %v2359 = vadd.f32 %v1798, %v2358
    %v2360 = vpop.f32.mrf.mxu0
    %v2361 = vadd.f32 %v1800, %v2360
    %2362 = vmatmul.bf16.gmra.mxu0 %v2119
    %v2363 = vpop.f32.mrf.mxu0
    %v2364 = vadd.f32 %v1803, %v2363
    %v2365 = vpop.f32.mrf.mxu0
    %v2366 = vadd.f32 %v1805, %v2365
    %2367 = vmatmul.bf16.gmra.mxu0 %v2121
    %v2368 = vpop.f32.mrf.mxu0
    %v2369 = vadd.f32 %v1808, %v2368
    %v2370 = vpop.f32.mrf.mxu0
    %v2371 = vadd.f32 %v1810, %v2370
    %2372 = vmatmul.bf16.gmra.mxu0 %v2123
    %v2373 = vpop.f32.mrf.mxu0
    %v2374 = vadd.f32 %v1813, %v2373
    %v2375 = vpop.f32.mrf.mxu0
    %v2376 = vadd.f32 %v1815, %v2375
    %2377 = vdwg.mxu0
    %2378 = vmatpush.bf16.msra.mxu0 0
    %2379 = vmatpush.bf16.msra.mxu0 %v2248
    %2380 = vmatpush.bf16.msra.mxu0 %v2246
    %2381 = vmatpush.bf16.msra.mxu0 %v2244
    %2382 = vmatpush.bf16.msra.mxu0 %v2242
    %2383 = vmatpush.bf16.msra.mxu0 %v2240
    %2384 = vmatpush.bf16.msra.mxu0 %v2238
    %2385 = vmatpush.bf16.msra.mxu0 %v2236
    %2386 = vmatmul.bf16.gmra.mxu0 %v2280
    %v2387 = vpop.f32.mrf.mxu0
    %v2388 = vadd.f32 %v2359, %v2387
    %v2389 = vpop.f32.mrf.mxu0
    %v2390 = vadd.f32 %v2361, %v2389
    %2391 = vmatmul.bf16.gmra.mxu0 %v2283
    %v2392 = vpop.f32.mrf.mxu0
    %v2393 = vadd.f32 %v2364, %v2392
    %v2394 = vpop.f32.mrf.mxu0
    %v2395 = vadd.f32 %v2366, %v2394
    %2396 = vmatmul.bf16.gmra.mxu0 %v2286
    %v2397 = vpop.f32.mrf.mxu0
    %v2398 = vadd.f32 %v2369, %v2397
    %v2399 = vpop.f32.mrf.mxu0
    %v2400 = vadd.f32 %v2371, %v2399
    %2401 = vmatmul.bf16.gmra.mxu0 %v2289
    %v2402 = vpop.f32.mrf.mxu0
    %v2403 = vadd.f32 %v2374, %v2402
    %v2404 = vpop.f32.mrf.mxu0
    %v2405 = vadd.f32 %v2376, %v2404
    %2406 = vdwg.mxu0
    %v2437 = vunpack.c.l.b16 %v1442
    %v2438 = vunpack.c.h.b16 %v1442
    %v2439 = vunpack.c.l.b16 %v1443
    %v2440 = vunpack.c.h.b16 %v1443
    %v2441 = vunpack.c.l.b16 %v1444
    %v2442 = vunpack.c.h.b16 %v1444
    %v2443 = vunpack.c.l.b16 %v1445
    %v2444 = vunpack.c.h.b16 %v1445
    %v2445 = vunpack.c.l.b16 %v1446
    %v2446 = vunpack.c.h.b16 %v1446
    %v2447 = vunpack.c.l.b16 %v1447
    %v2448 = vunpack.c.h.b16 %v1447
    %v2449 = vunpack.c.l.b16 %v1448
    %v2450 = vunpack.c.h.b16 %v1448
    %v2451 = vunpack.c.l.b16 %v1449
    %v2452 = vunpack.c.h.b16 %v1449
    %v2453 = vunpack.c.l.b16 %v1450
    %v2454 = vunpack.c.h.b16 %v1450
    %v2455 = vunpack.c.l.b16 %v1451
    %v2456 = vunpack.c.h.b16 %v1451
    %v2457 = vunpack.c.l.b16 %v1452
    %v2458 = vunpack.c.h.b16 %v1452
    %v2459 = vunpack.c.l.b16 %v1453
    %v2460 = vunpack.c.h.b16 %v1453
    %v2461 = vunpack.c.l.b16 %v1454
    %v2462 = vunpack.c.h.b16 %v1454
    %v2463 = vunpack.c.l.b16 %v1455
    %v2464 = vunpack.c.h.b16 %v1455
    %v2465 = vunpack.c.l.b16 %v1456
    %v2466 = vunpack.c.h.b16 %v1456
    %v2467 = vunpack.c.l.b16 %v1457
    %v2468 = vunpack.c.h.b16 %v1457
    %v2469 = vunpack.c.l.b16 %v1458
    %v2470 = vunpack.c.h.b16 %v1458
    %v2471 = vunpack.c.l.b16 %v1459
    %v2472 = vunpack.c.h.b16 %v1459
    %v2473 = vunpack.c.l.b16 %v1460
    %v2474 = vunpack.c.h.b16 %v1460
    %v2475 = vunpack.c.l.b16 %v1461
    %v2476 = vunpack.c.h.b16 %v1461
    %v2477 = vunpack.c.l.b16 %v1462
    %v2478 = vunpack.c.h.b16 %v1462
    %v2479 = vunpack.c.l.b16 %v1463
    %v2480 = vunpack.c.h.b16 %v1463
    %v2481 = vunpack.c.l.b16 %v1464
    %v2482 = vunpack.c.h.b16 %v1464
    %v2483 = vunpack.c.l.b16 %v1465
    %v2484 = vunpack.c.h.b16 %v1465
    %v2485 = vunpack.c.l.b16 %v1466
    %v2486 = vunpack.c.h.b16 %v1466
    %v2487 = vunpack.c.l.b16 %v1467
    %v2488 = vunpack.c.h.b16 %v1467
    %v2489 = vunpack.c.l.b16 %v1468
    %v2490 = vunpack.c.h.b16 %v1468
    %v2491 = vunpack.c.l.b16 %v1469
    %v2492 = vunpack.c.h.b16 %v1469
    %v2493 = vunpack.c.l.b16 %v1470
    %v2494 = vunpack.c.h.b16 %v1470
    %v2495 = vunpack.c.l.b16 %v1471
    %v2496 = vunpack.c.h.b16 %v1471
    %v2497 = vpack.c.b16 %v2439, %v2437
    %v2498 = vpack.c.b16 %v2440, %v2438
    %v2499 = vpack.c.b16 %v2443, %v2441
    %v2500 = vpack.c.b16 %v2444, %v2442
    %v2501 = vpack.c.b16 %v2447, %v2445
    %v2502 = vpack.c.b16 %v2448, %v2446
    %v2503 = vpack.c.b16 %v2451, %v2449
    %v2504 = vpack.c.b16 %v2452, %v2450
    %v2505 = vpack.c.b16 %v2455, %v2453
    %v2506 = vpack.c.b16 %v2456, %v2454
    %v2507 = vpack.c.b16 %v2459, %v2457
    %v2508 = vpack.c.b16 %v2460, %v2458
    %v2509 = vpack.c.b16 %v2463, %v2461
    %v2510 = vpack.c.b16 %v2464, %v2462
    %v2511 = vpack.c.b16 %v2467, %v2465
    %v2512 = vpack.c.b16 %v2468, %v2466
    %v2513 = vpack.c.b16 %v2471, %v2469
    %v2514 = vpack.c.b16 %v2472, %v2470
    %v2515 = vpack.c.b16 %v2475, %v2473
    %v2516 = vpack.c.b16 %v2476, %v2474
    %v2517 = vpack.c.b16 %v2479, %v2477
    %v2518 = vpack.c.b16 %v2480, %v2478
    %v2519 = vpack.c.b16 %v2483, %v2481
    %v2520 = vpack.c.b16 %v2484, %v2482
    %v2521 = vpack.c.b16 %v2487, %v2485
    %v2522 = vpack.c.b16 %v2488, %v2486
    %v2523 = vpack.c.b16 %v2491, %v2489
    %v2524 = vpack.c.b16 %v2492, %v2490
    %v2525 = vpack.c.b16 %v2495, %v2493
    %v2526 = vpack.c.b16 %v2496, %v2494
    %2557 = vmatpush.bf16.msra.mxu0 %v2511
    %2558 = vmatpush.bf16.msra.mxu0 %v2509
    %2559 = vmatpush.bf16.msra.mxu0 %v2507
    %2560 = vmatpush.bf16.msra.mxu0 %v2505
    %2561 = vmatpush.bf16.msra.mxu0 %v2503
    %2562 = vmatpush.bf16.msra.mxu0 %v2501
    %2563 = vmatpush.bf16.msra.mxu0 %v2499
    %2564 = vmatpush.bf16.msra.mxu0 %v2497
    %2565 = vmatmul.bf16.gmra.mxu0 %v2117
    %v2566 = vpop.f32.mrf.mxu0
    %v2567 = vadd.f32 %v2037, %v2566
    %v2568 = vpop.f32.mrf.mxu0
    %v2569 = vadd.f32 %v2039, %v2568
    %2570 = vmatmul.bf16.gmra.mxu0 %v2119
    %v2571 = vpop.f32.mrf.mxu0
    %v2572 = vadd.f32 %v2042, %v2571
    %v2573 = vpop.f32.mrf.mxu0
    %v2574 = vadd.f32 %v2044, %v2573
    %2575 = vmatmul.bf16.gmra.mxu0 %v2121
    %v2576 = vpop.f32.mrf.mxu0
    %v2577 = vadd.f32 %v2047, %v2576
    %v2578 = vpop.f32.mrf.mxu0
    %v2579 = vadd.f32 %v2049, %v2578
    %2580 = vmatmul.bf16.gmra.mxu0 %v2123
    %v2581 = vpop.f32.mrf.mxu0
    %v2582 = vadd.f32 %v2052, %v2581
    %v2583 = vpop.f32.mrf.mxu0
    %v2584 = vadd.f32 %v2054, %v2583
    %2585 = vdwg.mxu0
    %2586 = vmatpush.bf16.msra.mxu0 0
    %2587 = vmatpush.bf16.msra.mxu0 %v2525
    %2588 = vmatpush.bf16.msra.mxu0 %v2523
    %2589 = vmatpush.bf16.msra.mxu0 %v2521
    %2590 = vmatpush.bf16.msra.mxu0 %v2519
    %2591 = vmatpush.bf16.msra.mxu0 %v2517
    %2592 = vmatpush.bf16.msra.mxu0 %v2515
    %2593 = vmatpush.bf16.msra.mxu0 %v2513
    %2594 = vmatmul.bf16.gmra.mxu0 %v2280
    %v2595 = vpop.f32.mrf.mxu0
    %v2596 = vadd.f32 %v2567, %v2595
    %v2597 = vpop.f32.mrf.mxu0
    %v2598 = vadd.f32 %v2569, %v2597
    %2599 = vmatmul.bf16.gmra.mxu0 %v2283
    %v2600 = vpop.f32.mrf.mxu0
    %v2601 = vadd.f32 %v2572, %v2600
    %v2602 = vpop.f32.mrf.mxu0
    %v2603 = vadd.f32 %v2574, %v2602
    %2604 = vmatmul.bf16.gmra.mxu0 %v2286
    %v2605 = vpop.f32.mrf.mxu0
    %v2606 = vadd.f32 %v2577, %v2605
    %v2607 = vpop.f32.mrf.mxu0
    %v2608 = vadd.f32 %v2579, %v2607
    %2609 = vmatmul.bf16.gmra.mxu0 %v2289
    %v2610 = vpop.f32.mrf.mxu0
    %v2611 = vadd.f32 %v2582, %v2610
    %v2612 = vpop.f32.mrf.mxu0
    %v2613 = vadd.f32 %v2584, %v2612
    %2614 = vdwg.mxu0
    %2615 = vmatpush.bf16.msra.mxu0 %v2512
    %2616 = vmatpush.bf16.msra.mxu0 %v2510
    %2617 = vmatpush.bf16.msra.mxu0 %v2508
    %2618 = vmatpush.bf16.msra.mxu0 %v2506
    %2619 = vmatpush.bf16.msra.mxu0 %v2504
    %2620 = vmatpush.bf16.msra.mxu0 %v2502
    %2621 = vmatpush.bf16.msra.mxu0 %v2500
    %2622 = vmatpush.bf16.msra.mxu0 %v2498
    %2623 = vmatmul.bf16.gmra.mxu0 %v2117
    %v2624 = vpop.f32.mrf.mxu0
    %v2625 = vadd.f32 %v2095, %v2624
    %v2626 = vpop.f32.mrf.mxu0
    %v2627 = vadd.f32 %v2097, %v2626
    %2628 = vmatmul.bf16.gmra.mxu0 %v2119
    %v2629 = vpop.f32.mrf.mxu0
    %v2630 = vadd.f32 %v2100, %v2629
    %v2631 = vpop.f32.mrf.mxu0
    %v2632 = vadd.f32 %v2102, %v2631
    %2633 = vmatmul.bf16.gmra.mxu0 %v2121
    %v2634 = vpop.f32.mrf.mxu0
    %v2635 = vadd.f32 %v2105, %v2634
    %v2636 = vpop.f32.mrf.mxu0
    %v2637 = vadd.f32 %v2107, %v2636
    %2638 = vmatmul.bf16.gmra.mxu0 %v2123
    %v2639 = vpop.f32.mrf.mxu0
    %v2640 = vadd.f32 %v2110, %v2639
    %v2641 = vpop.f32.mrf.mxu0
    %v2642 = vadd.f32 %v2112, %v2641
    %2643 = vdwg.mxu0
    %2644 = vmatpush.bf16.msra.mxu0 0
    %2645 = vmatpush.bf16.msra.mxu0 %v2526
    %2646 = vmatpush.bf16.msra.mxu0 %v2524
    %2647 = vmatpush.bf16.msra.mxu0 %v2522
    %2648 = vmatpush.bf16.msra.mxu0 %v2520
    %2649 = vmatpush.bf16.msra.mxu0 %v2518
    %2650 = vmatpush.bf16.msra.mxu0 %v2516
    %2651 = vmatpush.bf16.msra.mxu0 %v2514
    %2652 = vmatmul.bf16.gmra.mxu0 %v2280
    %v2653 = vpop.f32.mrf.mxu0
    %v2654 = vadd.f32 %v2625, %v2653
    %v2655 = vpop.f32.mrf.mxu0
    %v2656 = vadd.f32 %v2627, %v2655
    %2657 = vmatmul.bf16.gmra.mxu0 %v2283
    %v2658 = vpop.f32.mrf.mxu0
    %v2659 = vadd.f32 %v2630, %v2658
    %v2660 = vpop.f32.mrf.mxu0
    %v2661 = vadd.f32 %v2632, %v2660
    %2662 = vmatmul.bf16.gmra.mxu0 %v2286
    %v2663 = vpop.f32.mrf.mxu0
    %v2664 = vadd.f32 %v2635, %v2663
    %v2665 = vpop.f32.mrf.mxu0
    %v2666 = vadd.f32 %v2637, %v2665
    %2667 = vmatmul.bf16.gmra.mxu0 %v2289
    %v2668 = vpop.f32.mrf.mxu0
    %v2669 = vadd.f32 %v2640, %v2668
    %v2670 = vpop.f32.mrf.mxu0
    %v2671 = vadd.f32 %v2642, %v2670
    %2672 = vdwg.mxu0
    %s2673 = scalar_lea.vmem [#allocation4], 480
    %v2674 = vld [vmem:[%s2673] sm:$0xff]
    %v2675 = vld [vmem:[%s2673 + $0x8] sm:$0xff]
    %v2676 = vld [vmem:[%s2673 + $0x10] sm:$0xff]
    %v2677 = vld [vmem:[%s2673 + $0x18] sm:$0xff]
    %v2678 = vld [vmem:[%s2673 + $0x20] sm:$0xff]
    %v2679 = vld [vmem:[%s2673 + $0x28] sm:$0xff]
    %v2680 = vld [vmem:[%s2673 + $0x30] sm:$0xff]
    %v2681 = vld [vmem:[%s2673 + $0x38] sm:$0xff]
    %v2682 = vld [vmem:[%s2673 + $0x40] sm:$0xff]
    %v2683 = vld [vmem:[%s2673 + $0x48] sm:$0xff]
    %v2684 = vld [vmem:[%s2673 + $0x50] sm:$0xff]
    %v2685 = vld [vmem:[%s2673 + $0x58] sm:$0xff]
    %v2686 = vld [vmem:[%s2673 + $0x60] sm:$0xff]
    %v2687 = vld [vmem:[%s2673 + $0x68] sm:$0xff]
    %v2688 = vld [vmem:[%s2673 + $0x70] sm:$0xff]
    %v2689 = vld [vmem:[%s2673 + $0x78] sm:$0xff]
    %v2690 = vld [vmem:[%s2673 + $0x80] sm:$0xff]
    %v2691 = vld [vmem:[%s2673 + $0x88] sm:$0xff]
    %v2692 = vld [vmem:[%s2673 + $0x90] sm:$0xff]
    %v2693 = vld [vmem:[%s2673 + $0x98] sm:$0xff]
    %v2694 = vld [vmem:[%s2673 + $0xa0] sm:$0xff]
    %v2695 = vld [vmem:[%s2673 + $0xa8] sm:$0xff]
    %v2696 = vld [vmem:[%s2673 + $0xb0] sm:$0xff]
    %v2697 = vld [vmem:[%s2673 + $0xb8] sm:$0xff]
    %v2698 = vld [vmem:[%s2673 + $0xc0] sm:$0xff]
    %v2699 = vld [vmem:[%s2673 + $0xc8] sm:$0xff]
    %v2700 = vld [vmem:[%s2673 + $0xd0] sm:$0xff]
    %v2701 = vld [vmem:[%s2673 + $0xd8] sm:$0xff]
    %v2702 = vld [vmem:[%s2673 + $0xe0] sm:$0xff]
    %v2703 = vld [vmem:[%s2673 + $0xe8] sm:$0xff]
    %v2705 = vunpack.c.l.b16 %v1409
    %v2706 = vunpack.c.h.b16 %v1409
    %v2707 = vpack.c.b16 %v2705, %v1525
    %v2708 = vpack.c.b16 %v2706, %v1526
    %v2740 = vunpack.c.l.b16 %v2674
    %v2741 = vunpack.c.h.b16 %v2674
    %v2742 = vunpack.c.l.b16 %v2675
    %v2743 = vunpack.c.h.b16 %v2675
    %v2744 = vunpack.c.l.b16 %v2676
    %v2745 = vunpack.c.h.b16 %v2676
    %v2746 = vunpack.c.l.b16 %v2677
    %v2747 = vunpack.c.h.b16 %v2677
    %v2748 = vunpack.c.l.b16 %v2678
    %v2749 = vunpack.c.h.b16 %v2678
    %v2750 = vunpack.c.l.b16 %v2679
    %v2751 = vunpack.c.h.b16 %v2679
    %v2752 = vunpack.c.l.b16 %v2680
    %v2753 = vunpack.c.h.b16 %v2680
    %v2754 = vunpack.c.l.b16 %v2681
    %v2755 = vunpack.c.h.b16 %v2681
    %v2756 = vunpack.c.l.b16 %v2682
    %v2757 = vunpack.c.h.b16 %v2682
    %v2758 = vunpack.c.l.b16 %v2683
    %v2759 = vunpack.c.h.b16 %v2683
    %v2760 = vunpack.c.l.b16 %v2684
    %v2761 = vunpack.c.h.b16 %v2684
    %v2762 = vunpack.c.l.b16 %v2685
    %v2763 = vunpack.c.h.b16 %v2685
    %v2764 = vunpack.c.l.b16 %v2686
    %v2765 = vunpack.c.h.b16 %v2686
    %v2766 = vunpack.c.l.b16 %v2687
    %v2767 = vunpack.c.h.b16 %v2687
    %v2768 = vunpack.c.l.b16 %v2688
    %v2769 = vunpack.c.h.b16 %v2688
    %v2770 = vunpack.c.l.b16 %v2689
    %v2771 = vunpack.c.h.b16 %v2689
    %v2772 = vunpack.c.l.b16 %v2690
    %v2773 = vunpack.c.h.b16 %v2690
    %v2774 = vunpack.c.l.b16 %v2691
    %v2775 = vunpack.c.h.b16 %v2691
    %v2776 = vunpack.c.l.b16 %v2692
    %v2777 = vunpack.c.h.b16 %v2692
    %v2778 = vunpack.c.l.b16 %v2693
    %v2779 = vunpack.c.h.b16 %v2693
    %v2780 = vunpack.c.l.b16 %v2694
    %v2781 = vunpack.c.h.b16 %v2694
    %v2782 = vunpack.c.l.b16 %v2695
    %v2783 = vunpack.c.h.b16 %v2695
    %v2784 = vunpack.c.l.b16 %v2696
    %v2785 = vunpack.c.h.b16 %v2696
    %v2786 = vunpack.c.l.b16 %v2697
    %v2787 = vunpack.c.h.b16 %v2697
    %v2788 = vunpack.c.l.b16 %v2698
    %v2789 = vunpack.c.h.b16 %v2698
    %v2790 = vunpack.c.l.b16 %v2699
    %v2791 = vunpack.c.h.b16 %v2699
    %v2792 = vunpack.c.l.b16 %v2700
    %v2793 = vunpack.c.h.b16 %v2700
    %v2794 = vunpack.c.l.b16 %v2701
    %v2795 = vunpack.c.h.b16 %v2701
    %v2796 = vunpack.c.l.b16 %v2702
    %v2797 = vunpack.c.h.b16 %v2702
    %v2798 = vunpack.c.l.b16 %v2703
    %v2799 = vunpack.c.h.b16 %v2703
    %v2800 = vpack.c.b16 %v2742, %v2740
    %v2801 = vpack.c.b16 %v2743, %v2741
    %v2802 = vpack.c.b16 %v2746, %v2744
    %v2803 = vpack.c.b16 %v2747, %v2745
    %v2804 = vpack.c.b16 %v2750, %v2748
    %v2805 = vpack.c.b16 %v2751, %v2749
    %v2806 = vpack.c.b16 %v2754, %v2752
    %v2807 = vpack.c.b16 %v2755, %v2753
    %v2808 = vpack.c.b16 %v2758, %v2756
    %v2809 = vpack.c.b16 %v2759, %v2757
    %v2810 = vpack.c.b16 %v2762, %v2760
    %v2811 = vpack.c.b16 %v2763, %v2761
    %v2812 = vpack.c.b16 %v2766, %v2764
    %v2813 = vpack.c.b16 %v2767, %v2765
    %v2814 = vpack.c.b16 %v2770, %v2768
    %v2815 = vpack.c.b16 %v2771, %v2769
    %v2816 = vpack.c.b16 %v2774, %v2772
    %v2817 = vpack.c.b16 %v2775, %v2773
    %v2818 = vpack.c.b16 %v2778, %v2776
    %v2819 = vpack.c.b16 %v2779, %v2777
    %v2820 = vpack.c.b16 %v2782, %v2780
    %v2821 = vpack.c.b16 %v2783, %v2781
    %v2822 = vpack.c.b16 %v2786, %v2784
    %v2823 = vpack.c.b16 %v2787, %v2785
    %v2824 = vpack.c.b16 %v2790, %v2788
    %v2825 = vpack.c.b16 %v2791, %v2789
    %v2826 = vpack.c.b16 %v2794, %v2792
    %v2827 = vpack.c.b16 %v2795, %v2793
    %v2828 = vpack.c.b16 %v2798, %v2796
    %v2829 = vpack.c.b16 %v2799, %v2797
    %v2861 = vsel %vm411, %v2708, 0
    %2863 = vmatpush.bf16.msra.mxu0 %v2814
    %2864 = vmatpush.bf16.msra.mxu0 %v2812
    %2865 = vmatpush.bf16.msra.mxu0 %v2810
    %2866 = vmatpush.bf16.msra.mxu0 %v2808
    %2867 = vmatpush.bf16.msra.mxu0 %v2806
    %2868 = vmatpush.bf16.msra.mxu0 %v2804
    %2869 = vmatpush.bf16.msra.mxu0 %v2802
    %2870 = vmatpush.bf16.msra.mxu0 %v2800
    %2871 = vmatmul.bf16.gmra.mxu0 %v2119
    %v2872 = vpop.f32.mrf.mxu0
    %v2873 = vadd.f32 0.0, %v2872
    %v2874 = vpop.f32.mrf.mxu0
    %v2875 = vadd.f32 0.0, %v2874
    %2876 = vmatmul.bf16.gmra.mxu0 %v2121
    %v2877 = vpop.f32.mrf.mxu0
    %v2878 = vadd.f32 0.0, %v2877
    %v2879 = vpop.f32.mrf.mxu0
    %v2880 = vadd.f32 0.0, %v2879
    %2881 = vmatmul.bf16.gmra.mxu0 %v2123
    %v2882 = vpop.f32.mrf.mxu0
    %v2883 = vadd.f32 0.0, %v2882
    %v2884 = vpop.f32.mrf.mxu0
    %v2885 = vadd.f32 0.0, %v2884
    %2886 = vmatmul.bf16.gmra.mxu0 %v2707
    %v2887 = vpop.f32.mrf.mxu0
    %v2888 = vadd.f32 0.0, %v2887
    %v2889 = vpop.f32.mrf.mxu0
    %v2890 = vadd.f32 0.0, %v2889
    %2891 = vdwg.mxu0
    %2892 = vmatpush.bf16.msra.mxu0 0
    %2893 = vmatpush.bf16.msra.mxu0 %v2828
    %2894 = vmatpush.bf16.msra.mxu0 %v2826
    %2895 = vmatpush.bf16.msra.mxu0 %v2824
    %2896 = vmatpush.bf16.msra.mxu0 %v2822
    %2897 = vmatpush.bf16.msra.mxu0 %v2820
    %2898 = vmatpush.bf16.msra.mxu0 %v2818
    %2899 = vmatpush.bf16.msra.mxu0 %v2816
    %2900 = vmatmul.bf16.gmra.mxu0 %v2283
    %v2901 = vpop.f32.mrf.mxu0
    %v2902 = vadd.f32 %v2873, %v2901
    %v2903 = vpop.f32.mrf.mxu0
    %v2904 = vadd.f32 %v2875, %v2903
    %2905 = vmatmul.bf16.gmra.mxu0 %v2286
    %v2906 = vpop.f32.mrf.mxu0
    %v2907 = vadd.f32 %v2878, %v2906
    %v2908 = vpop.f32.mrf.mxu0
    %v2909 = vadd.f32 %v2880, %v2908
    %2910 = vmatmul.bf16.gmra.mxu0 %v2289
    %v2911 = vpop.f32.mrf.mxu0
    %v2912 = vadd.f32 %v2883, %v2911
    %v2913 = vpop.f32.mrf.mxu0
    %v2914 = vadd.f32 %v2885, %v2913
    %2915 = vmatmul.bf16.gmra.mxu0 %v2861
    %v2916 = vpop.f32.mrf.mxu0
    %v2917 = vadd.f32 %v2888, %v2916
    %v2918 = vpop.f32.mrf.mxu0
    %v2919 = vadd.f32 %v2890, %v2918
    %2920 = vdwg.mxu0
    %2921 = vmatpush.bf16.msra.mxu0 %v2815
    %2922 = vmatpush.bf16.msra.mxu0 %v2813
    %2923 = vmatpush.bf16.msra.mxu0 %v2811
    %2924 = vmatpush.bf16.msra.mxu0 %v2809
    %2925 = vmatpush.bf16.msra.mxu0 %v2807
    %2926 = vmatpush.bf16.msra.mxu0 %v2805
    %2927 = vmatpush.bf16.msra.mxu0 %v2803
    %2928 = vmatpush.bf16.msra.mxu0 %v2801
    %2929 = vmatmul.bf16.gmra.mxu0 %v2119
    %v2930 = vpop.f32.mrf.mxu0
    %v2931 = vadd.f32 0.0, %v2930
    %v2932 = vpop.f32.mrf.mxu0
    %v2933 = vadd.f32 0.0, %v2932
    %2934 = vmatmul.bf16.gmra.mxu0 %v2121
    %v2935 = vpop.f32.mrf.mxu0
    %v2936 = vadd.f32 0.0, %v2935
    %v2937 = vpop.f32.mrf.mxu0
    %v2938 = vadd.f32 0.0, %v2937
    %2939 = vmatmul.bf16.gmra.mxu0 %v2123
    %v2940 = vpop.f32.mrf.mxu0
    %v2941 = vadd.f32 0.0, %v2940
    %v2942 = vpop.f32.mrf.mxu0
    %v2943 = vadd.f32 0.0, %v2942
    %2944 = vmatmul.bf16.gmra.mxu0 %v2707
    %v2945 = vpop.f32.mrf.mxu0
    %v2946 = vadd.f32 0.0, %v2945
    %v2947 = vpop.f32.mrf.mxu0
    %v2948 = vadd.f32 0.0, %v2947
    %2949 = vdwg.mxu0
    %2950 = vmatpush.bf16.msra.mxu0 0
    %2951 = vmatpush.bf16.msra.mxu0 %v2829
    %2952 = vmatpush.bf16.msra.mxu0 %v2827
    %2953 = vmatpush.bf16.msra.mxu0 %v2825
    %2954 = vmatpush.bf16.msra.mxu0 %v2823
    %2955 = vmatpush.bf16.msra.mxu0 %v2821
    %2956 = vmatpush.bf16.msra.mxu0 %v2819
    %2957 = vmatpush.bf16.msra.mxu0 %v2817
    %2958 = vmatmul.bf16.gmra.mxu0 %v2283
    %v2959 = vpop.f32.mrf.mxu0
    %v2960 = vadd.f32 %v2931, %v2959
    %v2961 = vpop.f32.mrf.mxu0
    %v2962 = vadd.f32 %v2933, %v2961
    %2963 = vmatmul.bf16.gmra.mxu0 %v2286
    %v2964 = vpop.f32.mrf.mxu0
    %v2965 = vadd.f32 %v2936, %v2964
    %v2966 = vpop.f32.mrf.mxu0
    %v2967 = vadd.f32 %v2938, %v2966
    %2968 = vmatmul.bf16.gmra.mxu0 %v2289
    %v2969 = vpop.f32.mrf.mxu0
    %v2970 = vadd.f32 %v2941, %v2969
    %v2971 = vpop.f32.mrf.mxu0
    %v2972 = vadd.f32 %v2943, %v2971
    %2973 = vmatmul.bf16.gmra.mxu0 %v2861
    %v2974 = vpop.f32.mrf.mxu0
    %v2975 = vadd.f32 %v2946, %v2974
    %v2976 = vpop.f32.mrf.mxu0
    %v2977 = vadd.f32 %v2948, %v2976
    %2978 = vdwg.mxu0
    %s2979 = scalar_lea.vmem [#allocation6], 480
    %v2980 = vld [vmem:[%s2979] sm:$0xff]
    %v2981 = vld [vmem:[%s2979 + $0x8] sm:$0xff]
    %v2982 = vld [vmem:[%s2979 + $0x10] sm:$0xff]
    %v2983 = vld [vmem:[%s2979 + $0x18] sm:$0xff]
    %v2984 = vld [vmem:[%s2979 + $0x20] sm:$0xff]
    %v2985 = vld [vmem:[%s2979 + $0x28] sm:$0xff]
    %v2986 = vld [vmem:[%s2979 + $0x30] sm:$0xff]
    %v2987 = vld [vmem:[%s2979 + $0x38] sm:$0xff]
    %v2988 = vld [vmem:[%s2979 + $0x40] sm:$0xff]
    %v2989 = vld [vmem:[%s2979 + $0x48] sm:$0xff]
    %v2990 = vld [vmem:[%s2979 + $0x50] sm:$0xff]
    %v2991 = vld [vmem:[%s2979 + $0x58] sm:$0xff]
    %v2992 = vld [vmem:[%s2979 + $0x60] sm:$0xff]
    %v2993 = vld [vmem:[%s2979 + $0x68] sm:$0xff]
    %v2994 = vld [vmem:[%s2979 + $0x70] sm:$0xff]
    %v2995 = vld [vmem:[%s2979 + $0x78] sm:$0xff]
    %v2996 = vld [vmem:[%s2979 + $0x80] sm:$0xff]
    %v2997 = vld [vmem:[%s2979 + $0x88] sm:$0xff]
    %v2998 = vld [vmem:[%s2979 + $0x90] sm:$0xff]
    %v2999 = vld [vmem:[%s2979 + $0x98] sm:$0xff]
    %v3000 = vld [vmem:[%s2979 + $0xa0] sm:$0xff]
    %v3001 = vld [vmem:[%s2979 + $0xa8] sm:$0xff]
    %v3002 = vld [vmem:[%s2979 + $0xb0] sm:$0xff]
    %v3003 = vld [vmem:[%s2979 + $0xb8] sm:$0xff]
    %v3004 = vld [vmem:[%s2979 + $0xc0] sm:$0xff]
    %v3005 = vld [vmem:[%s2979 + $0xc8] sm:$0xff]
    %v3006 = vld [vmem:[%s2979 + $0xd0] sm:$0xff]
    %v3007 = vld [vmem:[%s2979 + $0xd8] sm:$0xff]
    %v3008 = vld [vmem:[%s2979 + $0xe0] sm:$0xff]
    %v3009 = vld [vmem:[%s2979 + $0xe8] sm:$0xff]
    %v3040 = vunpack.c.l.b16 %v2980
    %v3041 = vunpack.c.h.b16 %v2980
    %v3042 = vunpack.c.l.b16 %v2981
    %v3043 = vunpack.c.h.b16 %v2981
    %v3044 = vunpack.c.l.b16 %v2982
    %v3045 = vunpack.c.h.b16 %v2982
    %v3046 = vunpack.c.l.b16 %v2983
    %v3047 = vunpack.c.h.b16 %v2983
    %v3048 = vunpack.c.l.b16 %v2984
    %v3049 = vunpack.c.h.b16 %v2984
    %v3050 = vunpack.c.l.b16 %v2985
    %v3051 = vunpack.c.h.b16 %v2985
    %v3052 = vunpack.c.l.b16 %v2986
    %v3053 = vunpack.c.h.b16 %v2986
    %v3054 = vunpack.c.l.b16 %v2987
    %v3055 = vunpack.c.h.b16 %v2987
    %v3056 = vunpack.c.l.b16 %v2988
    %v3057 = vunpack.c.h.b16 %v2988
    %v3058 = vunpack.c.l.b16 %v2989
    %v3059 = vunpack.c.h.b16 %v2989
    %v3060 = vunpack.c.l.b16 %v2990
    %v3061 = vunpack.c.h.b16 %v2990
    %v3062 = vunpack.c.l.b16 %v2991
    %v3063 = vunpack.c.h.b16 %v2991
    %v3064 = vunpack.c.l.b16 %v2992
    %v3065 = vunpack.c.h.b16 %v2992
    %v3066 = vunpack.c.l.b16 %v2993
    %v3067 = vunpack.c.h.b16 %v2993
    %v3068 = vunpack.c.l.b16 %v2994
    %v3069 = vunpack.c.h.b16 %v2994
    %v3070 = vunpack.c.l.b16 %v2995
    %v3071 = vunpack.c.h.b16 %v2995
    %v3072 = vunpack.c.l.b16 %v2996
    %v3073 = vunpack.c.h.b16 %v2996
    %v3074 = vunpack.c.l.b16 %v2997
    %v3075 = vunpack.c.h.b16 %v2997
    %v3076 = vunpack.c.l.b16 %v2998
    %v3077 = vunpack.c.h.b16 %v2998
    %v3078 = vunpack.c.l.b16 %v2999
    %v3079 = vunpack.c.h.b16 %v2999
    %v3080 = vunpack.c.l.b16 %v3000
    %v3081 = vunpack.c.h.b16 %v3000
    %v3082 = vunpack.c.l.b16 %v3001
    %v3083 = vunpack.c.h.b16 %v3001
    %v3084 = vunpack.c.l.b16 %v3002
    %v3085 = vunpack.c.h.b16 %v3002
    %v3086 = vunpack.c.l.b16 %v3003
    %v3087 = vunpack.c.h.b16 %v3003
    %v3088 = vunpack.c.l.b16 %v3004
    %v3089 = vunpack.c.h.b16 %v3004
    %v3090 = vunpack.c.l.b16 %v3005
    %v3091 = vunpack.c.h.b16 %v3005
    %v3092 = vunpack.c.l.b16 %v3006
    %v3093 = vunpack.c.h.b16 %v3006
    %v3094 = vunpack.c.l.b16 %v3007
    %v3095 = vunpack.c.h.b16 %v3007
    %v3096 = vunpack.c.l.b16 %v3008
    %v3097 = vunpack.c.h.b16 %v3008
    %v3098 = vunpack.c.l.b16 %v3009
    %v3099 = vunpack.c.h.b16 %v3009
    %v3100 = vpack.c.b16 %v3042, %v3040
    %v3101 = vpack.c.b16 %v3043, %v3041
    %v3102 = vpack.c.b16 %v3046, %v3044
    %v3103 = vpack.c.b16 %v3047, %v3045
    %v3104 = vpack.c.b16 %v3050, %v3048
    %v3105 = vpack.c.b16 %v3051, %v3049
    %v3106 = vpack.c.b16 %v3054, %v3052
    %v3107 = vpack.c.b16 %v3055, %v3053
    %v3108 = vpack.c.b16 %v3058, %v3056
    %v3109 = vpack.c.b16 %v3059, %v3057
    %v3110 = vpack.c.b16 %v3062, %v3060
    %v3111 = vpack.c.b16 %v3063, %v3061
    %v3112 = vpack.c.b16 %v3066, %v3064
    %v3113 = vpack.c.b16 %v3067, %v3065
    %v3114 = vpack.c.b16 %v3070, %v3068
    %v3115 = vpack.c.b16 %v3071, %v3069
    %v3116 = vpack.c.b16 %v3074, %v3072
    %v3117 = vpack.c.b16 %v3075, %v3073
    %v3118 = vpack.c.b16 %v3078, %v3076
    %v3119 = vpack.c.b16 %v3079, %v3077
    %v3120 = vpack.c.b16 %v3082, %v3080
    %v3121 = vpack.c.b16 %v3083, %v3081
    %v3122 = vpack.c.b16 %v3086, %v3084
    %v3123 = vpack.c.b16 %v3087, %v3085
    %v3124 = vpack.c.b16 %v3090, %v3088
    %v3125 = vpack.c.b16 %v3091, %v3089
    %v3126 = vpack.c.b16 %v3094, %v3092
    %v3127 = vpack.c.b16 %v3095, %v3093
    %v3128 = vpack.c.b16 %v3098, %v3096
    %v3129 = vpack.c.b16 %v3099, %v3097
    %3160 = vmatpush.bf16.msra.mxu0 %v3114
    %3161 = vmatpush.bf16.msra.mxu0 %v3112
    %3162 = vmatpush.bf16.msra.mxu0 %v3110
    %3163 = vmatpush.bf16.msra.mxu0 %v3108
    %3164 = vmatpush.bf16.msra.mxu0 %v3106
    %3165 = vmatpush.bf16.msra.mxu0 %v3104
    %3166 = vmatpush.bf16.msra.mxu0 %v3102
    %3167 = vmatpush.bf16.msra.mxu0 %v3100
    %3168 = vmatmul.bf16.gmra.mxu0 %v2119
    %v3169 = vpop.f32.mrf.mxu0
    %v3170 = vadd.f32 0.0, %v3169
    %v3171 = vpop.f32.mrf.mxu0
    %v3172 = vadd.f32 0.0, %v3171
    %3173 = vmatmul.bf16.gmra.mxu0 %v2121
    %v3174 = vpop.f32.mrf.mxu0
    %v3175 = vadd.f32 0.0, %v3174
    %v3176 = vpop.f32.mrf.mxu0
    %v3177 = vadd.f32 0.0, %v3176
    %3178 = vmatmul.bf16.gmra.mxu0 %v2123
    %v3179 = vpop.f32.mrf.mxu0
    %v3180 = vadd.f32 0.0, %v3179
    %v3181 = vpop.f32.mrf.mxu0
    %v3182 = vadd.f32 0.0, %v3181
    %3183 = vmatmul.bf16.gmra.mxu0 %v2707
    %v3184 = vpop.f32.mrf.mxu0
    %v3185 = vadd.f32 0.0, %v3184
    %v3186 = vpop.f32.mrf.mxu0
    %v3187 = vadd.f32 0.0, %v3186
    %3188 = vdwg.mxu0
    %3189 = vmatpush.bf16.msra.mxu0 0
    %3190 = vmatpush.bf16.msra.mxu0 %v3128
    %3191 = vmatpush.bf16.msra.mxu0 %v3126
    %3192 = vmatpush.bf16.msra.mxu0 %v3124
    %3193 = vmatpush.bf16.msra.mxu0 %v3122
    %3194 = vmatpush.bf16.msra.mxu0 %v3120
    %3195 = vmatpush.bf16.msra.mxu0 %v3118
    %3196 = vmatpush.bf16.msra.mxu0 %v3116
    %3197 = vmatmul.bf16.gmra.mxu0 %v2283
    %v3198 = vpop.f32.mrf.mxu0
    %v3199 = vadd.f32 %v3170, %v3198
    %v3200 = vpop.f32.mrf.mxu0
    %v3201 = vadd.f32 %v3172, %v3200
    %3202 = vmatmul.bf16.gmra.mxu0 %v2286
    %v3203 = vpop.f32.mrf.mxu0
    %v3204 = vadd.f32 %v3175, %v3203
    %v3205 = vpop.f32.mrf.mxu0
    %v3206 = vadd.f32 %v3177, %v3205
    %3207 = vmatmul.bf16.gmra.mxu0 %v2289
    %v3208 = vpop.f32.mrf.mxu0
    %v3209 = vadd.f32 %v3180, %v3208
    %v3210 = vpop.f32.mrf.mxu0
    %v3211 = vadd.f32 %v3182, %v3210
    %3212 = vmatmul.bf16.gmra.mxu0 %v2861
    %v3213 = vpop.f32.mrf.mxu0
    %v3214 = vadd.f32 %v3185, %v3213
    %v3215 = vpop.f32.mrf.mxu0
    %v3216 = vadd.f32 %v3187, %v3215
    %3217 = vdwg.mxu0
    %3218 = vmatpush.bf16.msra.mxu0 %v3115
    %3219 = vmatpush.bf16.msra.mxu0 %v3113
    %3220 = vmatpush.bf16.msra.mxu0 %v3111
    %3221 = vmatpush.bf16.msra.mxu0 %v3109
    %3222 = vmatpush.bf16.msra.mxu0 %v3107
    %3223 = vmatpush.bf16.msra.mxu0 %v3105
    %3224 = vmatpush.bf16.msra.mxu0 %v3103
    %3225 = vmatpush.bf16.msra.mxu0 %v3101
    %3226 = vmatmul.bf16.gmra.mxu0 %v2119
    %v3227 = vpop.f32.mrf.mxu0
    %v3228 = vadd.f32 0.0, %v3227
    %v3229 = vpop.f32.mrf.mxu0
    %v3230 = vadd.f32 0.0, %v3229
    %3231 = vmatmul.bf16.gmra.mxu0 %v2121
    %v3232 = vpop.f32.mrf.mxu0
    %v3233 = vadd.f32 0.0, %v3232
    %v3234 = vpop.f32.mrf.mxu0
    %v3235 = vadd.f32 0.0, %v3234
    %3236 = vmatmul.bf16.gmra.mxu0 %v2123
    %v3237 = vpop.f32.mrf.mxu0
    %v3238 = vadd.f32 0.0, %v3237
    %v3239 = vpop.f32.mrf.mxu0
    %v3240 = vadd.f32 0.0, %v3239
    %3241 = vmatmul.bf16.gmra.mxu0 %v2707
    %v3242 = vpop.f32.mrf.mxu0
    %v3243 = vadd.f32 0.0, %v3242
    %v3244 = vpop.f32.mrf.mxu0
    %v3245 = vadd.f32 0.0, %v3244
    %3246 = vdwg.mxu0
    %3247 = vmatpush.bf16.msra.mxu0 0
    %3248 = vmatpush.bf16.msra.mxu0 %v3129
    %3249 = vmatpush.bf16.msra.mxu0 %v3127
    %3250 = vmatpush.bf16.msra.mxu0 %v3125
    %3251 = vmatpush.bf16.msra.mxu0 %v3123
    %3252 = vmatpush.bf16.msra.mxu0 %v3121
    %3253 = vmatpush.bf16.msra.mxu0 %v3119
    %3254 = vmatpush.bf16.msra.mxu0 %v3117
    %3255 = vmatmul.bf16.gmra.mxu0 %v2283
    %v3256 = vpop.f32.mrf.mxu0
    %v3257 = vadd.f32 %v3228, %v3256
    %v3258 = vpop.f32.mrf.mxu0
    %v3259 = vadd.f32 %v3230, %v3258
    %3260 = vmatmul.bf16.gmra.mxu0 %v2286
    %v3261 = vpop.f32.mrf.mxu0
    %v3262 = vadd.f32 %v3233, %v3261
    %v3263 = vpop.f32.mrf.mxu0
    %v3264 = vadd.f32 %v3235, %v3263
    %3265 = vmatmul.bf16.gmra.mxu0 %v2289
    %v3266 = vpop.f32.mrf.mxu0
    %v3267 = vadd.f32 %v3238, %v3266
    %v3268 = vpop.f32.mrf.mxu0
    %v3269 = vadd.f32 %v3240, %v3268
    %3270 = vmatmul.bf16.gmra.mxu0 %v2861
    %v3271 = vpop.f32.mrf.mxu0
    %v3272 = vadd.f32 %v3243, %v3271
    %v3273 = vpop.f32.mrf.mxu0
    %v3274 = vadd.f32 %v3245, %v3273
    %3275 = vdwg.mxu0
    %v3276 = vadd.f32 %v2330, %v2902
    %v3277 = vadd.f32 %v2388, %v2960
    %v3278 = vadd.f32 %v2332, %v2904
    %v3279 = vadd.f32 %v2390, %v2962
    %v3280 = vadd.f32 %v2335, %v2907
    %v3281 = vadd.f32 %v2393, %v2965
    %v3282 = vadd.f32 %v2337, %v2909
    %v3283 = vadd.f32 %v2395, %v2967
    %v3284 = vadd.f32 %v2340, %v2912
    %v3285 = vadd.f32 %v2398, %v2970
    %v3286 = vadd.f32 %v2342, %v2914
    %v3287 = vadd.f32 %v2400, %v2972
    %v3288 = vadd.f32 %v2345, %v2917
    %v3289 = vadd.f32 %v2403, %v2975
    %v3290 = vadd.f32 %v2347, %v2919
    %v3291 = vadd.f32 %v2405, %v2977
    %v3292 = vadd.f32 %v2596, %v3199
    %v3293 = vadd.f32 %v2654, %v3257
    %v3294 = vadd.f32 %v2598, %v3201
    %v3295 = vadd.f32 %v2656, %v3259
    %v3296 = vadd.f32 %v2601, %v3204
    %v3297 = vadd.f32 %v2659, %v3262
    %v3298 = vadd.f32 %v2603, %v3206
    %v3299 = vadd.f32 %v2661, %v3264
    %v3300 = vadd.f32 %v2606, %v3209
    %v3301 = vadd.f32 %v2664, %v3267
    %v3302 = vadd.f32 %v2608, %v3211
    %v3303 = vadd.f32 %v2666, %v3269
    %v3304 = vadd.f32 %v2611, %v3214
    %v3305 = vadd.f32 %v2669, %v3272
    %v3306 = vadd.f32 %v2613, %v3216
    %v3307 = vadd.f32 %v2671, %v3274
    %s3308 = scalar_lea.vmem [#allocation4], 720
    %v3309 = vld [vmem:[%s3308] sm:$0xff]
    %v3310 = vld [vmem:[%s3308 + $0x8] sm:$0xff]
    %v3311 = vld [vmem:[%s3308 + $0x10] sm:$0xff]
    %v3312 = vld [vmem:[%s3308 + $0x18] sm:$0xff]
    %v3313 = vld [vmem:[%s3308 + $0x20] sm:$0xff]
    %v3314 = vld [vmem:[%s3308 + $0x28] sm:$0xff]
    %v3315 = vld [vmem:[%s3308 + $0x30] sm:$0xff]
    %v3316 = vld [vmem:[%s3308 + $0x38] sm:$0xff]
    %v3317 = vld [vmem:[%s3308 + $0x40] sm:$0xff]
    %v3318 = vld [vmem:[%s3308 + $0x48] sm:$0xff]
    %v3319 = vld [vmem:[%s3308 + $0x50] sm:$0xff]
    %v3320 = vld [vmem:[%s3308 + $0x58] sm:$0xff]
    %v3321 = vld [vmem:[%s3308 + $0x60] sm:$0xff]
    %v3322 = vld [vmem:[%s3308 + $0x68] sm:$0xff]
    %v3323 = vld [vmem:[%s3308 + $0x70] sm:$0xff]
    %v3324 = vld [vmem:[%s3308 + $0x78] sm:$0xff]
    %v3325 = vld [vmem:[%s3308 + $0x80] sm:$0xff]
    %v3326 = vld [vmem:[%s3308 + $0x88] sm:$0xff]
    %v3327 = vld [vmem:[%s3308 + $0x90] sm:$0xff]
    %v3328 = vld [vmem:[%s3308 + $0x98] sm:$0xff]
    %v3329 = vld [vmem:[%s3308 + $0xa0] sm:$0xff]
    %v3330 = vld [vmem:[%s3308 + $0xa8] sm:$0xff]
    %v3331 = vld [vmem:[%s3308 + $0xb0] sm:$0xff]
    %v3332 = vld [vmem:[%s3308 + $0xb8] sm:$0xff]
    %v3333 = vld [vmem:[%s3308 + $0xc0] sm:$0xff]
    %v3334 = vld [vmem:[%s3308 + $0xc8] sm:$0xff]
    %v3335 = vld [vmem:[%s3308 + $0xd0] sm:$0xff]
    %v3336 = vld [vmem:[%s3308 + $0xd8] sm:$0xff]
    %v3337 = vld [vmem:[%s3308 + $0xe0] sm:$0xff]
    %v3338 = vld [vmem:[%s3308 + $0xe8] sm:$0xff]
    %v3340 = vunpack.c.l.b16 %v1410
    %v3341 = vunpack.c.h.b16 %v1410
    %v3342 = vpack.c.b16 %v3340, %v2705
    %v3343 = vpack.c.b16 %v3341, %v2706
    %v3375 = vunpack.c.l.b16 %v3309
    %v3376 = vunpack.c.h.b16 %v3309
    %v3377 = vunpack.c.l.b16 %v3310
    %v3378 = vunpack.c.h.b16 %v3310
    %v3379 = vunpack.c.l.b16 %v3311
    %v3380 = vunpack.c.h.b16 %v3311
    %v3381 = vunpack.c.l.b16 %v3312
    %v3382 = vunpack.c.h.b16 %v3312
    %v3383 = vunpack.c.l.b16 %v3313
    %v3384 = vunpack.c.h.b16 %v3313
    %v3385 = vunpack.c.l.b16 %v3314
    %v3386 = vunpack.c.h.b16 %v3314
    %v3387 = vunpack.c.l.b16 %v3315
    %v3388 = vunpack.c.h.b16 %v3315
    %v3389 = vunpack.c.l.b16 %v3316
    %v3390 = vunpack.c.h.b16 %v3316
    %v3391 = vunpack.c.l.b16 %v3317
    %v3392 = vunpack.c.h.b16 %v3317
    %v3393 = vunpack.c.l.b16 %v3318
    %v3394 = vunpack.c.h.b16 %v3318
    %v3395 = vunpack.c.l.b16 %v3319
    %v3396 = vunpack.c.h.b16 %v3319
    %v3397 = vunpack.c.l.b16 %v3320
    %v3398 = vunpack.c.h.b16 %v3320
    %v3399 = vunpack.c.l.b16 %v3321
    %v3400 = vunpack.c.h.b16 %v3321
    %v3401 = vunpack.c.l.b16 %v3322
    %v3402 = vunpack.c.h.b16 %v3322
    %v3403 = vunpack.c.l.b16 %v3323
    %v3404 = vunpack.c.h.b16 %v3323
    %v3405 = vunpack.c.l.b16 %v3324
    %v3406 = vunpack.c.h.b16 %v3324
    %v3407 = vunpack.c.l.b16 %v3325
    %v3408 = vunpack.c.h.b16 %v3325
    %v3409 = vunpack.c.l.b16 %v3326
    %v3410 = vunpack.c.h.b16 %v3326
    %v3411 = vunpack.c.l.b16 %v3327
    %v3412 = vunpack.c.h.b16 %v3327
    %v3413 = vunpack.c.l.b16 %v3328
    %v3414 = vunpack.c.h.b16 %v3328
    %v3415 = vunpack.c.l.b16 %v3329
    %v3416 = vunpack.c.h.b16 %v3329
    %v3417 = vunpack.c.l.b16 %v3330
    %v3418 = vunpack.c.h.b16 %v3330
    %v3419 = vunpack.c.l.b16 %v3331
    %v3420 = vunpack.c.h.b16 %v3331
    %v3421 = vunpack.c.l.b16 %v3332
    %v3422 = vunpack.c.h.b16 %v3332
    %v3423 = vunpack.c.l.b16 %v3333
    %v3424 = vunpack.c.h.b16 %v3333
    %v3425 = vunpack.c.l.b16 %v3334
    %v3426 = vunpack.c.h.b16 %v3334
    %v3427 = vunpack.c.l.b16 %v3335
    %v3428 = vunpack.c.h.b16 %v3335
    %v3429 = vunpack.c.l.b16 %v3336
    %v3430 = vunpack.c.h.b16 %v3336
    %v3431 = vunpack.c.l.b16 %v3337
    %v3432 = vunpack.c.h.b16 %v3337
    %v3433 = vunpack.c.l.b16 %v3338
    %v3434 = vunpack.c.h.b16 %v3338
    %v3435 = vpack.c.b16 %v3377, %v3375
    %v3436 = vpack.c.b16 %v3378, %v3376
    %v3437 = vpack.c.b16 %v3381, %v3379
    %v3438 = vpack.c.b16 %v3382, %v3380
    %v3439 = vpack.c.b16 %v3385, %v3383
    %v3440 = vpack.c.b16 %v3386, %v3384
    %v3441 = vpack.c.b16 %v3389, %v3387
    %v3442 = vpack.c.b16 %v3390, %v3388
    %v3443 = vpack.c.b16 %v3393, %v3391
    %v3444 = vpack.c.b16 %v3394, %v3392
    %v3445 = vpack.c.b16 %v3397, %v3395
    %v3446 = vpack.c.b16 %v3398, %v3396
    %v3447 = vpack.c.b16 %v3401, %v3399
    %v3448 = vpack.c.b16 %v3402, %v3400
    %v3449 = vpack.c.b16 %v3405, %v3403
    %v3450 = vpack.c.b16 %v3406, %v3404
    %v3451 = vpack.c.b16 %v3409, %v3407
    %v3452 = vpack.c.b16 %v3410, %v3408
    %v3453 = vpack.c.b16 %v3413, %v3411
    %v3454 = vpack.c.b16 %v3414, %v3412
    %v3455 = vpack.c.b16 %v3417, %v3415
    %v3456 = vpack.c.b16 %v3418, %v3416
    %v3457 = vpack.c.b16 %v3421, %v3419
    %v3458 = vpack.c.b16 %v3422, %v3420
    %v3459 = vpack.c.b16 %v3425, %v3423
    %v3460 = vpack.c.b16 %v3426, %v3424
    %v3461 = vpack.c.b16 %v3429, %v3427
    %v3462 = vpack.c.b16 %v3430, %v3428
    %v3463 = vpack.c.b16 %v3433, %v3431
    %v3464 = vpack.c.b16 %v3434, %v3432
    %v3496 = vsel %vm411, %v3343, 0
    %3498 = vmatpush.bf16.msra.mxu0 %v3449
    %3499 = vmatpush.bf16.msra.mxu0 %v3447
    %3500 = vmatpush.bf16.msra.mxu0 %v3445
    %3501 = vmatpush.bf16.msra.mxu0 %v3443
    %3502 = vmatpush.bf16.msra.mxu0 %v3441
    %3503 = vmatpush.bf16.msra.mxu0 %v3439
    %3504 = vmatpush.bf16.msra.mxu0 %v3437
    %3505 = vmatpush.bf16.msra.mxu0 %v3435
    %3506 = vmatmul.bf16.gmra.mxu0 %v1529
    %v3507 = vpop.f32.mrf.mxu0
    %v3508 = vadd.f32 0.0, %v3507
    %v3509 = vpop.f32.mrf.mxu0
    %v3510 = vadd.f32 0.0, %v3509
    %3511 = vmatmul.bf16.gmra.mxu0 %v1531
    %v3512 = vpop.f32.mrf.mxu0
    %v3513 = vadd.f32 0.0, %v3512
    %v3514 = vpop.f32.mrf.mxu0
    %v3515 = vadd.f32 0.0, %v3514
    %3516 = vmatmul.bf16.gmra.mxu0 %v1533
    %v3517 = vpop.f32.mrf.mxu0
    %v3518 = vadd.f32 0.0, %v3517
    %v3519 = vpop.f32.mrf.mxu0
    %v3520 = vadd.f32 0.0, %v3519
    %3521 = vmatmul.bf16.gmra.mxu0 %v3342
    %v3522 = vpop.f32.mrf.mxu0
    %v3523 = vadd.f32 0.0, %v3522
    %v3524 = vpop.f32.mrf.mxu0
    %v3525 = vadd.f32 0.0, %v3524
    %3526 = vdwg.mxu0
    %3527 = vmatpush.bf16.msra.mxu0 0
    %3528 = vmatpush.bf16.msra.mxu0 %v3463
    %3529 = vmatpush.bf16.msra.mxu0 %v3461
    %3530 = vmatpush.bf16.msra.mxu0 %v3459
    %3531 = vmatpush.bf16.msra.mxu0 %v3457
    %3532 = vmatpush.bf16.msra.mxu0 %v3455
    %3533 = vmatpush.bf16.msra.mxu0 %v3453
    %3534 = vmatpush.bf16.msra.mxu0 %v3451
    %3535 = vmatmul.bf16.gmra.mxu0 %v1693
    %v3536 = vpop.f32.mrf.mxu0
    %v3537 = vadd.f32 %v3508, %v3536
    %v3538 = vpop.f32.mrf.mxu0
    %v3539 = vadd.f32 %v3510, %v3538
    %3540 = vmatmul.bf16.gmra.mxu0 %v1696
    %v3541 = vpop.f32.mrf.mxu0
    %v3542 = vadd.f32 %v3513, %v3541
    %v3543 = vpop.f32.mrf.mxu0
    %v3544 = vadd.f32 %v3515, %v3543
    %3545 = vmatmul.bf16.gmra.mxu0 %v1699
    %v3546 = vpop.f32.mrf.mxu0
    %v3547 = vadd.f32 %v3518, %v3546
    %v3548 = vpop.f32.mrf.mxu0
    %v3549 = vadd.f32 %v3520, %v3548
    %3550 = vmatmul.bf16.gmra.mxu0 %v3496
    %v3551 = vpop.f32.mrf.mxu0
    %v3552 = vadd.f32 %v3523, %v3551
    %v3553 = vpop.f32.mrf.mxu0
    %v3554 = vadd.f32 %v3525, %v3553
    %3555 = vdwg.mxu0
    %3556 = vmatpush.bf16.msra.mxu0 %v3450
    %3557 = vmatpush.bf16.msra.mxu0 %v3448
    %3558 = vmatpush.bf16.msra.mxu0 %v3446
    %3559 = vmatpush.bf16.msra.mxu0 %v3444
    %3560 = vmatpush.bf16.msra.mxu0 %v3442
    %3561 = vmatpush.bf16.msra.mxu0 %v3440
    %3562 = vmatpush.bf16.msra.mxu0 %v3438
    %3563 = vmatpush.bf16.msra.mxu0 %v3436
    %3564 = vmatmul.bf16.gmra.mxu0 %v1529
    %v3565 = vpop.f32.mrf.mxu0
    %v3566 = vadd.f32 0.0, %v3565
    %v3567 = vpop.f32.mrf.mxu0
    %v3568 = vadd.f32 0.0, %v3567
    %3569 = vmatmul.bf16.gmra.mxu0 %v1531
    %v3570 = vpop.f32.mrf.mxu0
    %v3571 = vadd.f32 0.0, %v3570
    %v3572 = vpop.f32.mrf.mxu0
    %v3573 = vadd.f32 0.0, %v3572
    %3574 = vmatmul.bf16.gmra.mxu0 %v1533
    %v3575 = vpop.f32.mrf.mxu0
    %v3576 = vadd.f32 0.0, %v3575
    %v3577 = vpop.f32.mrf.mxu0
    %v3578 = vadd.f32 0.0, %v3577
    %3579 = vmatmul.bf16.gmra.mxu0 %v3342
    %v3580 = vpop.f32.mrf.mxu0
    %v3581 = vadd.f32 0.0, %v3580
    %v3582 = vpop.f32.mrf.mxu0
    %v3583 = vadd.f32 0.0, %v3582
    %3584 = vdwg.mxu0
    %3585 = vmatpush.bf16.msra.mxu0 0
    %3586 = vmatpush.bf16.msra.mxu0 %v3464
    %3587 = vmatpush.bf16.msra.mxu0 %v3462
    %3588 = vmatpush.bf16.msra.mxu0 %v3460
    %3589 = vmatpush.bf16.msra.mxu0 %v3458
    %3590 = vmatpush.bf16.msra.mxu0 %v3456
    %3591 = vmatpush.bf16.msra.mxu0 %v3454
    %3592 = vmatpush.bf16.msra.mxu0 %v3452
    %3593 = vmatmul.bf16.gmra.mxu0 %v1693
    %v3594 = vpop.f32.mrf.mxu0
    %v3595 = vadd.f32 %v3566, %v3594
    %v3596 = vpop.f32.mrf.mxu0
    %v3597 = vadd.f32 %v3568, %v3596
    %3598 = vmatmul.bf16.gmra.mxu0 %v1696
    %v3599 = vpop.f32.mrf.mxu0
    %v3600 = vadd.f32 %v3571, %v3599
    %v3601 = vpop.f32.mrf.mxu0
    %v3602 = vadd.f32 %v3573, %v3601
    %3603 = vmatmul.bf16.gmra.mxu0 %v1699
    %v3604 = vpop.f32.mrf.mxu0
    %v3605 = vadd.f32 %v3576, %v3604
    %v3606 = vpop.f32.mrf.mxu0
    %v3607 = vadd.f32 %v3578, %v3606
    %3608 = vmatmul.bf16.gmra.mxu0 %v3496
    %v3609 = vpop.f32.mrf.mxu0
    %v3610 = vadd.f32 %v3581, %v3609
    %v3611 = vpop.f32.mrf.mxu0
    %v3612 = vadd.f32 %v3583, %v3611
    %3613 = vdwg.mxu0
    %s3614 = scalar_lea.vmem [#allocation6], 720
    %v3615 = vld [vmem:[%s3614] sm:$0xff]
    %v3616 = vld [vmem:[%s3614 + $0x8] sm:$0xff]
    %v3617 = vld [vmem:[%s3614 + $0x10] sm:$0xff]
    %v3618 = vld [vmem:[%s3614 + $0x18] sm:$0xff]
    %v3619 = vld [vmem:[%s3614 + $0x20] sm:$0xff]
    %v3620 = vld [vmem:[%s3614 + $0x28] sm:$0xff]
    %v3621 = vld [vmem:[%s3614 + $0x30] sm:$0xff]
    %v3622 = vld [vmem:[%s3614 + $0x38] sm:$0xff]
    %v3623 = vld [vmem:[%s3614 + $0x40] sm:$0xff]
    %v3624 = vld [vmem:[%s3614 + $0x48] sm:$0xff]
    %v3625 = vld [vmem:[%s3614 + $0x50] sm:$0xff]
    %v3626 = vld [vmem:[%s3614 + $0x58] sm:$0xff]
    %v3627 = vld [vmem:[%s3614 + $0x60] sm:$0xff]
    %v3628 = vld [vmem:[%s3614 + $0x68] sm:$0xff]
    %v3629 = vld [vmem:[%s3614 + $0x70] sm:$0xff]
    %v3630 = vld [vmem:[%s3614 + $0x78] sm:$0xff]
    %v3631 = vld [vmem:[%s3614 + $0x80] sm:$0xff]
    %v3632 = vld [vmem:[%s3614 + $0x88] sm:$0xff]
    %v3633 = vld [vmem:[%s3614 + $0x90] sm:$0xff]
    %v3634 = vld [vmem:[%s3614 + $0x98] sm:$0xff]
    %v3635 = vld [vmem:[%s3614 + $0xa0] sm:$0xff]
    %v3636 = vld [vmem:[%s3614 + $0xa8] sm:$0xff]
    %v3637 = vld [vmem:[%s3614 + $0xb0] sm:$0xff]
    %v3638 = vld [vmem:[%s3614 + $0xb8] sm:$0xff]
    %v3639 = vld [vmem:[%s3614 + $0xc0] sm:$0xff]
    %v3640 = vld [vmem:[%s3614 + $0xc8] sm:$0xff]
    %v3641 = vld [vmem:[%s3614 + $0xd0] sm:$0xff]
    %v3642 = vld [vmem:[%s3614 + $0xd8] sm:$0xff]
    %v3643 = vld [vmem:[%s3614 + $0xe0] sm:$0xff]
    %v3644 = vld [vmem:[%s3614 + $0xe8] sm:$0xff]
    %v3675 = vunpack.c.l.b16 %v3615
    %v3676 = vunpack.c.h.b16 %v3615
    %v3677 = vunpack.c.l.b16 %v3616
    %v3678 = vunpack.c.h.b16 %v3616
    %v3679 = vunpack.c.l.b16 %v3617
    %v3680 = vunpack.c.h.b16 %v3617
    %v3681 = vunpack.c.l.b16 %v3618
    %v3682 = vunpack.c.h.b16 %v3618
    %v3683 = vunpack.c.l.b16 %v3619
    %v3684 = vunpack.c.h.b16 %v3619
    %v3685 = vunpack.c.l.b16 %v3620
    %v3686 = vunpack.c.h.b16 %v3620
    %v3687 = vunpack.c.l.b16 %v3621
    %v3688 = vunpack.c.h.b16 %v3621
    %v3689 = vunpack.c.l.b16 %v3622
    %v3690 = vunpack.c.h.b16 %v3622
    %v3691 = vunpack.c.l.b16 %v3623
    %v3692 = vunpack.c.h.b16 %v3623
    %v3693 = vunpack.c.l.b16 %v3624
    %v3694 = vunpack.c.h.b16 %v3624
    %v3695 = vunpack.c.l.b16 %v3625
    %v3696 = vunpack.c.h.b16 %v3625
    %v3697 = vunpack.c.l.b16 %v3626
    %v3698 = vunpack.c.h.b16 %v3626
    %v3699 = vunpack.c.l.b16 %v3627
    %v3700 = vunpack.c.h.b16 %v3627
    %v3701 = vunpack.c.l.b16 %v3628
    %v3702 = vunpack.c.h.b16 %v3628
    %v3703 = vunpack.c.l.b16 %v3629
    %v3704 = vunpack.c.h.b16 %v3629
    %v3705 = vunpack.c.l.b16 %v3630
    %v3706 = vunpack.c.h.b16 %v3630
    %v3707 = vunpack.c.l.b16 %v3631
    %v3708 = vunpack.c.h.b16 %v3631
    %v3709 = vunpack.c.l.b16 %v3632
    %v3710 = vunpack.c.h.b16 %v3632
    %v3711 = vunpack.c.l.b16 %v3633
    %v3712 = vunpack.c.h.b16 %v3633
    %v3713 = vunpack.c.l.b16 %v3634
    %v3714 = vunpack.c.h.b16 %v3634
    %v3715 = vunpack.c.l.b16 %v3635
    %v3716 = vunpack.c.h.b16 %v3635
    %v3717 = vunpack.c.l.b16 %v3636
    %v3718 = vunpack.c.h.b16 %v3636
    %v3719 = vunpack.c.l.b16 %v3637
    %v3720 = vunpack.c.h.b16 %v3637
    %v3721 = vunpack.c.l.b16 %v3638
    %v3722 = vunpack.c.h.b16 %v3638
    %v3723 = vunpack.c.l.b16 %v3639
    %v3724 = vunpack.c.h.b16 %v3639
    %v3725 = vunpack.c.l.b16 %v3640
    %v3726 = vunpack.c.h.b16 %v3640
    %v3727 = vunpack.c.l.b16 %v3641
    %v3728 = vunpack.c.h.b16 %v3641
    %v3729 = vunpack.c.l.b16 %v3642
    %v3730 = vunpack.c.h.b16 %v3642
    %v3731 = vunpack.c.l.b16 %v3643
    %v3732 = vunpack.c.h.b16 %v3643
    %v3733 = vunpack.c.l.b16 %v3644
    %v3734 = vunpack.c.h.b16 %v3644
    %v3735 = vpack.c.b16 %v3677, %v3675
    %v3736 = vpack.c.b16 %v3678, %v3676
    %v3737 = vpack.c.b16 %v3681, %v3679
    %v3738 = vpack.c.b16 %v3682, %v3680
    %v3739 = vpack.c.b16 %v3685, %v3683
    %v3740 = vpack.c.b16 %v3686, %v3684
    %v3741 = vpack.c.b16 %v3689, %v3687
    %v3742 = vpack.c.b16 %v3690, %v3688
    %v3743 = vpack.c.b16 %v3693, %v3691
    %v3744 = vpack.c.b16 %v3694, %v3692
    %v3745 = vpack.c.b16 %v3697, %v3695
    %v3746 = vpack.c.b16 %v3698, %v3696
    %v3747 = vpack.c.b16 %v3701, %v3699
    %v3748 = vpack.c.b16 %v3702, %v3700
    %v3749 = vpack.c.b16 %v3705, %v3703
    %v3750 = vpack.c.b16 %v3706, %v3704
    %v3751 = vpack.c.b16 %v3709, %v3707
    %v3752 = vpack.c.b16 %v3710, %v3708
    %v3753 = vpack.c.b16 %v3713, %v3711
    %v3754 = vpack.c.b16 %v3714, %v3712
    %v3755 = vpack.c.b16 %v3717, %v3715
    %v3756 = vpack.c.b16 %v3718, %v3716
    %v3757 = vpack.c.b16 %v3721, %v3719
    %v3758 = vpack.c.b16 %v3722, %v3720
    %v3759 = vpack.c.b16 %v3725, %v3723
    %v3760 = vpack.c.b16 %v3726, %v3724
    %v3761 = vpack.c.b16 %v3729, %v3727
    %v3762 = vpack.c.b16 %v3730, %v3728
    %v3763 = vpack.c.b16 %v3733, %v3731
    %v3764 = vpack.c.b16 %v3734, %v3732
    %3795 = vmatpush.bf16.msra.mxu0 %v3749
    %3796 = vmatpush.bf16.msra.mxu0 %v3747
    %3797 = vmatpush.bf16.msra.mxu0 %v3745
    %3798 = vmatpush.bf16.msra.mxu0 %v3743
    %3799 = vmatpush.bf16.msra.mxu0 %v3741
    %3800 = vmatpush.bf16.msra.mxu0 %v3739
    %3801 = vmatpush.bf16.msra.mxu0 %v3737
    %3802 = vmatpush.bf16.msra.mxu0 %v3735
    %3803 = vmatmul.bf16.gmra.mxu0 %v1529
    %v3804 = vpop.f32.mrf.mxu0
    %v3805 = vadd.f32 0.0, %v3804
    %v3806 = vpop.f32.mrf.mxu0
    %v3807 = vadd.f32 0.0, %v3806
    %3808 = vmatmul.bf16.gmra.mxu0 %v1531
    %v3809 = vpop.f32.mrf.mxu0
    %v3810 = vadd.f32 0.0, %v3809
    %v3811 = vpop.f32.mrf.mxu0
    %v3812 = vadd.f32 0.0, %v3811
    %3813 = vmatmul.bf16.gmra.mxu0 %v1533
    %v3814 = vpop.f32.mrf.mxu0
    %v3815 = vadd.f32 0.0, %v3814
    %v3816 = vpop.f32.mrf.mxu0
    %v3817 = vadd.f32 0.0, %v3816
    %3818 = vmatmul.bf16.gmra.mxu0 %v3342
    %v3819 = vpop.f32.mrf.mxu0
    %v3820 = vadd.f32 0.0, %v3819
    %v3821 = vpop.f32.mrf.mxu0
    %v3822 = vadd.f32 0.0, %v3821
    %3823 = vdwg.mxu0
    %3824 = vmatpush.bf16.msra.mxu0 0
    %3825 = vmatpush.bf16.msra.mxu0 %v3763
    %3826 = vmatpush.bf16.msra.mxu0 %v3761
    %3827 = vmatpush.bf16.msra.mxu0 %v3759
    %3828 = vmatpush.bf16.msra.mxu0 %v3757
    %3829 = vmatpush.bf16.msra.mxu0 %v3755
    %3830 = vmatpush.bf16.msra.mxu0 %v3753
    %3831 = vmatpush.bf16.msra.mxu0 %v3751
    %3832 = vmatmul.bf16.gmra.mxu0 %v1693
    %v3833 = vpop.f32.mrf.mxu0
    %v3834 = vadd.f32 %v3805, %v3833
    %v3835 = vpop.f32.mrf.mxu0
    %v3836 = vadd.f32 %v3807, %v3835
    %3837 = vmatmul.bf16.gmra.mxu0 %v1696
    %v3838 = vpop.f32.mrf.mxu0
    %v3839 = vadd.f32 %v3810, %v3838
    %v3840 = vpop.f32.mrf.mxu0
    %v3841 = vadd.f32 %v3812, %v3840
    %3842 = vmatmul.bf16.gmra.mxu0 %v1699
    %v3843 = vpop.f32.mrf.mxu0
    %v3844 = vadd.f32 %v3815, %v3843
    %v3845 = vpop.f32.mrf.mxu0
    %v3846 = vadd.f32 %v3817, %v3845
    %3847 = vmatmul.bf16.gmra.mxu0 %v3496
    %v3848 = vpop.f32.mrf.mxu0
    %v3849 = vadd.f32 %v3820, %v3848
    %v3850 = vpop.f32.mrf.mxu0
    %v3851 = vadd.f32 %v3822, %v3850
    %3852 = vdwg.mxu0
    %3853 = vmatpush.bf16.msra.mxu0 %v3750
    %3854 = vmatpush.bf16.msra.mxu0 %v3748
    %3855 = vmatpush.bf16.msra.mxu0 %v3746
    %3856 = vmatpush.bf16.msra.mxu0 %v3744
    %3857 = vmatpush.bf16.msra.mxu0 %v3742
    %3858 = vmatpush.bf16.msra.mxu0 %v3740
    %3859 = vmatpush.bf16.msra.mxu0 %v3738
    %3860 = vmatpush.bf16.msra.mxu0 %v3736
    %3861 = vmatmul.bf16.gmra.mxu0 %v1529
    %v3862 = vpop.f32.mrf.mxu0
    %v3863 = vadd.f32 0.0, %v3862
    %v3864 = vpop.f32.mrf.mxu0
    %v3865 = vadd.f32 0.0, %v3864
    %3866 = vmatmul.bf16.gmra.mxu0 %v1531
    %v3867 = vpop.f32.mrf.mxu0
    %v3868 = vadd.f32 0.0, %v3867
    %v3869 = vpop.f32.mrf.mxu0
    %v3870 = vadd.f32 0.0, %v3869
    %3871 = vmatmul.bf16.gmra.mxu0 %v1533
    %v3872 = vpop.f32.mrf.mxu0
    %v3873 = vadd.f32 0.0, %v3872
    %v3874 = vpop.f32.mrf.mxu0
    %v3875 = vadd.f32 0.0, %v3874
    %3876 = vmatmul.bf16.gmra.mxu0 %v3342
    %v3877 = vpop.f32.mrf.mxu0
    %v3878 = vadd.f32 0.0, %v3877
    %v3879 = vpop.f32.mrf.mxu0
    %v3880 = vadd.f32 0.0, %v3879
    %3881 = vdwg.mxu0
    %3882 = vmatpush.bf16.msra.mxu0 0
    %3883 = vmatpush.bf16.msra.mxu0 %v3764
    %3884 = vmatpush.bf16.msra.mxu0 %v3762
    %3885 = vmatpush.bf16.msra.mxu0 %v3760
    %3886 = vmatpush.bf16.msra.mxu0 %v3758
    %3887 = vmatpush.bf16.msra.mxu0 %v3756
    %3888 = vmatpush.bf16.msra.mxu0 %v3754
    %3889 = vmatpush.bf16.msra.mxu0 %v3752
    %3890 = vmatmul.bf16.gmra.mxu0 %v1693
    %v3891 = vpop.f32.mrf.mxu0
    %v3892 = vadd.f32 %v3863, %v3891
    %v3893 = vpop.f32.mrf.mxu0
    %v3894 = vadd.f32 %v3865, %v3893
    %3895 = vmatmul.bf16.gmra.mxu0 %v1696
    %v3896 = vpop.f32.mrf.mxu0
    %v3897 = vadd.f32 %v3868, %v3896
    %v3898 = vpop.f32.mrf.mxu0
    %v3899 = vadd.f32 %v3870, %v3898
    %3900 = vmatmul.bf16.gmra.mxu0 %v1699
    %v3901 = vpop.f32.mrf.mxu0
    %v3902 = vadd.f32 %v3873, %v3901
    %v3903 = vpop.f32.mrf.mxu0
    %v3904 = vadd.f32 %v3875, %v3903
    %3905 = vmatmul.bf16.gmra.mxu0 %v3496
    %v3906 = vpop.f32.mrf.mxu0
    %v3907 = vadd.f32 %v3878, %v3906
    %v3908 = vpop.f32.mrf.mxu0
    %v3909 = vadd.f32 %v3880, %v3908
    %3910 = vdwg.mxu0
    %v3911 = vadd.f32 %v3276, %v3537
    %v3912 = vadd.f32 %v3277, %v3595
    %v3913 = vadd.f32 %v3278, %v3539
    %v3914 = vadd.f32 %v3279, %v3597
    %v3915 = vadd.f32 %v3280, %v3542
    %v3916 = vadd.f32 %v3281, %v3600
    %v3917 = vadd.f32 %v3282, %v3544
    %v3918 = vadd.f32 %v3283, %v3602
    %v3919 = vadd.f32 %v3284, %v3547
    %v3920 = vadd.f32 %v3285, %v3605
    %v3921 = vadd.f32 %v3286, %v3549
    %v3922 = vadd.f32 %v3287, %v3607
    %v3923 = vadd.f32 %v3288, %v3552
    %v3924 = vadd.f32 %v3289, %v3610
    %v3925 = vadd.f32 %v3290, %v3554
    %v3926 = vadd.f32 %v3291, %v3612
    %v3927 = vadd.f32 %v3292, %v3834
    %v3928 = vadd.f32 %v3293, %v3892
    %v3929 = vadd.f32 %v3294, %v3836
    %v3930 = vadd.f32 %v3295, %v3894
    %v3931 = vadd.f32 %v3296, %v3839
    %v3932 = vadd.f32 %v3297, %v3897
    %v3933 = vadd.f32 %v3298, %v3841
    %v3934 = vadd.f32 %v3299, %v3899
    %v3935 = vadd.f32 %v3300, %v3844
    %v3936 = vadd.f32 %v3301, %v3902
    %v3937 = vadd.f32 %v3302, %v3846
    %v3938 = vadd.f32 %v3303, %v3904
    %v3939 = vadd.f32 %v3304, %v3849
    %v3940 = vadd.f32 %v3305, %v3907
    %v3941 = vadd.f32 %v3306, %v3851
    %v3942 = vadd.f32 %v3307, %v3909
    %s3943 = scalar_lea.vmem [#allocation4], 960
    %v3944 = vld [vmem:[%s3943] sm:$0xff]
    %v3945 = vld [vmem:[%s3943 + $0x8] sm:$0xff]
    %v3946 = vld [vmem:[%s3943 + $0x10] sm:$0xff]
    %v3947 = vld [vmem:[%s3943 + $0x18] sm:$0xff]
    %v3948 = vld [vmem:[%s3943 + $0x20] sm:$0xff]
    %v3949 = vld [vmem:[%s3943 + $0x28] sm:$0xff]
    %v3950 = vld [vmem:[%s3943 + $0x30] sm:$0xff]
    %v3951 = vld [vmem:[%s3943 + $0x38] sm:$0xff]
    %v3952 = vld [vmem:[%s3943 + $0x40] sm:$0xff]
    %v3953 = vld [vmem:[%s3943 + $0x48] sm:$0xff]
    %v3954 = vld [vmem:[%s3943 + $0x50] sm:$0xff]
    %v3955 = vld [vmem:[%s3943 + $0x58] sm:$0xff]
    %v3956 = vld [vmem:[%s3943 + $0x60] sm:$0xff]
    %v3957 = vld [vmem:[%s3943 + $0x68] sm:$0xff]
    %v3958 = vld [vmem:[%s3943 + $0x70] sm:$0xff]
    %v3959 = vld [vmem:[%s3943 + $0x78] sm:$0xff]
    %v3960 = vld [vmem:[%s3943 + $0x80] sm:$0xff]
    %v3961 = vld [vmem:[%s3943 + $0x88] sm:$0xff]
    %v3962 = vld [vmem:[%s3943 + $0x90] sm:$0xff]
    %v3963 = vld [vmem:[%s3943 + $0x98] sm:$0xff]
    %v3964 = vld [vmem:[%s3943 + $0xa0] sm:$0xff]
    %v3965 = vld [vmem:[%s3943 + $0xa8] sm:$0xff]
    %v3966 = vld [vmem:[%s3943 + $0xb0] sm:$0xff]
    %v3967 = vld [vmem:[%s3943 + $0xb8] sm:$0xff]
    %v3968 = vld [vmem:[%s3943 + $0xc0] sm:$0xff]
    %v3969 = vld [vmem:[%s3943 + $0xc8] sm:$0xff]
    %v3970 = vld [vmem:[%s3943 + $0xd0] sm:$0xff]
    %v3971 = vld [vmem:[%s3943 + $0xd8] sm:$0xff]
    %v3972 = vld [vmem:[%s3943 + $0xe0] sm:$0xff]
    %v3973 = vld [vmem:[%s3943 + $0xe8] sm:$0xff]
    %v3975 = vunpack.c.l.b16 %v1411
    %v3976 = vunpack.c.h.b16 %v1411
    %v3977 = vpack.c.b16 %v3975, %v3340
    %v3978 = vpack.c.b16 %v3976, %v3341
    %v4010 = vunpack.c.l.b16 %v3944
    %v4011 = vunpack.c.h.b16 %v3944
    %v4012 = vunpack.c.l.b16 %v3945
    %v4013 = vunpack.c.h.b16 %v3945
    %v4014 = vunpack.c.l.b16 %v3946
    %v4015 = vunpack.c.h.b16 %v3946
    %v4016 = vunpack.c.l.b16 %v3947
    %v4017 = vunpack.c.h.b16 %v3947
    %v4018 = vunpack.c.l.b16 %v3948
    %v4019 = vunpack.c.h.b16 %v3948
    %v4020 = vunpack.c.l.b16 %v3949
    %v4021 = vunpack.c.h.b16 %v3949
    %v4022 = vunpack.c.l.b16 %v3950
    %v4023 = vunpack.c.h.b16 %v3950
    %v4024 = vunpack.c.l.b16 %v3951
    %v4025 = vunpack.c.h.b16 %v3951
    %v4026 = vunpack.c.l.b16 %v3952
    %v4027 = vunpack.c.h.b16 %v3952
    %v4028 = vunpack.c.l.b16 %v3953
    %v4029 = vunpack.c.h.b16 %v3953
    %v4030 = vunpack.c.l.b16 %v3954
    %v4031 = vunpack.c.h.b16 %v3954
    %v4032 = vunpack.c.l.b16 %v3955
    %v4033 = vunpack.c.h.b16 %v3955
    %v4034 = vunpack.c.l.b16 %v3956
    %v4035 = vunpack.c.h.b16 %v3956
    %v4036 = vunpack.c.l.b16 %v3957
    %v4037 = vunpack.c.h.b16 %v3957
    %v4038 = vunpack.c.l.b16 %v3958
    %v4039 = vunpack.c.h.b16 %v3958
    %v4040 = vunpack.c.l.b16 %v3959
    %v4041 = vunpack.c.h.b16 %v3959
    %v4042 = vunpack.c.l.b16 %v3960
    %v4043 = vunpack.c.h.b16 %v3960
    %v4044 = vunpack.c.l.b16 %v3961
    %v4045 = vunpack.c.h.b16 %v3961
    %v4046 = vunpack.c.l.b16 %v3962
    %v4047 = vunpack.c.h.b16 %v3962
    %v4048 = vunpack.c.l.b16 %v3963
    %v4049 = vunpack.c.h.b16 %v3963
    %v4050 = vunpack.c.l.b16 %v3964
    %v4051 = vunpack.c.h.b16 %v3964
    %v4052 = vunpack.c.l.b16 %v3965
    %v4053 = vunpack.c.h.b16 %v3965
    %v4054 = vunpack.c.l.b16 %v3966
    %v4055 = vunpack.c.h.b16 %v3966
    %v4056 = vunpack.c.l.b16 %v3967
    %v4057 = vunpack.c.h.b16 %v3967
    %v4058 = vunpack.c.l.b16 %v3968
    %v4059 = vunpack.c.h.b16 %v3968
    %v4060 = vunpack.c.l.b16 %v3969
    %v4061 = vunpack.c.h.b16 %v3969
    %v4062 = vunpack.c.l.b16 %v3970
    %v4063 = vunpack.c.h.b16 %v3970
    %v4064 = vunpack.c.l.b16 %v3971
    %v4065 = vunpack.c.h.b16 %v3971
    %v4066 = vunpack.c.l.b16 %v3972
    %v4067 = vunpack.c.h.b16 %v3972
    %v4068 = vunpack.c.l.b16 %v3973
    %v4069 = vunpack.c.h.b16 %v3973
    %v4070 = vpack.c.b16 %v4012, %v4010
    %v4071 = vpack.c.b16 %v4013, %v4011
    %v4072 = vpack.c.b16 %v4016, %v4014
    %v4073 = vpack.c.b16 %v4017, %v4015
    %v4074 = vpack.c.b16 %v4020, %v4018
    %v4075 = vpack.c.b16 %v4021, %v4019
    %v4076 = vpack.c.b16 %v4024, %v4022
    %v4077 = vpack.c.b16 %v4025, %v4023
    %v4078 = vpack.c.b16 %v4028, %v4026
    %v4079 = vpack.c.b16 %v4029, %v4027
    %v4080 = vpack.c.b16 %v4032, %v4030
    %v4081 = vpack.c.b16 %v4033, %v4031
    %v4082 = vpack.c.b16 %v4036, %v4034
    %v4083 = vpack.c.b16 %v4037, %v4035
    %v4084 = vpack.c.b16 %v4040, %v4038
    %v4085 = vpack.c.b16 %v4041, %v4039
    %v4086 = vpack.c.b16 %v4044, %v4042
    %v4087 = vpack.c.b16 %v4045, %v4043
    %v4088 = vpack.c.b16 %v4048, %v4046
    %v4089 = vpack.c.b16 %v4049, %v4047
    %v4090 = vpack.c.b16 %v4052, %v4050
    %v4091 = vpack.c.b16 %v4053, %v4051
    %v4092 = vpack.c.b16 %v4056, %v4054
    %v4093 = vpack.c.b16 %v4057, %v4055
    %v4094 = vpack.c.b16 %v4060, %v4058
    %v4095 = vpack.c.b16 %v4061, %v4059
    %v4096 = vpack.c.b16 %v4064, %v4062
    %v4097 = vpack.c.b16 %v4065, %v4063
    %v4098 = vpack.c.b16 %v4068, %v4066
    %v4099 = vpack.c.b16 %v4069, %v4067
    %v4131 = vsel %vm411, %v3978, 0
    %4133 = vmatpush.bf16.msra.mxu0 %v4084
    %4134 = vmatpush.bf16.msra.mxu0 %v4082
    %4135 = vmatpush.bf16.msra.mxu0 %v4080
    %4136 = vmatpush.bf16.msra.mxu0 %v4078
    %4137 = vmatpush.bf16.msra.mxu0 %v4076
    %4138 = vmatpush.bf16.msra.mxu0 %v4074
    %4139 = vmatpush.bf16.msra.mxu0 %v4072
    %4140 = vmatpush.bf16.msra.mxu0 %v4070
    %4141 = vmatmul.bf16.gmra.mxu0 %v2121
    %v4142 = vpop.f32.mrf.mxu0
    %v4143 = vadd.f32 0.0, %v4142
    %v4144 = vpop.f32.mrf.mxu0
    %v4145 = vadd.f32 0.0, %v4144
    %4146 = vmatmul.bf16.gmra.mxu0 %v2123
    %v4147 = vpop.f32.mrf.mxu0
    %v4148 = vadd.f32 0.0, %v4147
    %v4149 = vpop.f32.mrf.mxu0
    %v4150 = vadd.f32 0.0, %v4149
    %4151 = vmatmul.bf16.gmra.mxu0 %v2707
    %v4152 = vpop.f32.mrf.mxu0
    %v4153 = vadd.f32 0.0, %v4152
    %v4154 = vpop.f32.mrf.mxu0
    %v4155 = vadd.f32 0.0, %v4154
    %4156 = vmatmul.bf16.gmra.mxu0 %v3977
    %v4157 = vpop.f32.mrf.mxu0
    %v4158 = vadd.f32 0.0, %v4157
    %v4159 = vpop.f32.mrf.mxu0
    %v4160 = vadd.f32 0.0, %v4159
    %4161 = vdwg.mxu0
    %4162 = vmatpush.bf16.msra.mxu0 0
    %4163 = vmatpush.bf16.msra.mxu0 %v4098
    %4164 = vmatpush.bf16.msra.mxu0 %v4096
    %4165 = vmatpush.bf16.msra.mxu0 %v4094
    %4166 = vmatpush.bf16.msra.mxu0 %v4092
    %4167 = vmatpush.bf16.msra.mxu0 %v4090
    %4168 = vmatpush.bf16.msra.mxu0 %v4088
    %4169 = vmatpush.bf16.msra.mxu0 %v4086
    %4170 = vmatmul.bf16.gmra.mxu0 %v2286
    %v4171 = vpop.f32.mrf.mxu0
    %v4172 = vadd.f32 %v4143, %v4171
    %v4173 = vpop.f32.mrf.mxu0
    %v4174 = vadd.f32 %v4145, %v4173
    %4175 = vmatmul.bf16.gmra.mxu0 %v2289
    %v4176 = vpop.f32.mrf.mxu0
    %v4177 = vadd.f32 %v4148, %v4176
    %v4178 = vpop.f32.mrf.mxu0
    %v4179 = vadd.f32 %v4150, %v4178
    %4180 = vmatmul.bf16.gmra.mxu0 %v2861
    %v4181 = vpop.f32.mrf.mxu0
    %v4182 = vadd.f32 %v4153, %v4181
    %v4183 = vpop.f32.mrf.mxu0
    %v4184 = vadd.f32 %v4155, %v4183
    %4185 = vmatmul.bf16.gmra.mxu0 %v4131
    %v4186 = vpop.f32.mrf.mxu0
    %v4187 = vadd.f32 %v4158, %v4186
    %v4188 = vpop.f32.mrf.mxu0
    %v4189 = vadd.f32 %v4160, %v4188
    %4190 = vdwg.mxu0
    %4191 = vmatpush.bf16.msra.mxu0 %v4085
    %4192 = vmatpush.bf16.msra.mxu0 %v4083
    %4193 = vmatpush.bf16.msra.mxu0 %v4081
    %4194 = vmatpush.bf16.msra.mxu0 %v4079
    %4195 = vmatpush.bf16.msra.mxu0 %v4077
    %4196 = vmatpush.bf16.msra.mxu0 %v4075
    %4197 = vmatpush.bf16.msra.mxu0 %v4073
    %4198 = vmatpush.bf16.msra.mxu0 %v4071
    %4199 = vmatmul.bf16.gmra.mxu0 %v2121
    %v4200 = vpop.f32.mrf.mxu0
    %v4201 = vadd.f32 0.0, %v4200
    %v4202 = vpop.f32.mrf.mxu0
    %v4203 = vadd.f32 0.0, %v4202
    %4204 = vmatmul.bf16.gmra.mxu0 %v2123
    %v4205 = vpop.f32.mrf.mxu0
    %v4206 = vadd.f32 0.0, %v4205
    %v4207 = vpop.f32.mrf.mxu0
    %v4208 = vadd.f32 0.0, %v4207
    %4209 = vmatmul.bf16.gmra.mxu0 %v2707
    %v4210 = vpop.f32.mrf.mxu0
    %v4211 = vadd.f32 0.0, %v4210
    %v4212 = vpop.f32.mrf.mxu0
    %v4213 = vadd.f32 0.0, %v4212
    %4214 = vmatmul.bf16.gmra.mxu0 %v3977
    %v4215 = vpop.f32.mrf.mxu0
    %v4216 = vadd.f32 0.0, %v4215
    %v4217 = vpop.f32.mrf.mxu0
    %v4218 = vadd.f32 0.0, %v4217
    %4219 = vdwg.mxu0
    %4220 = vmatpush.bf16.msra.mxu0 0
    %4221 = vmatpush.bf16.msra.mxu0 %v4099
    %4222 = vmatpush.bf16.msra.mxu0 %v4097
    %4223 = vmatpush.bf16.msra.mxu0 %v4095
    %4224 = vmatpush.bf16.msra.mxu0 %v4093
    %4225 = vmatpush.bf16.msra.mxu0 %v4091
    %4226 = vmatpush.bf16.msra.mxu0 %v4089
    %4227 = vmatpush.bf16.msra.mxu0 %v4087
    %4228 = vmatmul.bf16.gmra.mxu0 %v2286
    %v4229 = vpop.f32.mrf.mxu0
    %v4230 = vadd.f32 %v4201, %v4229
    %v4231 = vpop.f32.mrf.mxu0
    %v4232 = vadd.f32 %v4203, %v4231
    %4233 = vmatmul.bf16.gmra.mxu0 %v2289
    %v4234 = vpop.f32.mrf.mxu0
    %v4235 = vadd.f32 %v4206, %v4234
    %v4236 = vpop.f32.mrf.mxu0
    %v4237 = vadd.f32 %v4208, %v4236
    %4238 = vmatmul.bf16.gmra.mxu0 %v2861
    %v4239 = vpop.f32.mrf.mxu0
    %v4240 = vadd.f32 %v4211, %v4239
    %v4241 = vpop.f32.mrf.mxu0
    %v4242 = vadd.f32 %v4213, %v4241
    %4243 = vmatmul.bf16.gmra.mxu0 %v4131
    %v4244 = vpop.f32.mrf.mxu0
    %v4245 = vadd.f32 %v4216, %v4244
    %v4246 = vpop.f32.mrf.mxu0
    %v4247 = vadd.f32 %v4218, %v4246
    %4248 = vdwg.mxu0
    %s4249 = scalar_lea.vmem [#allocation6], 960
    %v4250 = vld [vmem:[%s4249] sm:$0xff]
    %v4251 = vld [vmem:[%s4249 + $0x8] sm:$0xff]
    %v4252 = vld [vmem:[%s4249 + $0x10] sm:$0xff]
    %v4253 = vld [vmem:[%s4249 + $0x18] sm:$0xff]
    %v4254 = vld [vmem:[%s4249 + $0x20] sm:$0xff]
    %v4255 = vld [vmem:[%s4249 + $0x28] sm:$0xff]
    %v4256 = vld [vmem:[%s4249 + $0x30] sm:$0xff]
    %v4257 = vld [vmem:[%s4249 + $0x38] sm:$0xff]
    %v4258 = vld [vmem:[%s4249 + $0x40] sm:$0xff]
    %v4259 = vld [vmem:[%s4249 + $0x48] sm:$0xff]
    %v4260 = vld [vmem:[%s4249 + $0x50] sm:$0xff]
    %v4261 = vld [vmem:[%s4249 + $0x58] sm:$0xff]
    %v4262 = vld [vmem:[%s4249 + $0x60] sm:$0xff]
    %v4263 = vld [vmem:[%s4249 + $0x68] sm:$0xff]
    %v4264 = vld [vmem:[%s4249 + $0x70] sm:$0xff]
    %v4265 = vld [vmem:[%s4249 + $0x78] sm:$0xff]
    %v4266 = vld [vmem:[%s4249 + $0x80] sm:$0xff]
    %v4267 = vld [vmem:[%s4249 + $0x88] sm:$0xff]
    %v4268 = vld [vmem:[%s4249 + $0x90] sm:$0xff]
    %v4269 = vld [vmem:[%s4249 + $0x98] sm:$0xff]
    %v4270 = vld [vmem:[%s4249 + $0xa0] sm:$0xff]
    %v4271 = vld [vmem:[%s4249 + $0xa8] sm:$0xff]
    %v4272 = vld [vmem:[%s4249 + $0xb0] sm:$0xff]
    %v4273 = vld [vmem:[%s4249 + $0xb8] sm:$0xff]
    %v4274 = vld [vmem:[%s4249 + $0xc0] sm:$0xff]
    %v4275 = vld [vmem:[%s4249 + $0xc8] sm:$0xff]
    %v4276 = vld [vmem:[%s4249 + $0xd0] sm:$0xff]
    %v4277 = vld [vmem:[%s4249 + $0xd8] sm:$0xff]
    %v4278 = vld [vmem:[%s4249 + $0xe0] sm:$0xff]
    %v4279 = vld [vmem:[%s4249 + $0xe8] sm:$0xff]
    %v4310 = vunpack.c.l.b16 %v4250
    %v4311 = vunpack.c.h.b16 %v4250
    %v4312 = vunpack.c.l.b16 %v4251
    %v4313 = vunpack.c.h.b16 %v4251
    %v4314 = vunpack.c.l.b16 %v4252
    %v4315 = vunpack.c.h.b16 %v4252
    %v4316 = vunpack.c.l.b16 %v4253
    %v4317 = vunpack.c.h.b16 %v4253
    %v4318 = vunpack.c.l.b16 %v4254
    %v4319 = vunpack.c.h.b16 %v4254
    %v4320 = vunpack.c.l.b16 %v4255
    %v4321 = vunpack.c.h.b16 %v4255
    %v4322 = vunpack.c.l.b16 %v4256
    %v4323 = vunpack.c.h.b16 %v4256
    %v4324 = vunpack.c.l.b16 %v4257
    %v4325 = vunpack.c.h.b16 %v4257
    %v4326 = vunpack.c.l.b16 %v4258
    %v4327 = vunpack.c.h.b16 %v4258
    %v4328 = vunpack.c.l.b16 %v4259
    %v4329 = vunpack.c.h.b16 %v4259
    %v4330 = vunpack.c.l.b16 %v4260
    %v4331 = vunpack.c.h.b16 %v4260
    %v4332 = vunpack.c.l.b16 %v4261
    %v4333 = vunpack.c.h.b16 %v4261
    %v4334 = vunpack.c.l.b16 %v4262
    %v4335 = vunpack.c.h.b16 %v4262
    %v4336 = vunpack.c.l.b16 %v4263
    %v4337 = vunpack.c.h.b16 %v4263
    %v4338 = vunpack.c.l.b16 %v4264
    %v4339 = vunpack.c.h.b16 %v4264
    %v4340 = vunpack.c.l.b16 %v4265
    %v4341 = vunpack.c.h.b16 %v4265
    %v4342 = vunpack.c.l.b16 %v4266
    %v4343 = vunpack.c.h.b16 %v4266
    %v4344 = vunpack.c.l.b16 %v4267
    %v4345 = vunpack.c.h.b16 %v4267
    %v4346 = vunpack.c.l.b16 %v4268
    %v4347 = vunpack.c.h.b16 %v4268
    %v4348 = vunpack.c.l.b16 %v4269
    %v4349 = vunpack.c.h.b16 %v4269
    %v4350 = vunpack.c.l.b16 %v4270
    %v4351 = vunpack.c.h.b16 %v4270
    %v4352 = vunpack.c.l.b16 %v4271
    %v4353 = vunpack.c.h.b16 %v4271
    %v4354 = vunpack.c.l.b16 %v4272
    %v4355 = vunpack.c.h.b16 %v4272
    %v4356 = vunpack.c.l.b16 %v4273
    %v4357 = vunpack.c.h.b16 %v4273
    %v4358 = vunpack.c.l.b16 %v4274
    %v4359 = vunpack.c.h.b16 %v4274
    %v4360 = vunpack.c.l.b16 %v4275
    %v4361 = vunpack.c.h.b16 %v4275
    %v4362 = vunpack.c.l.b16 %v4276
    %v4363 = vunpack.c.h.b16 %v4276
    %v4364 = vunpack.c.l.b16 %v4277
    %v4365 = vunpack.c.h.b16 %v4277
    %v4366 = vunpack.c.l.b16 %v4278
    %v4367 = vunpack.c.h.b16 %v4278
    %v4368 = vunpack.c.l.b16 %v4279
    %v4369 = vunpack.c.h.b16 %v4279
    %v4370 = vpack.c.b16 %v4312, %v4310
    %v4371 = vpack.c.b16 %v4313, %v4311
    %v4372 = vpack.c.b16 %v4316, %v4314
    %v4373 = vpack.c.b16 %v4317, %v4315
    %v4374 = vpack.c.b16 %v4320, %v4318
    %v4375 = vpack.c.b16 %v4321, %v4319
    %v4376 = vpack.c.b16 %v4324, %v4322
    %v4377 = vpack.c.b16 %v4325, %v4323
    %v4378 = vpack.c.b16 %v4328, %v4326
    %v4379 = vpack.c.b16 %v4329, %v4327
    %v4380 = vpack.c.b16 %v4332, %v4330
    %v4381 = vpack.c.b16 %v4333, %v4331
    %v4382 = vpack.c.b16 %v4336, %v4334
    %v4383 = vpack.c.b16 %v4337, %v4335
    %v4384 = vpack.c.b16 %v4340, %v4338
    %v4385 = vpack.c.b16 %v4341, %v4339
    %v4386 = vpack.c.b16 %v4344, %v4342
    %v4387 = vpack.c.b16 %v4345, %v4343
    %v4388 = vpack.c.b16 %v4348, %v4346
    %v4389 = vpack.c.b16 %v4349, %v4347
    %v4390 = vpack.c.b16 %v4352, %v4350
    %v4391 = vpack.c.b16 %v4353, %v4351
    %v4392 = vpack.c.b16 %v4356, %v4354
    %v4393 = vpack.c.b16 %v4357, %v4355
    %v4394 = vpack.c.b16 %v4360, %v4358
    %v4395 = vpack.c.b16 %v4361, %v4359
    %v4396 = vpack.c.b16 %v4364, %v4362
    %v4397 = vpack.c.b16 %v4365, %v4363
    %v4398 = vpack.c.b16 %v4368, %v4366
    %v4399 = vpack.c.b16 %v4369, %v4367
    %4430 = vmatpush.bf16.msra.mxu0 %v4384
    %4431 = vmatpush.bf16.msra.mxu0 %v4382
    %4432 = vmatpush.bf16.msra.mxu0 %v4380
    %4433 = vmatpush.bf16.msra.mxu0 %v4378
    %4434 = vmatpush.bf16.msra.mxu0 %v4376
    %4435 = vmatpush.bf16.msra.mxu0 %v4374
    %4436 = vmatpush.bf16.msra.mxu0 %v4372
    %4437 = vmatpush.bf16.msra.mxu0 %v4370
    %4438 = vmatmul.bf16.gmra.mxu0 %v2121
    %v4439 = vpop.f32.mrf.mxu0
    %v4440 = vadd.f32 0.0, %v4439
    %v4441 = vpop.f32.mrf.mxu0
    %v4442 = vadd.f32 0.0, %v4441
    %4443 = vmatmul.bf16.gmra.mxu0 %v2123
    %v4444 = vpop.f32.mrf.mxu0
    %v4445 = vadd.f32 0.0, %v4444
    %v4446 = vpop.f32.mrf.mxu0
    %v4447 = vadd.f32 0.0, %v4446
    %4448 = vmatmul.bf16.gmra.mxu0 %v2707
    %v4449 = vpop.f32.mrf.mxu0
    %v4450 = vadd.f32 0.0, %v4449
    %v4451 = vpop.f32.mrf.mxu0
    %v4452 = vadd.f32 0.0, %v4451
    %4453 = vmatmul.bf16.gmra.mxu0 %v3977
    %v4454 = vpop.f32.mrf.mxu0
    %v4455 = vadd.f32 0.0, %v4454
    %v4456 = vpop.f32.mrf.mxu0
    %v4457 = vadd.f32 0.0, %v4456
    %4458 = vdwg.mxu0
    %4459 = vmatpush.bf16.msra.mxu0 0
    %4460 = vmatpush.bf16.msra.mxu0 %v4398
    %4461 = vmatpush.bf16.msra.mxu0 %v4396
    %4462 = vmatpush.bf16.msra.mxu0 %v4394
    %4463 = vmatpush.bf16.msra.mxu0 %v4392
    %4464 = vmatpush.bf16.msra.mxu0 %v4390
    %4465 = vmatpush.bf16.msra.mxu0 %v4388
    %4466 = vmatpush.bf16.msra.mxu0 %v4386
    %4467 = vmatmul.bf16.gmra.mxu0 %v2286
    %v4468 = vpop.f32.mrf.mxu0
    %v4469 = vadd.f32 %v4440, %v4468
    %v4470 = vpop.f32.mrf.mxu0
    %v4471 = vadd.f32 %v4442, %v4470
    %4472 = vmatmul.bf16.gmra.mxu0 %v2289
    %v4473 = vpop.f32.mrf.mxu0
    %v4474 = vadd.f32 %v4445, %v4473
    %v4475 = vpop.f32.mrf.mxu0
    %v4476 = vadd.f32 %v4447, %v4475
    %4477 = vmatmul.bf16.gmra.mxu0 %v2861
    %v4478 = vpop.f32.mrf.mxu0
    %v4479 = vadd.f32 %v4450, %v4478
    %v4480 = vpop.f32.mrf.mxu0
    %v4481 = vadd.f32 %v4452, %v4480
    %4482 = vmatmul.bf16.gmra.mxu0 %v4131
    %v4483 = vpop.f32.mrf.mxu0
    %v4484 = vadd.f32 %v4455, %v4483
    %v4485 = vpop.f32.mrf.mxu0
    %v4486 = vadd.f32 %v4457, %v4485
    %4487 = vdwg.mxu0
    %4488 = vmatpush.bf16.msra.mxu0 %v4385
    %4489 = vmatpush.bf16.msra.mxu0 %v4383
    %4490 = vmatpush.bf16.msra.mxu0 %v4381
    %4491 = vmatpush.bf16.msra.mxu0 %v4379
    %4492 = vmatpush.bf16.msra.mxu0 %v4377
    %4493 = vmatpush.bf16.msra.mxu0 %v4375
    %4494 = vmatpush.bf16.msra.mxu0 %v4373
    %4495 = vmatpush.bf16.msra.mxu0 %v4371
    %4496 = vmatmul.bf16.gmra.mxu0 %v2121
    %v4497 = vpop.f32.mrf.mxu0
    %v4498 = vadd.f32 0.0, %v4497
    %v4499 = vpop.f32.mrf.mxu0
    %v4500 = vadd.f32 0.0, %v4499
    %4501 = vmatmul.bf16.gmra.mxu0 %v2123
    %v4502 = vpop.f32.mrf.mxu0
    %v4503 = vadd.f32 0.0, %v4502
    %v4504 = vpop.f32.mrf.mxu0
    %v4505 = vadd.f32 0.0, %v4504
    %4506 = vmatmul.bf16.gmra.mxu0 %v2707
    %v4507 = vpop.f32.mrf.mxu0
    %v4508 = vadd.f32 0.0, %v4507
    %v4509 = vpop.f32.mrf.mxu0
    %v4510 = vadd.f32 0.0, %v4509
    %4511 = vmatmul.bf16.gmra.mxu0 %v3977
    %v4512 = vpop.f32.mrf.mxu0
    %v4513 = vadd.f32 0.0, %v4512
    %v4514 = vpop.f32.mrf.mxu0
    %v4515 = vadd.f32 0.0, %v4514
    %4516 = vdwg.mxu0
    %4517 = vmatpush.bf16.msra.mxu0 0
    %4518 = vmatpush.bf16.msra.mxu0 %v4399
    %4519 = vmatpush.bf16.msra.mxu0 %v4397
    %4520 = vmatpush.bf16.msra.mxu0 %v4395
    %4521 = vmatpush.bf16.msra.mxu0 %v4393
    %4522 = vmatpush.bf16.msra.mxu0 %v4391
    %4523 = vmatpush.bf16.msra.mxu0 %v4389
    %4524 = vmatpush.bf16.msra.mxu0 %v4387
    %4525 = vmatmul.bf16.gmra.mxu0 %v2286
    %v4526 = vpop.f32.mrf.mxu0
    %v4527 = vadd.f32 %v4498, %v4526
    %v4528 = vpop.f32.mrf.mxu0
    %v4529 = vadd.f32 %v4500, %v4528
    %4530 = vmatmul.bf16.gmra.mxu0 %v2289
    %v4531 = vpop.f32.mrf.mxu0
    %v4532 = vadd.f32 %v4503, %v4531
    %v4533 = vpop.f32.mrf.mxu0
    %v4534 = vadd.f32 %v4505, %v4533
    %4535 = vmatmul.bf16.gmra.mxu0 %v2861
    %v4536 = vpop.f32.mrf.mxu0
    %v4537 = vadd.f32 %v4508, %v4536
    %v4538 = vpop.f32.mrf.mxu0
    %v4539 = vadd.f32 %v4510, %v4538
    %4540 = vmatmul.bf16.gmra.mxu0 %v4131
    %v4541 = vpop.f32.mrf.mxu0
    %v4542 = vadd.f32 %v4513, %v4541
    %v4543 = vpop.f32.mrf.mxu0
    %v4544 = vadd.f32 %v4515, %v4543
    %4545 = vdwg.mxu0
    %v4546 = vadd.f32 %v3911, %v4172
    %v4547 = vadd.f32 %v3912, %v4230
    %v4548 = vadd.f32 %v3913, %v4174
    %v4549 = vadd.f32 %v3914, %v4232
    %v4550 = vadd.f32 %v3915, %v4177
    %v4551 = vadd.f32 %v3916, %v4235
    %v4552 = vadd.f32 %v3917, %v4179
    %v4553 = vadd.f32 %v3918, %v4237
    %v4554 = vadd.f32 %v3919, %v4182
    %v4555 = vadd.f32 %v3920, %v4240
    %v4556 = vadd.f32 %v3921, %v4184
    %v4557 = vadd.f32 %v3922, %v4242
    %v4558 = vadd.f32 %v3923, %v4187
    %v4559 = vadd.f32 %v3924, %v4245
    %v4560 = vadd.f32 %v3925, %v4189
    %v4561 = vadd.f32 %v3926, %v4247
    %v4562 = vadd.f32 %v3927, %v4469
    %v4563 = vadd.f32 %v3928, %v4527
    %v4564 = vadd.f32 %v3929, %v4471
    %v4565 = vadd.f32 %v3930, %v4529
    %v4566 = vadd.f32 %v3931, %v4474
    %v4567 = vadd.f32 %v3932, %v4532
    %v4568 = vadd.f32 %v3933, %v4476
    %v4569 = vadd.f32 %v3934, %v4534
    %v4570 = vadd.f32 %v3935, %v4479
    %v4571 = vadd.f32 %v3936, %v4537
    %v4572 = vadd.f32 %v3937, %v4481
    %v4573 = vadd.f32 %v3938, %v4539
    %v4574 = vadd.f32 %v3939, %v4484
    %v4575 = vadd.f32 %v3940, %v4542
    %v4576 = vadd.f32 %v3941, %v4486
    %v4577 = vadd.f32 %v3942, %v4544
    %v4578 = vmax.f32 %v4546, %v4562
    %v4579 = vmax.f32 %v4547, %v4563
    %v4580 = vmax.f32 %v4548, %v4564
    %v4581 = vmax.f32 %v4549, %v4565
    %v4582 = vmax.f32 %v4550, %v4566
    %v4583 = vmax.f32 %v4551, %v4567
    %v4584 = vmax.f32 %v4552, %v4568
    %v4585 = vmax.f32 %v4553, %v4569
    %v4586 = vmax.f32 %v4554, %v4570
    %v4587 = vmax.f32 %v4555, %v4571
    %v4588 = vmax.f32 %v4556, %v4572
    %v4589 = vmax.f32 %v4557, %v4573
    %v4590 = vmax.f32 %v4558, %v4574
    %v4591 = vmax.f32 %v4559, %v4575
    %v4592 = vmax.f32 %v4560, %v4576
    %v4593 = vmax.f32 %v4561, %v4577
    %v4594 = vmax.f32 %v4578, %v4580
    %v4595 = vmax.f32 %v4579, %v4581
    %v4596 = vmax.f32 %v4582, %v4584
    %v4597 = vmax.f32 %v4583, %v4585
    %v4598 = vmax.f32 %v4586, %v4588
    %v4599 = vmax.f32 %v4587, %v4589
    %v4600 = vmax.f32 %v4590, %v4592
    %v4601 = vmax.f32 %v4591, %v4593
    %v4602 = vld [vmem:[%s6] sm:$0x3]
    %v4604 = vperm.slane %v4602, 0
    %v4605 = vperm.slane %v4602, 1
    %v4608 = vadd.f32 %v4594, %v4604
    %v4609 = vadd.f32 %v4595, %v4605
    %v4610 = vadd.f32 %v4596, %v4604
    %v4611 = vadd.f32 %v4597, %v4605
    %v4612 = vadd.f32 %v4598, %v4604
    %v4613 = vadd.f32 %v4599, %v4605
    %v4614 = vadd.f32 %v4600, %v4604
    %v4615 = vadd.f32 %v4601, %v4605
    %v4616 = vmax.f32 %v4608, 0.0
    %v4617 = vmax.f32 %v4609, 0.0
    %v4618 = vmax.f32 %v4610, 0.0
    %v4619 = vmax.f32 %v4611, 0.0
    %v4620 = vmax.f32 %v4612, 0.0
    %v4621 = vmax.f32 %v4613, 0.0
    %v4622 = vmax.f32 %v4614, 0.0
    %v4623 = vmax.f32 %v4615, 0.0
    %v4624 = vmin.f32 %v4616, 6.0
    %v4625 = vmin.f32 %v4617, 6.0
    %v4626 = vmin.f32 %v4618, 6.0
    %v4627 = vmin.f32 %v4619, 6.0
    %v4628 = vmin.f32 %v4620, 6.0
    %v4629 = vmin.f32 %v4621, 6.0
    %v4630 = vmin.f32 %v4622, 6.0
    %v4631 = vmin.f32 %v4623, 6.0
    %v4632 = vpack.c.bf16 %v4625, %v4624
    %v4633 = vpack.c.bf16 %v4627, %v4626
    %v4634 = vpack.c.bf16 %v4629, %v4628
    %v4635 = vpack.c.bf16 %v4631, %v4630
    %v4636 = vld [vmem:[#allocation7] sm:$0xff]
    %v4637 = vld [vmem:[#allocation7 + $0x8] sm:$0xff]
    %v4638 = vld [vmem:[#allocation7 + $0x10] sm:$0xff]
    %v4639 = vld [vmem:[#allocation7 + $0x18] sm:$0xff]
    %v4640 = vld [vmem:[#allocation7 + $0x20] sm:$0xff]
    %v4641 = vld [vmem:[#allocation7 + $0x28] sm:$0xff]
    %v4642 = vld [vmem:[#allocation7 + $0x30] sm:$0xff]
    %v4643 = vld [vmem:[#allocation7 + $0x38] sm:$0xff]
    %v4644 = vld [vmem:[#allocation7 + $0x40] sm:$0xff]
    %v4645 = vld [vmem:[#allocation7 + $0x48] sm:$0xff]
    %v4646 = vld [vmem:[#allocation7 + $0x50] sm:$0xff]
    %v4647 = vld [vmem:[#allocation7 + $0x58] sm:$0xff]
    %v4648 = vld [vmem:[#allocation7 + $0x60] sm:$0xff]
    %v4649 = vld [vmem:[#allocation7 + $0x68] sm:$0xff]
    %v4650 = vld [vmem:[#allocation7 + $0x70] sm:$0xff]
    %v4651 = vld [vmem:[#allocation7 + $0x78] sm:$0xff]
    %v4652 = vld [vmem:[#allocation7 + $0x80] sm:$0xff]
    %v4653 = vld [vmem:[#allocation7 + $0x88] sm:$0xff]
    %v4654 = vld [vmem:[#allocation7 + $0x90] sm:$0xff]
    %v4655 = vld [vmem:[#allocation7 + $0x98] sm:$0xff]
    %v4656 = vld [vmem:[#allocation7 + $0xa0] sm:$0xff]
    %v4657 = vld [vmem:[#allocation7 + $0xa8] sm:$0xff]
    %v4658 = vld [vmem:[#allocation7 + $0xb0] sm:$0xff]
    %v4659 = vld [vmem:[#allocation7 + $0xb8] sm:$0xff]
    %v4660 = vld [vmem:[#allocation7 + $0xc0] sm:$0xff]
    %v4661 = vld [vmem:[#allocation7 + $0xc8] sm:$0xff]
    %v4662 = vld [vmem:[#allocation7 + $0xd0] sm:$0xff]
    %v4663 = vld [vmem:[#allocation7 + $0xd8] sm:$0xff]
    %v4664 = vld [vmem:[#allocation7 + $0xe0] sm:$0xff]
    %v4665 = vld [vmem:[#allocation7 + $0xe8] sm:$0xff]
    %v4666 = vld [vmem:[#allocation7 + $0xf0] sm:$0xff]
    %v4667 = vld [vmem:[#allocation7 + $0xf8] sm:$0xff]
    %v4668 = vld [vmem:[#allocation7 + $0x100] sm:$0xff]
    %v4669 = vld [vmem:[#allocation7 + $0x108] sm:$0xff]
    %v4670 = vld [vmem:[#allocation7 + $0x110] sm:$0xff]
    %v4671 = vld [vmem:[#allocation7 + $0x118] sm:$0xff]
    %v4672 = vld [vmem:[#allocation7 + $0x120] sm:$0xff]
    %v4673 = vld [vmem:[#allocation7 + $0x128] sm:$0xff]
    %v4674 = vld [vmem:[#allocation7 + $0x130] sm:$0xff]
    %v4675 = vld [vmem:[#allocation7 + $0x138] sm:$0xff]
    %v4676 = vld [vmem:[#allocation7 + $0x140] sm:$0xff]
    %v4677 = vld [vmem:[#allocation7 + $0x148] sm:$0xff]
    %v4678 = vld [vmem:[#allocation7 + $0x150] sm:$0xff]
    %v4679 = vld [vmem:[#allocation7 + $0x158] sm:$0xff]
    %v4680 = vld [vmem:[#allocation7 + $0x160] sm:$0xff]
    %v4681 = vld [vmem:[#allocation7 + $0x168] sm:$0xff]
    %v4682 = vld [vmem:[#allocation7 + $0x170] sm:$0xff]
    %v4683 = vld [vmem:[#allocation7 + $0x178] sm:$0xff]
    %v4684 = vld [vmem:[#allocation7 + $0x180] sm:$0xff]
    %v4685 = vld [vmem:[#allocation7 + $0x188] sm:$0xff]
    %s4686 = scalar_lea.vmem [#allocation7], 400
    %v4687 = vld [vmem:[%s4686] sm:$0xff]
    %v4688 = vld [vmem:[%s4686 + $0x8] sm:$0xff]
    %v4689 = vld [vmem:[%s4686 + $0x10] sm:$0xff]
    %v4690 = vld [vmem:[%s4686 + $0x18] sm:$0xff]
    %v4691 = vld [vmem:[%s4686 + $0x20] sm:$0xff]
    %v4692 = vld [vmem:[%s4686 + $0x28] sm:$0xff]
    %v4693 = vld [vmem:[%s4686 + $0x30] sm:$0xff]
    %v4694 = vld [vmem:[%s4686 + $0x38] sm:$0xff]
    %v4695 = vld [vmem:[%s4686 + $0x40] sm:$0xff]
    %v4696 = vld [vmem:[%s4686 + $0x48] sm:$0xff]
    %v4697 = vld [vmem:[%s4686 + $0x50] sm:$0xff]
    %v4698 = vld [vmem:[%s4686 + $0x58] sm:$0xff]
    %v4699 = vld [vmem:[%s4686 + $0x60] sm:$0xff]
    %v4700 = vld [vmem:[%s4686 + $0x68] sm:$0xff]
    %v4701 = vld [vmem:[%s4686 + $0x70] sm:$0xff]
    %v4702 = vld [vmem:[%s4686 + $0x78] sm:$0xff]
    %v4703 = vld [vmem:[%s4686 + $0x80] sm:$0xff]
    %v4704 = vld [vmem:[%s4686 + $0x88] sm:$0xff]
    %v4705 = vld [vmem:[%s4686 + $0x90] sm:$0xff]
    %v4706 = vld [vmem:[%s4686 + $0x98] sm:$0xff]
    %v4707 = vld [vmem:[%s4686 + $0xa0] sm:$0xff]
    %v4708 = vld [vmem:[%s4686 + $0xa8] sm:$0xff]
    %v4709 = vld [vmem:[%s4686 + $0xb0] sm:$0xff]
    %v4710 = vld [vmem:[%s4686 + $0xb8] sm:$0xff]
    %v4711 = vld [vmem:[%s4686 + $0xc0] sm:$0xff]
    %v4712 = vld [vmem:[%s4686 + $0xc8] sm:$0xff]
    %v4713 = vld [vmem:[%s4686 + $0xd0] sm:$0xff]
    %v4714 = vld [vmem:[%s4686 + $0xd8] sm:$0xff]
    %v4715 = vld [vmem:[%s4686 + $0xe0] sm:$0xff]
    %v4716 = vld [vmem:[%s4686 + $0xe8] sm:$0xff]
    %v4717 = vld [vmem:[%s4686 + $0xf0] sm:$0xff]
    %v4718 = vld [vmem:[%s4686 + $0xf8] sm:$0xff]
    %v4719 = vld [vmem:[%s4686 + $0x100] sm:$0xff]
    %v4720 = vld [vmem:[%s4686 + $0x108] sm:$0xff]
    %v4721 = vld [vmem:[%s4686 + $0x110] sm:$0xff]
    %v4722 = vld [vmem:[%s4686 + $0x118] sm:$0xff]
    %v4723 = vld [vmem:[%s4686 + $0x120] sm:$0xff]
    %v4724 = vld [vmem:[%s4686 + $0x128] sm:$0xff]
    %v4725 = vld [vmem:[%s4686 + $0x130] sm:$0xff]
    %v4726 = vld [vmem:[%s4686 + $0x138] sm:$0xff]
    %v4727 = vld [vmem:[%s4686 + $0x140] sm:$0xff]
    %v4728 = vld [vmem:[%s4686 + $0x148] sm:$0xff]
    %v4729 = vld [vmem:[%s4686 + $0x150] sm:$0xff]
    %v4730 = vld [vmem:[%s4686 + $0x158] sm:$0xff]
    %v4731 = vld [vmem:[%s4686 + $0x160] sm:$0xff]
    %v4732 = vld [vmem:[%s4686 + $0x168] sm:$0xff]
    %v4733 = vld [vmem:[%s4686 + $0x170] sm:$0xff]
    %v4734 = vld [vmem:[%s4686 + $0x178] sm:$0xff]
    %v4735 = vld [vmem:[%s4686 + $0x180] sm:$0xff]
    %v4736 = vld [vmem:[%s4686 + $0x188] sm:$0xff]
    %v4738 = vunpack.c.l.b16 %v4633
    %v4739 = vunpack.c.h.b16 %v4633
    %v4740 = vpack.c.b16 %v4738, %v4738
    %v4741 = vpack.c.b16 %v4739, %v4739
    %v4793 = vunpack.c.l.b16 %v4687
    %v4794 = vunpack.c.h.b16 %v4687
    %v4795 = vunpack.c.l.b16 %v4688
    %v4796 = vunpack.c.h.b16 %v4688
    %v4797 = vunpack.c.l.b16 %v4689
    %v4798 = vunpack.c.h.b16 %v4689
    %v4799 = vunpack.c.l.b16 %v4690
    %v4800 = vunpack.c.h.b16 %v4690
    %v4801 = vunpack.c.l.b16 %v4691
    %v4802 = vunpack.c.h.b16 %v4691
    %v4803 = vunpack.c.l.b16 %v4692
    %v4804 = vunpack.c.h.b16 %v4692
    %v4805 = vunpack.c.l.b16 %v4693
    %v4806 = vunpack.c.h.b16 %v4693
    %v4807 = vunpack.c.l.b16 %v4694
    %v4808 = vunpack.c.h.b16 %v4694
    %v4809 = vunpack.c.l.b16 %v4695
    %v4810 = vunpack.c.h.b16 %v4695
    %v4811 = vunpack.c.l.b16 %v4696
    %v4812 = vunpack.c.h.b16 %v4696
    %v4813 = vunpack.c.l.b16 %v4697
    %v4814 = vunpack.c.h.b16 %v4697
    %v4815 = vunpack.c.l.b16 %v4698
    %v4816 = vunpack.c.h.b16 %v4698
    %v4817 = vunpack.c.l.b16 %v4699
    %v4818 = vunpack.c.h.b16 %v4699
    %v4819 = vunpack.c.l.b16 %v4700
    %v4820 = vunpack.c.h.b16 %v4700
    %v4821 = vunpack.c.l.b16 %v4701
    %v4822 = vunpack.c.h.b16 %v4701
    %v4823 = vunpack.c.l.b16 %v4702
    %v4824 = vunpack.c.h.b16 %v4702
    %v4825 = vunpack.c.l.b16 %v4703
    %v4826 = vunpack.c.h.b16 %v4703
    %v4827 = vunpack.c.l.b16 %v4704
    %v4828 = vunpack.c.h.b16 %v4704
    %v4829 = vunpack.c.l.b16 %v4705
    %v4830 = vunpack.c.h.b16 %v4705
    %v4831 = vunpack.c.l.b16 %v4706
    %v4832 = vunpack.c.h.b16 %v4706
    %v4833 = vunpack.c.l.b16 %v4707
    %v4834 = vunpack.c.h.b16 %v4707
    %v4835 = vunpack.c.l.b16 %v4708
    %v4836 = vunpack.c.h.b16 %v4708
    %v4837 = vunpack.c.l.b16 %v4709
    %v4838 = vunpack.c.h.b16 %v4709
    %v4839 = vunpack.c.l.b16 %v4710
    %v4840 = vunpack.c.h.b16 %v4710
    %v4841 = vunpack.c.l.b16 %v4711
    %v4842 = vunpack.c.h.b16 %v4711
    %v4843 = vunpack.c.l.b16 %v4712
    %v4844 = vunpack.c.h.b16 %v4712
    %v4845 = vunpack.c.l.b16 %v4713
    %v4846 = vunpack.c.h.b16 %v4713
    %v4847 = vunpack.c.l.b16 %v4714
    %v4848 = vunpack.c.h.b16 %v4714
    %v4849 = vunpack.c.l.b16 %v4715
    %v4850 = vunpack.c.h.b16 %v4715
    %v4851 = vunpack.c.l.b16 %v4716
    %v4852 = vunpack.c.h.b16 %v4716
    %v4853 = vunpack.c.l.b16 %v4717
    %v4854 = vunpack.c.h.b16 %v4717
    %v4855 = vunpack.c.l.b16 %v4718
    %v4856 = vunpack.c.h.b16 %v4718
    %v4857 = vunpack.c.l.b16 %v4719
    %v4858 = vunpack.c.h.b16 %v4719
    %v4859 = vunpack.c.l.b16 %v4720
    %v4860 = vunpack.c.h.b16 %v4720
    %v4861 = vunpack.c.l.b16 %v4721
    %v4862 = vunpack.c.h.b16 %v4721
    %v4863 = vunpack.c.l.b16 %v4722
    %v4864 = vunpack.c.h.b16 %v4722
    %v4865 = vunpack.c.l.b16 %v4723
    %v4866 = vunpack.c.h.b16 %v4723
    %v4867 = vunpack.c.l.b16 %v4724
    %v4868 = vunpack.c.h.b16 %v4724
    %v4869 = vunpack.c.l.b16 %v4725
    %v4870 = vunpack.c.h.b16 %v4725
    %v4871 = vunpack.c.l.b16 %v4726
    %v4872 = vunpack.c.h.b16 %v4726
    %v4873 = vunpack.c.l.b16 %v4727
    %v4874 = vunpack.c.h.b16 %v4727
    %v4875 = vunpack.c.l.b16 %v4728
    %v4876 = vunpack.c.h.b16 %v4728
    %v4877 = vunpack.c.l.b16 %v4729
    %v4878 = vunpack.c.h.b16 %v4729
    %v4879 = vunpack.c.l.b16 %v4730
    %v4880 = vunpack.c.h.b16 %v4730
    %v4881 = vunpack.c.l.b16 %v4731
    %v4882 = vunpack.c.h.b16 %v4731
    %v4883 = vunpack.c.l.b16 %v4732
    %v4884 = vunpack.c.h.b16 %v4732
    %v4885 = vunpack.c.l.b16 %v4733
    %v4886 = vunpack.c.h.b16 %v4733
    %v4887 = vunpack.c.l.b16 %v4734
    %v4888 = vunpack.c.h.b16 %v4734
    %v4889 = vunpack.c.l.b16 %v4735
    %v4890 = vunpack.c.h.b16 %v4735
    %v4891 = vunpack.c.l.b16 %v4736
    %v4892 = vunpack.c.h.b16 %v4736
    %v4893 = vpack.c.b16 %v4797, %v4793
    %v4894 = vpack.c.b16 %v4798, %v4794
    %v4895 = vpack.c.b16 %v4799, %v4795
    %v4896 = vpack.c.b16 %v4800, %v4796
    %v4897 = vpack.c.b16 %v4805, %v4801
    %v4898 = vpack.c.b16 %v4806, %v4802
    %v4899 = vpack.c.b16 %v4807, %v4803
    %v4900 = vpack.c.b16 %v4808, %v4804
    %v4901 = vpack.c.b16 %v4813, %v4809
    %v4902 = vpack.c.b16 %v4814, %v4810
    %v4903 = vpack.c.b16 %v4815, %v4811
    %v4904 = vpack.c.b16 %v4816, %v4812
    %v4905 = vpack.c.b16 %v4821, %v4817
    %v4906 = vpack.c.b16 %v4822, %v4818
    %v4907 = vpack.c.b16 %v4823, %v4819
    %v4908 = vpack.c.b16 %v4824, %v4820
    %v4909 = vpack.c.b16 %v4829, %v4825
    %v4910 = vpack.c.b16 %v4830, %v4826
    %v4911 = vpack.c.b16 %v4831, %v4827
    %v4912 = vpack.c.b16 %v4832, %v4828
    %v4913 = vpack.c.b16 %v4837, %v4833
    %v4914 = vpack.c.b16 %v4838, %v4834
    %v4915 = vpack.c.b16 %v4839, %v4835
    %v4916 = vpack.c.b16 %v4840, %v4836
    %v4917 = vpack.c.b16 %v4845, %v4841
    %v4918 = vpack.c.b16 %v4846, %v4842
    %v4919 = vpack.c.b16 %v4847, %v4843
    %v4920 = vpack.c.b16 %v4848, %v4844
    %v4921 = vpack.c.b16 %v4853, %v4849
    %v4922 = vpack.c.b16 %v4854, %v4850
    %v4923 = vpack.c.b16 %v4855, %v4851
    %v4924 = vpack.c.b16 %v4856, %v4852
    %v4925 = vpack.c.b16 %v4861, %v4857
    %v4926 = vpack.c.b16 %v4862, %v4858
    %v4927 = vpack.c.b16 %v4863, %v4859
    %v4928 = vpack.c.b16 %v4864, %v4860
    %v4929 = vpack.c.b16 %v4869, %v4865
    %v4930 = vpack.c.b16 %v4870, %v4866
    %v4931 = vpack.c.b16 %v4871, %v4867
    %v4932 = vpack.c.b16 %v4872, %v4868
    %v4933 = vpack.c.b16 %v4877, %v4873
    %v4934 = vpack.c.b16 %v4878, %v4874
    %v4935 = vpack.c.b16 %v4879, %v4875
    %v4936 = vpack.c.b16 %v4880, %v4876
    %v4937 = vpack.c.b16 %v4885, %v4881
    %v4938 = vpack.c.b16 %v4886, %v4882
    %v4939 = vpack.c.b16 %v4887, %v4883
    %v4940 = vpack.c.b16 %v4888, %v4884
    %v4941 = vpack.c.b16 %v4889, %v4889
    %v4942 = vpack.c.b16 %v4890, %v4890
    %v4943 = vpack.c.b16 %v4891, %v4891
    %v4944 = vpack.c.b16 %v4892, %v4892
    %vm4993 = vcmask 588800
    %v4995 = vsel %vm4993, %v4741, 0
    %vm4997 = vcmask 1043456
    %v4999 = vsel %vm4997, %v4941, 0
    %v5002 = vsel %vm4997, %v4942, 0
    %v5005 = vsel %vm4997, %v4943, 0
    %v5008 = vsel %vm4997, %v4944, 0
    %5010 = vmatpush.bf16.msra.mxu0 %v4921
    %5011 = vmatpush.bf16.msra.mxu0 %v4917
    %5012 = vmatpush.bf16.msra.mxu0 %v4913
    %5013 = vmatpush.bf16.msra.mxu0 %v4909
    %5014 = vmatpush.bf16.msra.mxu0 %v4905
    %5015 = vmatpush.bf16.msra.mxu0 %v4901
    %5016 = vmatpush.bf16.msra.mxu0 %v4897
    %5017 = vmatpush.bf16.msra.mxu0 %v4893
    %5018 = vmatmul.bf16.gmra.mxu0 %v4740
    %v5019 = vpop.f32.mrf.mxu0
    %v5020 = vadd.f32 0.0, %v5019
    %v5021 = vpop.f32.mrf.mxu0
    %5022 = vdwg.mxu0
    %5023 = vmatpush.bf16.msra.mxu0 0
    %5024 = vmatpush.bf16.msra.mxu0 0
    %5025 = vmatpush.bf16.msra.mxu0 0
    %5026 = vmatpush.bf16.msra.mxu0 %v4999
    %5027 = vmatpush.bf16.msra.mxu0 %v4937
    %5028 = vmatpush.bf16.msra.mxu0 %v4933
    %5029 = vmatpush.bf16.msra.mxu0 %v4929
    %5030 = vmatpush.bf16.msra.mxu0 %v4925
    %5031 = vmatmul.bf16.gmra.mxu0 %v4995
    %v5032 = vpop.f32.mrf.mxu0
    %v5033 = vadd.f32 %v5020, %v5032
    %v5034 = vpop.f32.mrf.mxu0
    %5035 = vdwg.mxu0
    %5036 = vmatpush.bf16.msra.mxu0 %v4922
    %5037 = vmatpush.bf16.msra.mxu0 %v4918
    %5038 = vmatpush.bf16.msra.mxu0 %v4914
    %5039 = vmatpush.bf16.msra.mxu0 %v4910
    %5040 = vmatpush.bf16.msra.mxu0 %v4906
    %5041 = vmatpush.bf16.msra.mxu0 %v4902
    %5042 = vmatpush.bf16.msra.mxu0 %v4898
    %5043 = vmatpush.bf16.msra.mxu0 %v4894
    %5044 = vmatmul.bf16.gmra.mxu0 %v4740
    %v5045 = vpop.f32.mrf.mxu0
    %v5046 = vadd.f32 0.0, %v5045
    %v5047 = vpop.f32.mrf.mxu0
    %5048 = vdwg.mxu0
    %5049 = vmatpush.bf16.msra.mxu0 0
    %5050 = vmatpush.bf16.msra.mxu0 0
    %5051 = vmatpush.bf16.msra.mxu0 0
    %5052 = vmatpush.bf16.msra.mxu0 %v5002
    %5053 = vmatpush.bf16.msra.mxu0 %v4938
    %5054 = vmatpush.bf16.msra.mxu0 %v4934
    %5055 = vmatpush.bf16.msra.mxu0 %v4930
    %5056 = vmatpush.bf16.msra.mxu0 %v4926
    %5057 = vmatmul.bf16.gmra.mxu0 %v4995
    %v5058 = vpop.f32.mrf.mxu0
    %v5059 = vadd.f32 %v5046, %v5058
    %v5060 = vpop.f32.mrf.mxu0
    %5061 = vdwg.mxu0
    %5062 = vmatpush.bf16.msra.mxu0 %v4923
    %5063 = vmatpush.bf16.msra.mxu0 %v4919
    %5064 = vmatpush.bf16.msra.mxu0 %v4915
    %5065 = vmatpush.bf16.msra.mxu0 %v4911
    %5066 = vmatpush.bf16.msra.mxu0 %v4907
    %5067 = vmatpush.bf16.msra.mxu0 %v4903
    %5068 = vmatpush.bf16.msra.mxu0 %v4899
    %5069 = vmatpush.bf16.msra.mxu0 %v4895
    %5070 = vmatmul.bf16.gmra.mxu0 %v4740
    %v5071 = vpop.f32.mrf.mxu0
    %v5072 = vadd.f32 0.0, %v5071
    %v5073 = vpop.f32.mrf.mxu0
    %5074 = vdwg.mxu0
    %5075 = vmatpush.bf16.msra.mxu0 0
    %5076 = vmatpush.bf16.msra.mxu0 0
    %5077 = vmatpush.bf16.msra.mxu0 0
    %5078 = vmatpush.bf16.msra.mxu0 %v5005
    %5079 = vmatpush.bf16.msra.mxu0 %v4939
    %5080 = vmatpush.bf16.msra.mxu0 %v4935
    %5081 = vmatpush.bf16.msra.mxu0 %v4931
    %5082 = vmatpush.bf16.msra.mxu0 %v4927
    %5083 = vmatmul.bf16.gmra.mxu0 %v4995
    %v5084 = vpop.f32.mrf.mxu0
    %v5085 = vadd.f32 %v5072, %v5084
    %v5086 = vpop.f32.mrf.mxu0
    %5087 = vdwg.mxu0
    %5088 = vmatpush.bf16.msra.mxu0 %v4924
    %5089 = vmatpush.bf16.msra.mxu0 %v4920
    %5090 = vmatpush.bf16.msra.mxu0 %v4916
    %5091 = vmatpush.bf16.msra.mxu0 %v4912
    %5092 = vmatpush.bf16.msra.mxu0 %v4908
    %5093 = vmatpush.bf16.msra.mxu0 %v4904
    %5094 = vmatpush.bf16.msra.mxu0 %v4900
    %5095 = vmatpush.bf16.msra.mxu0 %v4896
    %5096 = vmatmul.bf16.gmra.mxu0 %v4740
    %v5097 = vpop.f32.mrf.mxu0
    %v5098 = vadd.f32 0.0, %v5097
    %v5099 = vpop.f32.mrf.mxu0
    %5100 = vdwg.mxu0
    %5101 = vmatpush.bf16.msra.mxu0 0
    %5102 = vmatpush.bf16.msra.mxu0 0
    %5103 = vmatpush.bf16.msra.mxu0 0
    %5104 = vmatpush.bf16.msra.mxu0 %v5008
    %5105 = vmatpush.bf16.msra.mxu0 %v4940
    %5106 = vmatpush.bf16.msra.mxu0 %v4936
    %5107 = vmatpush.bf16.msra.mxu0 %v4932
    %5108 = vmatpush.bf16.msra.mxu0 %v4928
    %5109 = vmatmul.bf16.gmra.mxu0 %v4995
    %v5110 = vpop.f32.mrf.mxu0
    %v5111 = vadd.f32 %v5098, %v5110
    %v5112 = vpop.f32.mrf.mxu0
    %5113 = vdwg.mxu0
    %v5115 = vunpack.c.l.b16 %v4632
    %v5116 = vunpack.c.h.b16 %v4632
    %v5117 = vpack.c.b16 %v5115, %v5115
    %v5118 = vpack.c.b16 %v5116, %v5116
    %v5170 = vunpack.c.l.b16 %v4636
    %v5171 = vunpack.c.h.b16 %v4636
    %v5172 = vunpack.c.l.b16 %v4637
    %v5173 = vunpack.c.h.b16 %v4637
    %v5174 = vunpack.c.l.b16 %v4638
    %v5175 = vunpack.c.h.b16 %v4638
    %v5176 = vunpack.c.l.b16 %v4639
    %v5177 = vunpack.c.h.b16 %v4639
    %v5178 = vunpack.c.l.b16 %v4640
    %v5179 = vunpack.c.h.b16 %v4640
    %v5180 = vunpack.c.l.b16 %v4641
    %v5181 = vunpack.c.h.b16 %v4641
    %v5182 = vunpack.c.l.b16 %v4642
    %v5183 = vunpack.c.h.b16 %v4642
    %v5184 = vunpack.c.l.b16 %v4643
    %v5185 = vunpack.c.h.b16 %v4643
    %v5186 = vunpack.c.l.b16 %v4644
    %v5187 = vunpack.c.h.b16 %v4644
    %v5188 = vunpack.c.l.b16 %v4645
    %v5189 = vunpack.c.h.b16 %v4645
    %v5190 = vunpack.c.l.b16 %v4646
    %v5191 = vunpack.c.h.b16 %v4646
    %v5192 = vunpack.c.l.b16 %v4647
    %v5193 = vunpack.c.h.b16 %v4647
    %v5194 = vunpack.c.l.b16 %v4648
    %v5195 = vunpack.c.h.b16 %v4648
    %v5196 = vunpack.c.l.b16 %v4649
    %v5197 = vunpack.c.h.b16 %v4649
    %v5198 = vunpack.c.l.b16 %v4650
    %v5199 = vunpack.c.h.b16 %v4650
    %v5200 = vunpack.c.l.b16 %v4651
    %v5201 = vunpack.c.h.b16 %v4651
    %v5202 = vunpack.c.l.b16 %v4652
    %v5203 = vunpack.c.h.b16 %v4652
    %v5204 = vunpack.c.l.b16 %v4653
    %v5205 = vunpack.c.h.b16 %v4653
    %v5206 = vunpack.c.l.b16 %v4654
    %v5207 = vunpack.c.h.b16 %v4654
    %v5208 = vunpack.c.l.b16 %v4655
    %v5209 = vunpack.c.h.b16 %v4655
    %v5210 = vunpack.c.l.b16 %v4656
    %v5211 = vunpack.c.h.b16 %v4656
    %v5212 = vunpack.c.l.b16 %v4657
    %v5213 = vunpack.c.h.b16 %v4657
    %v5214 = vunpack.c.l.b16 %v4658
    %v5215 = vunpack.c.h.b16 %v4658
    %v5216 = vunpack.c.l.b16 %v4659
    %v5217 = vunpack.c.h.b16 %v4659
    %v5218 = vunpack.c.l.b16 %v4660
    %v5219 = vunpack.c.h.b16 %v4660
    %v5220 = vunpack.c.l.b16 %v4661
    %v5221 = vunpack.c.h.b16 %v4661
    %v5222 = vunpack.c.l.b16 %v4662
    %v5223 = vunpack.c.h.b16 %v4662
    %v5224 = vunpack.c.l.b16 %v4663
    %v5225 = vunpack.c.h.b16 %v4663
    %v5226 = vunpack.c.l.b16 %v4664
    %v5227 = vunpack.c.h.b16 %v4664
    %v5228 = vunpack.c.l.b16 %v4665
    %v5229 = vunpack.c.h.b16 %v4665
    %v5230 = vunpack.c.l.b16 %v4666
    %v5231 = vunpack.c.h.b16 %v4666
    %v5232 = vunpack.c.l.b16 %v4667
    %v5233 = vunpack.c.h.b16 %v4667
    %v5234 = vunpack.c.l.b16 %v4668
    %v5235 = vunpack.c.h.b16 %v4668
    %v5236 = vunpack.c.l.b16 %v4669
    %v5237 = vunpack.c.h.b16 %v4669
    %v5238 = vunpack.c.l.b16 %v4670
    %v5239 = vunpack.c.h.b16 %v4670
    %v5240 = vunpack.c.l.b16 %v4671
    %v5241 = vunpack.c.h.b16 %v4671
    %v5242 = vunpack.c.l.b16 %v4672
    %v5243 = vunpack.c.h.b16 %v4672
    %v5244 = vunpack.c.l.b16 %v4673
    %v5245 = vunpack.c.h.b16 %v4673
    %v5246 = vunpack.c.l.b16 %v4674
    %v5247 = vunpack.c.h.b16 %v4674
    %v5248 = vunpack.c.l.b16 %v4675
    %v5249 = vunpack.c.h.b16 %v4675
    %v5250 = vunpack.c.l.b16 %v4676
    %v5251 = vunpack.c.h.b16 %v4676
    %v5252 = vunpack.c.l.b16 %v4677
    %v5253 = vunpack.c.h.b16 %v4677
    %v5254 = vunpack.c.l.b16 %v4678
    %v5255 = vunpack.c.h.b16 %v4678
    %v5256 = vunpack.c.l.b16 %v4679
    %v5257 = vunpack.c.h.b16 %v4679
    %v5258 = vunpack.c.l.b16 %v4680
    %v5259 = vunpack.c.h.b16 %v4680
    %v5260 = vunpack.c.l.b16 %v4681
    %v5261 = vunpack.c.h.b16 %v4681
    %v5262 = vunpack.c.l.b16 %v4682
    %v5263 = vunpack.c.h.b16 %v4682
    %v5264 = vunpack.c.l.b16 %v4683
    %v5265 = vunpack.c.h.b16 %v4683
    %v5266 = vunpack.c.l.b16 %v4684
    %v5267 = vunpack.c.h.b16 %v4684
    %v5268 = vunpack.c.l.b16 %v4685
    %v5269 = vunpack.c.h.b16 %v4685
    %v5270 = vpack.c.b16 %v5174, %v5170
    %v5271 = vpack.c.b16 %v5175, %v5171
    %v5272 = vpack.c.b16 %v5176, %v5172
    %v5273 = vpack.c.b16 %v5177, %v5173
    %v5274 = vpack.c.b16 %v5182, %v5178
    %v5275 = vpack.c.b16 %v5183, %v5179
    %v5276 = vpack.c.b16 %v5184, %v5180
    %v5277 = vpack.c.b16 %v5185, %v5181
    %v5278 = vpack.c.b16 %v5190, %v5186
    %v5279 = vpack.c.b16 %v5191, %v5187
    %v5280 = vpack.c.b16 %v5192, %v5188
    %v5281 = vpack.c.b16 %v5193, %v5189
    %v5282 = vpack.c.b16 %v5198, %v5194
    %v5283 = vpack.c.b16 %v5199, %v5195
    %v5284 = vpack.c.b16 %v5200, %v5196
    %v5285 = vpack.c.b16 %v5201, %v5197
    %v5286 = vpack.c.b16 %v5206, %v5202
    %v5287 = vpack.c.b16 %v5207, %v5203
    %v5288 = vpack.c.b16 %v5208, %v5204
    %v5289 = vpack.c.b16 %v5209, %v5205
    %v5290 = vpack.c.b16 %v5214, %v5210
    %v5291 = vpack.c.b16 %v5215, %v5211
    %v5292 = vpack.c.b16 %v5216, %v5212
    %v5293 = vpack.c.b16 %v5217, %v5213
    %v5294 = vpack.c.b16 %v5222, %v5218
    %v5295 = vpack.c.b16 %v5223, %v5219
    %v5296 = vpack.c.b16 %v5224, %v5220
    %v5297 = vpack.c.b16 %v5225, %v5221
    %v5298 = vpack.c.b16 %v5230, %v5226
    %v5299 = vpack.c.b16 %v5231, %v5227
    %v5300 = vpack.c.b16 %v5232, %v5228
    %v5301 = vpack.c.b16 %v5233, %v5229
    %v5302 = vpack.c.b16 %v5238, %v5234
    %v5303 = vpack.c.b16 %v5239, %v5235
    %v5304 = vpack.c.b16 %v5240, %v5236
    %v5305 = vpack.c.b16 %v5241, %v5237
    %v5306 = vpack.c.b16 %v5246, %v5242
    %v5307 = vpack.c.b16 %v5247, %v5243
    %v5308 = vpack.c.b16 %v5248, %v5244
    %v5309 = vpack.c.b16 %v5249, %v5245
    %v5310 = vpack.c.b16 %v5254, %v5250
    %v5311 = vpack.c.b16 %v5255, %v5251
    %v5312 = vpack.c.b16 %v5256, %v5252
    %v5313 = vpack.c.b16 %v5257, %v5253
    %v5314 = vpack.c.b16 %v5262, %v5258
    %v5315 = vpack.c.b16 %v5263, %v5259
    %v5316 = vpack.c.b16 %v5264, %v5260
    %v5317 = vpack.c.b16 %v5265, %v5261
    %v5318 = vpack.c.b16 %v5266, %v5266
    %v5319 = vpack.c.b16 %v5267, %v5267
    %v5320 = vpack.c.b16 %v5268, %v5268
    %v5321 = vpack.c.b16 %v5269, %v5269
    %v5371 = vsel %vm4993, %v5118, 0
    %v5374 = vsel %vm4997, %v5318, 0
    %v5377 = vsel %vm4997, %v5319, 0
    %v5380 = vsel %vm4997, %v5320, 0
    %v5383 = vsel %vm4997, %v5321, 0
    %5385 = vmatpush.bf16.msra.mxu0 %v5298
    %5386 = vmatpush.bf16.msra.mxu0 %v5294
    %5387 = vmatpush.bf16.msra.mxu0 %v5290
    %5388 = vmatpush.bf16.msra.mxu0 %v5286
    %5389 = vmatpush.bf16.msra.mxu0 %v5282
    %5390 = vmatpush.bf16.msra.mxu0 %v5278
    %5391 = vmatpush.bf16.msra.mxu0 %v5274
    %5392 = vmatpush.bf16.msra.mxu0 %v5270
    %5393 = vmatmul.bf16.gmra.mxu0 %v5117
    %v5394 = vpop.f32.mrf.mxu0
    %v5395 = vadd.f32 %v5033, %v5394
    %v5396 = vpop.f32.mrf.mxu0
    %5397 = vdwg.mxu0
    %5398 = vmatpush.bf16.msra.mxu0 0
    %5399 = vmatpush.bf16.msra.mxu0 0
    %5400 = vmatpush.bf16.msra.mxu0 0
    %5401 = vmatpush.bf16.msra.mxu0 %v5374
    %5402 = vmatpush.bf16.msra.mxu0 %v5314
    %5403 = vmatpush.bf16.msra.mxu0 %v5310
    %5404 = vmatpush.bf16.msra.mxu0 %v5306
    %5405 = vmatpush.bf16.msra.mxu0 %v5302
    %5406 = vmatmul.bf16.gmra.mxu0 %v5371
    %v5407 = vpop.f32.mrf.mxu0
    %v5408 = vadd.f32 %v5395, %v5407
    %v5409 = vpop.f32.mrf.mxu0
    %5410 = vdwg.mxu0
    %5411 = vmatpush.bf16.msra.mxu0 %v5299
    %5412 = vmatpush.bf16.msra.mxu0 %v5295
    %5413 = vmatpush.bf16.msra.mxu0 %v5291
    %5414 = vmatpush.bf16.msra.mxu0 %v5287
    %5415 = vmatpush.bf16.msra.mxu0 %v5283
    %5416 = vmatpush.bf16.msra.mxu0 %v5279
    %5417 = vmatpush.bf16.msra.mxu0 %v5275
    %5418 = vmatpush.bf16.msra.mxu0 %v5271
    %5419 = vmatmul.bf16.gmra.mxu0 %v5117
    %v5420 = vpop.f32.mrf.mxu0
    %v5421 = vadd.f32 %v5059, %v5420
    %v5422 = vpop.f32.mrf.mxu0
    %5423 = vdwg.mxu0
    %5424 = vmatpush.bf16.msra.mxu0 0
    %5425 = vmatpush.bf16.msra.mxu0 0
    %5426 = vmatpush.bf16.msra.mxu0 0
    %5427 = vmatpush.bf16.msra.mxu0 %v5377
    %5428 = vmatpush.bf16.msra.mxu0 %v5315
    %5429 = vmatpush.bf16.msra.mxu0 %v5311
    %5430 = vmatpush.bf16.msra.mxu0 %v5307
    %5431 = vmatpush.bf16.msra.mxu0 %v5303
    %5432 = vmatmul.bf16.gmra.mxu0 %v5371
    %v5433 = vpop.f32.mrf.mxu0
    %v5434 = vadd.f32 %v5421, %v5433
    %v5435 = vpop.f32.mrf.mxu0
    %5436 = vdwg.mxu0
    %5437 = vmatpush.bf16.msra.mxu0 %v5300
    %5438 = vmatpush.bf16.msra.mxu0 %v5296
    %5439 = vmatpush.bf16.msra.mxu0 %v5292
    %5440 = vmatpush.bf16.msra.mxu0 %v5288
    %5441 = vmatpush.bf16.msra.mxu0 %v5284
    %5442 = vmatpush.bf16.msra.mxu0 %v5280
    %5443 = vmatpush.bf16.msra.mxu0 %v5276
    %5444 = vmatpush.bf16.msra.mxu0 %v5272
    %5445 = vmatmul.bf16.gmra.mxu0 %v5117
    %v5446 = vpop.f32.mrf.mxu0
    %v5447 = vadd.f32 %v5085, %v5446
    %v5448 = vpop.f32.mrf.mxu0
    %5449 = vdwg.mxu0
    %5450 = vmatpush.bf16.msra.mxu0 0
    %5451 = vmatpush.bf16.msra.mxu0 0
    %5452 = vmatpush.bf16.msra.mxu0 0
    %5453 = vmatpush.bf16.msra.mxu0 %v5380
    %5454 = vmatpush.bf16.msra.mxu0 %v5316
    %5455 = vmatpush.bf16.msra.mxu0 %v5312
    %5456 = vmatpush.bf16.msra.mxu0 %v5308
    %5457 = vmatpush.bf16.msra.mxu0 %v5304
    %5458 = vmatmul.bf16.gmra.mxu0 %v5371
    %v5459 = vpop.f32.mrf.mxu0
    %v5460 = vadd.f32 %v5447, %v5459
    %v5461 = vpop.f32.mrf.mxu0
    %5462 = vdwg.mxu0
    %5463 = vmatpush.bf16.msra.mxu0 %v5301
    %5464 = vmatpush.bf16.msra.mxu0 %v5297
    %5465 = vmatpush.bf16.msra.mxu0 %v5293
    %5466 = vmatpush.bf16.msra.mxu0 %v5289
    %5467 = vmatpush.bf16.msra.mxu0 %v5285
    %5468 = vmatpush.bf16.msra.mxu0 %v5281
    %5469 = vmatpush.bf16.msra.mxu0 %v5277
    %5470 = vmatpush.bf16.msra.mxu0 %v5273
    %5471 = vmatmul.bf16.gmra.mxu0 %v5117
    %v5472 = vpop.f32.mrf.mxu0
    %v5473 = vadd.f32 %v5111, %v5472
    %v5474 = vpop.f32.mrf.mxu0
    %5475 = vdwg.mxu0
    %5476 = vmatpush.bf16.msra.mxu0 0
    %5477 = vmatpush.bf16.msra.mxu0 0
    %5478 = vmatpush.bf16.msra.mxu0 0
    %5479 = vmatpush.bf16.msra.mxu0 %v5383
    %5480 = vmatpush.bf16.msra.mxu0 %v5317
    %5481 = vmatpush.bf16.msra.mxu0 %v5313
    %5482 = vmatpush.bf16.msra.mxu0 %v5309
    %5483 = vmatpush.bf16.msra.mxu0 %v5305
    %5484 = vmatmul.bf16.gmra.mxu0 %v5371
    %v5485 = vpop.f32.mrf.mxu0
    %v5486 = vadd.f32 %v5473, %v5485
    %v5487 = vpop.f32.mrf.mxu0
    %5488 = vdwg.mxu0
    %s5489 = scalar_lea.vmem [#allocation7], 800
    %v5490 = vld [vmem:[%s5489] sm:$0xff]
    %v5491 = vld [vmem:[%s5489 + $0x8] sm:$0xff]
    %v5492 = vld [vmem:[%s5489 + $0x10] sm:$0xff]
    %v5493 = vld [vmem:[%s5489 + $0x18] sm:$0xff]
    %v5494 = vld [vmem:[%s5489 + $0x20] sm:$0xff]
    %v5495 = vld [vmem:[%s5489 + $0x28] sm:$0xff]
    %v5496 = vld [vmem:[%s5489 + $0x30] sm:$0xff]
    %v5497 = vld [vmem:[%s5489 + $0x38] sm:$0xff]
    %v5498 = vld [vmem:[%s5489 + $0x40] sm:$0xff]
    %v5499 = vld [vmem:[%s5489 + $0x48] sm:$0xff]
    %v5500 = vld [vmem:[%s5489 + $0x50] sm:$0xff]
    %v5501 = vld [vmem:[%s5489 + $0x58] sm:$0xff]
    %v5502 = vld [vmem:[%s5489 + $0x60] sm:$0xff]
    %v5503 = vld [vmem:[%s5489 + $0x68] sm:$0xff]
    %v5504 = vld [vmem:[%s5489 + $0x70] sm:$0xff]
    %v5505 = vld [vmem:[%s5489 + $0x78] sm:$0xff]
    %v5506 = vld [vmem:[%s5489 + $0x80] sm:$0xff]
    %v5507 = vld [vmem:[%s5489 + $0x88] sm:$0xff]
    %v5508 = vld [vmem:[%s5489 + $0x90] sm:$0xff]
    %v5509 = vld [vmem:[%s5489 + $0x98] sm:$0xff]
    %v5510 = vld [vmem:[%s5489 + $0xa0] sm:$0xff]
    %v5511 = vld [vmem:[%s5489 + $0xa8] sm:$0xff]
    %v5512 = vld [vmem:[%s5489 + $0xb0] sm:$0xff]
    %v5513 = vld [vmem:[%s5489 + $0xb8] sm:$0xff]
    %v5514 = vld [vmem:[%s5489 + $0xc0] sm:$0xff]
    %v5515 = vld [vmem:[%s5489 + $0xc8] sm:$0xff]
    %v5516 = vld [vmem:[%s5489 + $0xd0] sm:$0xff]
    %v5517 = vld [vmem:[%s5489 + $0xd8] sm:$0xff]
    %v5518 = vld [vmem:[%s5489 + $0xe0] sm:$0xff]
    %v5519 = vld [vmem:[%s5489 + $0xe8] sm:$0xff]
    %v5520 = vld [vmem:[%s5489 + $0xf0] sm:$0xff]
    %v5521 = vld [vmem:[%s5489 + $0xf8] sm:$0xff]
    %v5522 = vld [vmem:[%s5489 + $0x100] sm:$0xff]
    %v5523 = vld [vmem:[%s5489 + $0x108] sm:$0xff]
    %v5524 = vld [vmem:[%s5489 + $0x110] sm:$0xff]
    %v5525 = vld [vmem:[%s5489 + $0x118] sm:$0xff]
    %v5526 = vld [vmem:[%s5489 + $0x120] sm:$0xff]
    %v5527 = vld [vmem:[%s5489 + $0x128] sm:$0xff]
    %v5528 = vld [vmem:[%s5489 + $0x130] sm:$0xff]
    %v5529 = vld [vmem:[%s5489 + $0x138] sm:$0xff]
    %v5530 = vld [vmem:[%s5489 + $0x140] sm:$0xff]
    %v5531 = vld [vmem:[%s5489 + $0x148] sm:$0xff]
    %v5532 = vld [vmem:[%s5489 + $0x150] sm:$0xff]
    %v5533 = vld [vmem:[%s5489 + $0x158] sm:$0xff]
    %v5534 = vld [vmem:[%s5489 + $0x160] sm:$0xff]
    %v5535 = vld [vmem:[%s5489 + $0x168] sm:$0xff]
    %v5536 = vld [vmem:[%s5489 + $0x170] sm:$0xff]
    %v5537 = vld [vmem:[%s5489 + $0x178] sm:$0xff]
    %v5538 = vld [vmem:[%s5489 + $0x180] sm:$0xff]
    %v5539 = vld [vmem:[%s5489 + $0x188] sm:$0xff]
    %v5541 = vunpack.c.l.b16 %v4634
    %v5542 = vunpack.c.h.b16 %v4634
    %v5543 = vpack.c.b16 %v5541, %v5541
    %v5544 = vpack.c.b16 %v5542, %v5542
    %v5596 = vunpack.c.l.b16 %v5490
    %v5597 = vunpack.c.h.b16 %v5490
    %v5598 = vunpack.c.l.b16 %v5491
    %v5599 = vunpack.c.h.b16 %v5491
    %v5600 = vunpack.c.l.b16 %v5492
    %v5601 = vunpack.c.h.b16 %v5492
    %v5602 = vunpack.c.l.b16 %v5493
    %v5603 = vunpack.c.h.b16 %v5493
    %v5604 = vunpack.c.l.b16 %v5494
    %v5605 = vunpack.c.h.b16 %v5494
    %v5606 = vunpack.c.l.b16 %v5495
    %v5607 = vunpack.c.h.b16 %v5495
    %v5608 = vunpack.c.l.b16 %v5496
    %v5609 = vunpack.c.h.b16 %v5496
    %v5610 = vunpack.c.l.b16 %v5497
    %v5611 = vunpack.c.h.b16 %v5497
    %v5612 = vunpack.c.l.b16 %v5498
    %v5613 = vunpack.c.h.b16 %v5498
    %v5614 = vunpack.c.l.b16 %v5499
    %v5615 = vunpack.c.h.b16 %v5499
    %v5616 = vunpack.c.l.b16 %v5500
    %v5617 = vunpack.c.h.b16 %v5500
    %v5618 = vunpack.c.l.b16 %v5501
    %v5619 = vunpack.c.h.b16 %v5501
    %v5620 = vunpack.c.l.b16 %v5502
    %v5621 = vunpack.c.h.b16 %v5502
    %v5622 = vunpack.c.l.b16 %v5503
    %v5623 = vunpack.c.h.b16 %v5503
    %v5624 = vunpack.c.l.b16 %v5504
    %v5625 = vunpack.c.h.b16 %v5504
    %v5626 = vunpack.c.l.b16 %v5505
    %v5627 = vunpack.c.h.b16 %v5505
    %v5628 = vunpack.c.l.b16 %v5506
    %v5629 = vunpack.c.h.b16 %v5506
    %v5630 = vunpack.c.l.b16 %v5507
    %v5631 = vunpack.c.h.b16 %v5507
    %v5632 = vunpack.c.l.b16 %v5508
    %v5633 = vunpack.c.h.b16 %v5508
    %v5634 = vunpack.c.l.b16 %v5509
    %v5635 = vunpack.c.h.b16 %v5509
    %v5636 = vunpack.c.l.b16 %v5510
    %v5637 = vunpack.c.h.b16 %v5510
    %v5638 = vunpack.c.l.b16 %v5511
    %v5639 = vunpack.c.h.b16 %v5511
    %v5640 = vunpack.c.l.b16 %v5512
    %v5641 = vunpack.c.h.b16 %v5512
    %v5642 = vunpack.c.l.b16 %v5513
    %v5643 = vunpack.c.h.b16 %v5513
    %v5644 = vunpack.c.l.b16 %v5514
    %v5645 = vunpack.c.h.b16 %v5514
    %v5646 = vunpack.c.l.b16 %v5515
    %v5647 = vunpack.c.h.b16 %v5515
    %v5648 = vunpack.c.l.b16 %v5516
    %v5649 = vunpack.c.h.b16 %v5516
    %v5650 = vunpack.c.l.b16 %v5517
    %v5651 = vunpack.c.h.b16 %v5517
    %v5652 = vunpack.c.l.b16 %v5518
    %v5653 = vunpack.c.h.b16 %v5518
    %v5654 = vunpack.c.l.b16 %v5519
    %v5655 = vunpack.c.h.b16 %v5519
    %v5656 = vunpack.c.l.b16 %v5520
    %v5657 = vunpack.c.h.b16 %v5520
    %v5658 = vunpack.c.l.b16 %v5521
    %v5659 = vunpack.c.h.b16 %v5521
    %v5660 = vunpack.c.l.b16 %v5522
    %v5661 = vunpack.c.h.b16 %v5522
    %v5662 = vunpack.c.l.b16 %v5523
    %v5663 = vunpack.c.h.b16 %v5523
    %v5664 = vunpack.c.l.b16 %v5524
    %v5665 = vunpack.c.h.b16 %v5524
    %v5666 = vunpack.c.l.b16 %v5525
    %v5667 = vunpack.c.h.b16 %v5525
    %v5668 = vunpack.c.l.b16 %v5526
    %v5669 = vunpack.c.h.b16 %v5526
    %v5670 = vunpack.c.l.b16 %v5527
    %v5671 = vunpack.c.h.b16 %v5527
    %v5672 = vunpack.c.l.b16 %v5528
    %v5673 = vunpack.c.h.b16 %v5528
    %v5674 = vunpack.c.l.b16 %v5529
    %v5675 = vunpack.c.h.b16 %v5529
    %v5676 = vunpack.c.l.b16 %v5530
    %v5677 = vunpack.c.h.b16 %v5530
    %v5678 = vunpack.c.l.b16 %v5531
    %v5679 = vunpack.c.h.b16 %v5531
    %v5680 = vunpack.c.l.b16 %v5532
    %v5681 = vunpack.c.h.b16 %v5532
    %v5682 = vunpack.c.l.b16 %v5533
    %v5683 = vunpack.c.h.b16 %v5533
    %v5684 = vunpack.c.l.b16 %v5534
    %v5685 = vunpack.c.h.b16 %v5534
    %v5686 = vunpack.c.l.b16 %v5535
    %v5687 = vunpack.c.h.b16 %v5535
    %v5688 = vunpack.c.l.b16 %v5536
    %v5689 = vunpack.c.h.b16 %v5536
    %v5690 = vunpack.c.l.b16 %v5537
    %v5691 = vunpack.c.h.b16 %v5537
    %v5692 = vunpack.c.l.b16 %v5538
    %v5693 = vunpack.c.h.b16 %v5538
    %v5694 = vunpack.c.l.b16 %v5539
    %v5695 = vunpack.c.h.b16 %v5539
    %v5696 = vpack.c.b16 %v5600, %v5596
    %v5697 = vpack.c.b16 %v5601, %v5597
    %v5698 = vpack.c.b16 %v5602, %v5598
    %v5699 = vpack.c.b16 %v5603, %v5599
    %v5700 = vpack.c.b16 %v5608, %v5604
    %v5701 = vpack.c.b16 %v5609, %v5605
    %v5702 = vpack.c.b16 %v5610, %v5606
    %v5703 = vpack.c.b16 %v5611, %v5607
    %v5704 = vpack.c.b16 %v5616, %v5612
    %v5705 = vpack.c.b16 %v5617, %v5613
    %v5706 = vpack.c.b16 %v5618, %v5614
    %v5707 = vpack.c.b16 %v5619, %v5615
    %v5708 = vpack.c.b16 %v5624, %v5620
    %v5709 = vpack.c.b16 %v5625, %v5621
    %v5710 = vpack.c.b16 %v5626, %v5622
    %v5711 = vpack.c.b16 %v5627, %v5623
    %v5712 = vpack.c.b16 %v5632, %v5628
    %v5713 = vpack.c.b16 %v5633, %v5629
    %v5714 = vpack.c.b16 %v5634, %v5630
    %v5715 = vpack.c.b16 %v5635, %v5631
    %v5716 = vpack.c.b16 %v5640, %v5636
    %v5717 = vpack.c.b16 %v5641, %v5637
    %v5718 = vpack.c.b16 %v5642, %v5638
    %v5719 = vpack.c.b16 %v5643, %v5639
    %v5720 = vpack.c.b16 %v5648, %v5644
    %v5721 = vpack.c.b16 %v5649, %v5645
    %v5722 = vpack.c.b16 %v5650, %v5646
    %v5723 = vpack.c.b16 %v5651, %v5647
    %v5724 = vpack.c.b16 %v5656, %v5652
    %v5725 = vpack.c.b16 %v5657, %v5653
    %v5726 = vpack.c.b16 %v5658, %v5654
    %v5727 = vpack.c.b16 %v5659, %v5655
    %v5728 = vpack.c.b16 %v5664, %v5660
    %v5729 = vpack.c.b16 %v5665, %v5661
    %v5730 = vpack.c.b16 %v5666, %v5662
    %v5731 = vpack.c.b16 %v5667, %v5663
    %v5732 = vpack.c.b16 %v5672, %v5668
    %v5733 = vpack.c.b16 %v5673, %v5669
    %v5734 = vpack.c.b16 %v5674, %v5670
    %v5735 = vpack.c.b16 %v5675, %v5671
    %v5736 = vpack.c.b16 %v5680, %v5676
    %v5737 = vpack.c.b16 %v5681, %v5677
    %v5738 = vpack.c.b16 %v5682, %v5678
    %v5739 = vpack.c.b16 %v5683, %v5679
    %v5740 = vpack.c.b16 %v5688, %v5684
    %v5741 = vpack.c.b16 %v5689, %v5685
    %v5742 = vpack.c.b16 %v5690, %v5686
    %v5743 = vpack.c.b16 %v5691, %v5687
    %v5744 = vpack.c.b16 %v5692, %v5692
    %v5745 = vpack.c.b16 %v5693, %v5693
    %v5746 = vpack.c.b16 %v5694, %v5694
    %v5747 = vpack.c.b16 %v5695, %v5695
    %v5797 = vsel %vm4993, %v5544, 0
    %v5800 = vsel %vm4997, %v5744, 0
    %v5803 = vsel %vm4997, %v5745, 0
    %v5806 = vsel %vm4997, %v5746, 0
    %v5809 = vsel %vm4997, %v5747, 0
    %5811 = vmatpush.bf16.msra.mxu0 %v5724
    %5812 = vmatpush.bf16.msra.mxu0 %v5720
    %5813 = vmatpush.bf16.msra.mxu0 %v5716
    %5814 = vmatpush.bf16.msra.mxu0 %v5712
    %5815 = vmatpush.bf16.msra.mxu0 %v5708
    %5816 = vmatpush.bf16.msra.mxu0 %v5704
    %5817 = vmatpush.bf16.msra.mxu0 %v5700
    %5818 = vmatpush.bf16.msra.mxu0 %v5696
    %5819 = vmatmul.bf16.gmra.mxu0 %v5543
    %v5820 = vpop.f32.mrf.mxu0
    %v5821 = vadd.f32 0.0, %v5820
    %v5822 = vpop.f32.mrf.mxu0
    %5823 = vdwg.mxu0
    %5824 = vmatpush.bf16.msra.mxu0 0
    %5825 = vmatpush.bf16.msra.mxu0 0
    %5826 = vmatpush.bf16.msra.mxu0 0
    %5827 = vmatpush.bf16.msra.mxu0 %v5800
    %5828 = vmatpush.bf16.msra.mxu0 %v5740
    %5829 = vmatpush.bf16.msra.mxu0 %v5736
    %5830 = vmatpush.bf16.msra.mxu0 %v5732
    %5831 = vmatpush.bf16.msra.mxu0 %v5728
    %5832 = vmatmul.bf16.gmra.mxu0 %v5797
    %v5833 = vpop.f32.mrf.mxu0
    %v5834 = vadd.f32 %v5821, %v5833
    %v5835 = vpop.f32.mrf.mxu0
    %5836 = vdwg.mxu0
    %5837 = vmatpush.bf16.msra.mxu0 %v5725
    %5838 = vmatpush.bf16.msra.mxu0 %v5721
    %5839 = vmatpush.bf16.msra.mxu0 %v5717
    %5840 = vmatpush.bf16.msra.mxu0 %v5713
    %5841 = vmatpush.bf16.msra.mxu0 %v5709
    %5842 = vmatpush.bf16.msra.mxu0 %v5705
    %5843 = vmatpush.bf16.msra.mxu0 %v5701
    %5844 = vmatpush.bf16.msra.mxu0 %v5697
    %5845 = vmatmul.bf16.gmra.mxu0 %v5543
    %v5846 = vpop.f32.mrf.mxu0
    %v5847 = vadd.f32 0.0, %v5846
    %v5848 = vpop.f32.mrf.mxu0
    %5849 = vdwg.mxu0
    %5850 = vmatpush.bf16.msra.mxu0 0
    %5851 = vmatpush.bf16.msra.mxu0 0
    %5852 = vmatpush.bf16.msra.mxu0 0
    %5853 = vmatpush.bf16.msra.mxu0 %v5803
    %5854 = vmatpush.bf16.msra.mxu0 %v5741
    %5855 = vmatpush.bf16.msra.mxu0 %v5737
    %5856 = vmatpush.bf16.msra.mxu0 %v5733
    %5857 = vmatpush.bf16.msra.mxu0 %v5729
    %5858 = vmatmul.bf16.gmra.mxu0 %v5797
    %v5859 = vpop.f32.mrf.mxu0
    %v5860 = vadd.f32 %v5847, %v5859
    %v5861 = vpop.f32.mrf.mxu0
    %5862 = vdwg.mxu0
    %5863 = vmatpush.bf16.msra.mxu0 %v5726
    %5864 = vmatpush.bf16.msra.mxu0 %v5722
    %5865 = vmatpush.bf16.msra.mxu0 %v5718
    %5866 = vmatpush.bf16.msra.mxu0 %v5714
    %5867 = vmatpush.bf16.msra.mxu0 %v5710
    %5868 = vmatpush.bf16.msra.mxu0 %v5706
    %5869 = vmatpush.bf16.msra.mxu0 %v5702
    %5870 = vmatpush.bf16.msra.mxu0 %v5698
    %5871 = vmatmul.bf16.gmra.mxu0 %v5543
    %v5872 = vpop.f32.mrf.mxu0
    %v5873 = vadd.f32 0.0, %v5872
    %v5874 = vpop.f32.mrf.mxu0
    %5875 = vdwg.mxu0
    %5876 = vmatpush.bf16.msra.mxu0 0
    %5877 = vmatpush.bf16.msra.mxu0 0
    %5878 = vmatpush.bf16.msra.mxu0 0
    %5879 = vmatpush.bf16.msra.mxu0 %v5806
    %5880 = vmatpush.bf16.msra.mxu0 %v5742
    %5881 = vmatpush.bf16.msra.mxu0 %v5738
    %5882 = vmatpush.bf16.msra.mxu0 %v5734
    %5883 = vmatpush.bf16.msra.mxu0 %v5730
    %5884 = vmatmul.bf16.gmra.mxu0 %v5797
    %v5885 = vpop.f32.mrf.mxu0
    %v5886 = vadd.f32 %v5873, %v5885
    %v5887 = vpop.f32.mrf.mxu0
    %5888 = vdwg.mxu0
    %5889 = vmatpush.bf16.msra.mxu0 %v5727
    %5890 = vmatpush.bf16.msra.mxu0 %v5723
    %5891 = vmatpush.bf16.msra.mxu0 %v5719
    %5892 = vmatpush.bf16.msra.mxu0 %v5715
    %5893 = vmatpush.bf16.msra.mxu0 %v5711
    %5894 = vmatpush.bf16.msra.mxu0 %v5707
    %5895 = vmatpush.bf16.msra.mxu0 %v5703
    %5896 = vmatpush.bf16.msra.mxu0 %v5699
    %5897 = vmatmul.bf16.gmra.mxu0 %v5543
    %v5898 = vpop.f32.mrf.mxu0
    %v5899 = vadd.f32 0.0, %v5898
    %v5900 = vpop.f32.mrf.mxu0
    %5901 = vdwg.mxu0
    %5902 = vmatpush.bf16.msra.mxu0 0
    %5903 = vmatpush.bf16.msra.mxu0 0
    %5904 = vmatpush.bf16.msra.mxu0 0
    %5905 = vmatpush.bf16.msra.mxu0 %v5809
    %5906 = vmatpush.bf16.msra.mxu0 %v5743
    %5907 = vmatpush.bf16.msra.mxu0 %v5739
    %5908 = vmatpush.bf16.msra.mxu0 %v5735
    %5909 = vmatpush.bf16.msra.mxu0 %v5731
    %5910 = vmatmul.bf16.gmra.mxu0 %v5797
    %v5911 = vpop.f32.mrf.mxu0
    %v5912 = vadd.f32 %v5899, %v5911
    %v5913 = vpop.f32.mrf.mxu0
    %5914 = vdwg.mxu0
    %v5915 = vadd.f32 %v5408, %v5834
    %v5916 = vadd.f32 %v5434, %v5860
    %v5917 = vadd.f32 %v5460, %v5886
    %v5918 = vadd.f32 %v5486, %v5912
    %s5919 = scalar_lea.vmem [#allocation7], 1200
    %v5920 = vld [vmem:[%s5919] sm:$0xff]
    %v5921 = vld [vmem:[%s5919 + $0x8] sm:$0xff]
    %v5922 = vld [vmem:[%s5919 + $0x10] sm:$0xff]
    %v5923 = vld [vmem:[%s5919 + $0x18] sm:$0xff]
    %v5924 = vld [vmem:[%s5919 + $0x20] sm:$0xff]
    %v5925 = vld [vmem:[%s5919 + $0x28] sm:$0xff]
    %v5926 = vld [vmem:[%s5919 + $0x30] sm:$0xff]
    %v5927 = vld [vmem:[%s5919 + $0x38] sm:$0xff]
    %v5928 = vld [vmem:[%s5919 + $0x40] sm:$0xff]
    %v5929 = vld [vmem:[%s5919 + $0x48] sm:$0xff]
    %v5930 = vld [vmem:[%s5919 + $0x50] sm:$0xff]
    %v5931 = vld [vmem:[%s5919 + $0x58] sm:$0xff]
    %v5932 = vld [vmem:[%s5919 + $0x60] sm:$0xff]
    %v5933 = vld [vmem:[%s5919 + $0x68] sm:$0xff]
    %v5934 = vld [vmem:[%s5919 + $0x70] sm:$0xff]
    %v5935 = vld [vmem:[%s5919 + $0x78] sm:$0xff]
    %v5936 = vld [vmem:[%s5919 + $0x80] sm:$0xff]
    %v5937 = vld [vmem:[%s5919 + $0x88] sm:$0xff]
    %v5938 = vld [vmem:[%s5919 + $0x90] sm:$0xff]
    %v5939 = vld [vmem:[%s5919 + $0x98] sm:$0xff]
    %v5940 = vld [vmem:[%s5919 + $0xa0] sm:$0xff]
    %v5941 = vld [vmem:[%s5919 + $0xa8] sm:$0xff]
    %v5942 = vld [vmem:[%s5919 + $0xb0] sm:$0xff]
    %v5943 = vld [vmem:[%s5919 + $0xb8] sm:$0xff]
    %v5944 = vld [vmem:[%s5919 + $0xc0] sm:$0xff]
    %v5945 = vld [vmem:[%s5919 + $0xc8] sm:$0xff]
    %v5946 = vld [vmem:[%s5919 + $0xd0] sm:$0xff]
    %v5947 = vld [vmem:[%s5919 + $0xd8] sm:$0xff]
    %v5948 = vld [vmem:[%s5919 + $0xe0] sm:$0xff]
    %v5949 = vld [vmem:[%s5919 + $0xe8] sm:$0xff]
    %v5950 = vld [vmem:[%s5919 + $0xf0] sm:$0xff]
    %v5951 = vld [vmem:[%s5919 + $0xf8] sm:$0xff]
    %v5952 = vld [vmem:[%s5919 + $0x100] sm:$0xff]
    %v5953 = vld [vmem:[%s5919 + $0x108] sm:$0xff]
    %v5954 = vld [vmem:[%s5919 + $0x110] sm:$0xff]
    %v5955 = vld [vmem:[%s5919 + $0x118] sm:$0xff]
    %v5956 = vld [vmem:[%s5919 + $0x120] sm:$0xff]
    %v5957 = vld [vmem:[%s5919 + $0x128] sm:$0xff]
    %v5958 = vld [vmem:[%s5919 + $0x130] sm:$0xff]
    %v5959 = vld [vmem:[%s5919 + $0x138] sm:$0xff]
    %v5960 = vld [vmem:[%s5919 + $0x140] sm:$0xff]
    %v5961 = vld [vmem:[%s5919 + $0x148] sm:$0xff]
    %v5962 = vld [vmem:[%s5919 + $0x150] sm:$0xff]
    %v5963 = vld [vmem:[%s5919 + $0x158] sm:$0xff]
    %v5964 = vld [vmem:[%s5919 + $0x160] sm:$0xff]
    %v5965 = vld [vmem:[%s5919 + $0x168] sm:$0xff]
    %v5966 = vld [vmem:[%s5919 + $0x170] sm:$0xff]
    %v5967 = vld [vmem:[%s5919 + $0x178] sm:$0xff]
    %v5968 = vld [vmem:[%s5919 + $0x180] sm:$0xff]
    %v5969 = vld [vmem:[%s5919 + $0x188] sm:$0xff]
    %v5971 = vunpack.c.l.b16 %v4635
    %v5972 = vunpack.c.h.b16 %v4635
    %v5973 = vpack.c.b16 %v5971, %v5971
    %v5974 = vpack.c.b16 %v5972, %v5972
    %v6026 = vunpack.c.l.b16 %v5920
    %v6027 = vunpack.c.h.b16 %v5920
    %v6028 = vunpack.c.l.b16 %v5921
    %v6029 = vunpack.c.h.b16 %v5921
    %v6030 = vunpack.c.l.b16 %v5922
    %v6031 = vunpack.c.h.b16 %v5922
    %v6032 = vunpack.c.l.b16 %v5923
    %v6033 = vunpack.c.h.b16 %v5923
    %v6034 = vunpack.c.l.b16 %v5924
    %v6035 = vunpack.c.h.b16 %v5924
    %v6036 = vunpack.c.l.b16 %v5925
    %v6037 = vunpack.c.h.b16 %v5925
    %v6038 = vunpack.c.l.b16 %v5926
    %v6039 = vunpack.c.h.b16 %v5926
    %v6040 = vunpack.c.l.b16 %v5927
    %v6041 = vunpack.c.h.b16 %v5927
    %v6042 = vunpack.c.l.b16 %v5928
    %v6043 = vunpack.c.h.b16 %v5928
    %v6044 = vunpack.c.l.b16 %v5929
    %v6045 = vunpack.c.h.b16 %v5929
    %v6046 = vunpack.c.l.b16 %v5930
    %v6047 = vunpack.c.h.b16 %v5930
    %v6048 = vunpack.c.l.b16 %v5931
    %v6049 = vunpack.c.h.b16 %v5931
    %v6050 = vunpack.c.l.b16 %v5932
    %v6051 = vunpack.c.h.b16 %v5932
    %v6052 = vunpack.c.l.b16 %v5933
    %v6053 = vunpack.c.h.b16 %v5933
    %v6054 = vunpack.c.l.b16 %v5934
    %v6055 = vunpack.c.h.b16 %v5934
    %v6056 = vunpack.c.l.b16 %v5935
    %v6057 = vunpack.c.h.b16 %v5935
    %v6058 = vunpack.c.l.b16 %v5936
    %v6059 = vunpack.c.h.b16 %v5936
    %v6060 = vunpack.c.l.b16 %v5937
    %v6061 = vunpack.c.h.b16 %v5937
    %v6062 = vunpack.c.l.b16 %v5938
    %v6063 = vunpack.c.h.b16 %v5938
    %v6064 = vunpack.c.l.b16 %v5939
    %v6065 = vunpack.c.h.b16 %v5939
    %v6066 = vunpack.c.l.b16 %v5940
    %v6067 = vunpack.c.h.b16 %v5940
    %v6068 = vunpack.c.l.b16 %v5941
    %v6069 = vunpack.c.h.b16 %v5941
    %v6070 = vunpack.c.l.b16 %v5942
    %v6071 = vunpack.c.h.b16 %v5942
    %v6072 = vunpack.c.l.b16 %v5943
    %v6073 = vunpack.c.h.b16 %v5943
    %v6074 = vunpack.c.l.b16 %v5944
    %v6075 = vunpack.c.h.b16 %v5944
    %v6076 = vunpack.c.l.b16 %v5945
    %v6077 = vunpack.c.h.b16 %v5945
    %v6078 = vunpack.c.l.b16 %v5946
    %v6079 = vunpack.c.h.b16 %v5946
    %v6080 = vunpack.c.l.b16 %v5947
    %v6081 = vunpack.c.h.b16 %v5947
    %v6082 = vunpack.c.l.b16 %v5948
    %v6083 = vunpack.c.h.b16 %v5948
    %v6084 = vunpack.c.l.b16 %v5949
    %v6085 = vunpack.c.h.b16 %v5949
    %v6086 = vunpack.c.l.b16 %v5950
    %v6087 = vunpack.c.h.b16 %v5950
    %v6088 = vunpack.c.l.b16 %v5951
    %v6089 = vunpack.c.h.b16 %v5951
    %v6090 = vunpack.c.l.b16 %v5952
    %v6091 = vunpack.c.h.b16 %v5952
    %v6092 = vunpack.c.l.b16 %v5953
    %v6093 = vunpack.c.h.b16 %v5953
    %v6094 = vunpack.c.l.b16 %v5954
    %v6095 = vunpack.c.h.b16 %v5954
    %v6096 = vunpack.c.l.b16 %v5955
    %v6097 = vunpack.c.h.b16 %v5955
    %v6098 = vunpack.c.l.b16 %v5956
    %v6099 = vunpack.c.h.b16 %v5956
    %v6100 = vunpack.c.l.b16 %v5957
    %v6101 = vunpack.c.h.b16 %v5957
    %v6102 = vunpack.c.l.b16 %v5958
    %v6103 = vunpack.c.h.b16 %v5958
    %v6104 = vunpack.c.l.b16 %v5959
    %v6105 = vunpack.c.h.b16 %v5959
    %v6106 = vunpack.c.l.b16 %v5960
    %v6107 = vunpack.c.h.b16 %v5960
    %v6108 = vunpack.c.l.b16 %v5961
    %v6109 = vunpack.c.h.b16 %v5961
    %v6110 = vunpack.c.l.b16 %v5962
    %v6111 = vunpack.c.h.b16 %v5962
    %v6112 = vunpack.c.l.b16 %v5963
    %v6113 = vunpack.c.h.b16 %v5963
    %v6114 = vunpack.c.l.b16 %v5964
    %v6115 = vunpack.c.h.b16 %v5964
    %v6116 = vunpack.c.l.b16 %v5965
    %v6117 = vunpack.c.h.b16 %v5965
    %v6118 = vunpack.c.l.b16 %v5966
    %v6119 = vunpack.c.h.b16 %v5966
    %v6120 = vunpack.c.l.b16 %v5967
    %v6121 = vunpack.c.h.b16 %v5967
    %v6122 = vunpack.c.l.b16 %v5968
    %v6123 = vunpack.c.h.b16 %v5968
    %v6124 = vunpack.c.l.b16 %v5969
    %v6125 = vunpack.c.h.b16 %v5969
    %v6126 = vpack.c.b16 %v6030, %v6026
    %v6127 = vpack.c.b16 %v6031, %v6027
    %v6128 = vpack.c.b16 %v6032, %v6028
    %v6129 = vpack.c.b16 %v6033, %v6029
    %v6130 = vpack.c.b16 %v6038, %v6034
    %v6131 = vpack.c.b16 %v6039, %v6035
    %v6132 = vpack.c.b16 %v6040, %v6036
    %v6133 = vpack.c.b16 %v6041, %v6037
    %v6134 = vpack.c.b16 %v6046, %v6042
    %v6135 = vpack.c.b16 %v6047, %v6043
    %v6136 = vpack.c.b16 %v6048, %v6044
    %v6137 = vpack.c.b16 %v6049, %v6045
    %v6138 = vpack.c.b16 %v6054, %v6050
    %v6139 = vpack.c.b16 %v6055, %v6051
    %v6140 = vpack.c.b16 %v6056, %v6052
    %v6141 = vpack.c.b16 %v6057, %v6053
    %v6142 = vpack.c.b16 %v6062, %v6058
    %v6143 = vpack.c.b16 %v6063, %v6059
    %v6144 = vpack.c.b16 %v6064, %v6060
    %v6145 = vpack.c.b16 %v6065, %v6061
    %v6146 = vpack.c.b16 %v6070, %v6066
    %v6147 = vpack.c.b16 %v6071, %v6067
    %v6148 = vpack.c.b16 %v6072, %v6068
    %v6149 = vpack.c.b16 %v6073, %v6069
    %v6150 = vpack.c.b16 %v6078, %v6074
    %v6151 = vpack.c.b16 %v6079, %v6075
    %v6152 = vpack.c.b16 %v6080, %v6076
    %v6153 = vpack.c.b16 %v6081, %v6077
    %v6154 = vpack.c.b16 %v6086, %v6082
    %v6155 = vpack.c.b16 %v6087, %v6083
    %v6156 = vpack.c.b16 %v6088, %v6084
    %v6157 = vpack.c.b16 %v6089, %v6085
    %v6158 = vpack.c.b16 %v6094, %v6090
    %v6159 = vpack.c.b16 %v6095, %v6091
    %v6160 = vpack.c.b16 %v6096, %v6092
    %v6161 = vpack.c.b16 %v6097, %v6093
    %v6162 = vpack.c.b16 %v6102, %v6098
    %v6163 = vpack.c.b16 %v6103, %v6099
    %v6164 = vpack.c.b16 %v6104, %v6100
    %v6165 = vpack.c.b16 %v6105, %v6101
    %v6166 = vpack.c.b16 %v6110, %v6106
    %v6167 = vpack.c.b16 %v6111, %v6107
    %v6168 = vpack.c.b16 %v6112, %v6108
    %v6169 = vpack.c.b16 %v6113, %v6109
    %v6170 = vpack.c.b16 %v6118, %v6114
    %v6171 = vpack.c.b16 %v6119, %v6115
    %v6172 = vpack.c.b16 %v6120, %v6116
    %v6173 = vpack.c.b16 %v6121, %v6117
    %v6174 = vpack.c.b16 %v6122, %v6122
    %v6175 = vpack.c.b16 %v6123, %v6123
    %v6176 = vpack.c.b16 %v6124, %v6124
    %v6177 = vpack.c.b16 %v6125, %v6125
    %v6227 = vsel %vm4993, %v5974, 0
    %v6230 = vsel %vm4997, %v6174, 0
    %v6233 = vsel %vm4997, %v6175, 0
    %v6236 = vsel %vm4997, %v6176, 0
    %v6239 = vsel %vm4997, %v6177, 0
    %6241 = vmatpush.bf16.msra.mxu0 %v6154
    %6242 = vmatpush.bf16.msra.mxu0 %v6150
    %6243 = vmatpush.bf16.msra.mxu0 %v6146
    %6244 = vmatpush.bf16.msra.mxu0 %v6142
    %6245 = vmatpush.bf16.msra.mxu0 %v6138
    %6246 = vmatpush.bf16.msra.mxu0 %v6134
    %6247 = vmatpush.bf16.msra.mxu0 %v6130
    %6248 = vmatpush.bf16.msra.mxu0 %v6126
    %6249 = vmatmul.bf16.gmra.mxu0 %v5973
    %v6250 = vpop.f32.mrf.mxu0
    %v6251 = vadd.f32 0.0, %v6250
    %v6252 = vpop.f32.mrf.mxu0
    %6253 = vdwg.mxu0
    %6254 = vmatpush.bf16.msra.mxu0 0
    %6255 = vmatpush.bf16.msra.mxu0 0
    %6256 = vmatpush.bf16.msra.mxu0 0
    %6257 = vmatpush.bf16.msra.mxu0 %v6230
    %6258 = vmatpush.bf16.msra.mxu0 %v6170
    %6259 = vmatpush.bf16.msra.mxu0 %v6166
    %6260 = vmatpush.bf16.msra.mxu0 %v6162
    %6261 = vmatpush.bf16.msra.mxu0 %v6158
    %6262 = vmatmul.bf16.gmra.mxu0 %v6227
    %v6263 = vpop.f32.mrf.mxu0
    %v6264 = vadd.f32 %v6251, %v6263
    %v6265 = vpop.f32.mrf.mxu0
    %6266 = vdwg.mxu0
    %6267 = vmatpush.bf16.msra.mxu0 %v6155
    %6268 = vmatpush.bf16.msra.mxu0 %v6151
    %6269 = vmatpush.bf16.msra.mxu0 %v6147
    %6270 = vmatpush.bf16.msra.mxu0 %v6143
    %6271 = vmatpush.bf16.msra.mxu0 %v6139
    %6272 = vmatpush.bf16.msra.mxu0 %v6135
    %6273 = vmatpush.bf16.msra.mxu0 %v6131
    %6274 = vmatpush.bf16.msra.mxu0 %v6127
    %6275 = vmatmul.bf16.gmra.mxu0 %v5973
    %v6276 = vpop.f32.mrf.mxu0
    %v6277 = vadd.f32 0.0, %v6276
    %v6278 = vpop.f32.mrf.mxu0
    %6279 = vdwg.mxu0
    %6280 = vmatpush.bf16.msra.mxu0 0
    %6281 = vmatpush.bf16.msra.mxu0 0
    %6282 = vmatpush.bf16.msra.mxu0 0
    %6283 = vmatpush.bf16.msra.mxu0 %v6233
    %6284 = vmatpush.bf16.msra.mxu0 %v6171
    %6285 = vmatpush.bf16.msra.mxu0 %v6167
    %6286 = vmatpush.bf16.msra.mxu0 %v6163
    %6287 = vmatpush.bf16.msra.mxu0 %v6159
    %6288 = vmatmul.bf16.gmra.mxu0 %v6227
    %v6289 = vpop.f32.mrf.mxu0
    %v6290 = vadd.f32 %v6277, %v6289
    %v6291 = vpop.f32.mrf.mxu0
    %6292 = vdwg.mxu0
    %6293 = vmatpush.bf16.msra.mxu0 %v6156
    %6294 = vmatpush.bf16.msra.mxu0 %v6152
    %6295 = vmatpush.bf16.msra.mxu0 %v6148
    %6296 = vmatpush.bf16.msra.mxu0 %v6144
    %6297 = vmatpush.bf16.msra.mxu0 %v6140
    %6298 = vmatpush.bf16.msra.mxu0 %v6136
    %6299 = vmatpush.bf16.msra.mxu0 %v6132
    %6300 = vmatpush.bf16.msra.mxu0 %v6128
    %6301 = vmatmul.bf16.gmra.mxu0 %v5973
    %v6302 = vpop.f32.mrf.mxu0
    %v6303 = vadd.f32 0.0, %v6302
    %v6304 = vpop.f32.mrf.mxu0
    %6305 = vdwg.mxu0
    %6306 = vmatpush.bf16.msra.mxu0 0
    %6307 = vmatpush.bf16.msra.mxu0 0
    %6308 = vmatpush.bf16.msra.mxu0 0
    %6309 = vmatpush.bf16.msra.mxu0 %v6236
    %6310 = vmatpush.bf16.msra.mxu0 %v6172
    %6311 = vmatpush.bf16.msra.mxu0 %v6168
    %6312 = vmatpush.bf16.msra.mxu0 %v6164
    %6313 = vmatpush.bf16.msra.mxu0 %v6160
    %6314 = vmatmul.bf16.gmra.mxu0 %v6227
    %v6315 = vpop.f32.mrf.mxu0
    %v6316 = vadd.f32 %v6303, %v6315
    %v6317 = vpop.f32.mrf.mxu0
    %6318 = vdwg.mxu0
    %6319 = vmatpush.bf16.msra.mxu0 %v6157
    %6320 = vmatpush.bf16.msra.mxu0 %v6153
    %6321 = vmatpush.bf16.msra.mxu0 %v6149
    %6322 = vmatpush.bf16.msra.mxu0 %v6145
    %6323 = vmatpush.bf16.msra.mxu0 %v6141
    %6324 = vmatpush.bf16.msra.mxu0 %v6137
    %6325 = vmatpush.bf16.msra.mxu0 %v6133
    %6326 = vmatpush.bf16.msra.mxu0 %v6129
    %6327 = vmatmul.bf16.gmra.mxu0 %v5973
    %v6328 = vpop.f32.mrf.mxu0
    %v6329 = vadd.f32 0.0, %v6328
    %v6330 = vpop.f32.mrf.mxu0
    %6331 = vdwg.mxu0
    %6332 = vmatpush.bf16.msra.mxu0 0
    %6333 = vmatpush.bf16.msra.mxu0 0
    %6334 = vmatpush.bf16.msra.mxu0 0
    %6335 = vmatpush.bf16.msra.mxu0 %v6239
    %6336 = vmatpush.bf16.msra.mxu0 %v6173
    %6337 = vmatpush.bf16.msra.mxu0 %v6169
    %6338 = vmatpush.bf16.msra.mxu0 %v6165
    %6339 = vmatpush.bf16.msra.mxu0 %v6161
    %6340 = vmatmul.bf16.gmra.mxu0 %v6227
    %v6341 = vpop.f32.mrf.mxu0
    %v6342 = vadd.f32 %v6329, %v6341
    %v6343 = vpop.f32.mrf.mxu0
    %6344 = vdwg.mxu0
    %v6345 = vadd.f32 %v5915, %v6264
    %v6346 = vadd.f32 %v5916, %v6290
    %v6347 = vadd.f32 %v5917, %v6316
    %v6348 = vadd.f32 %v5918, %v6342
    %v6349 = vld [vmem:[%s8] sm:$0xf]
    %v6351 = vperm.slane %v6349, 0
    %v6352 = vperm.slane %v6349, 1
    %v6353 = vperm.slane %v6349, 2
    %v6354 = vperm.slane %v6349, 3
    %v6359 = vadd.f32 %v6345, %v6351
    %v6360 = vadd.f32 %v6346, %v6352
    %v6361 = vadd.f32 %v6347, %v6353
    %v6362 = vadd.f32 %v6348, %v6354
    %v6363 = vmax.f32 %v6359, 0.0
    %v6364 = vmax.f32 %v6360, 0.0
    %v6365 = vmax.f32 %v6361, 0.0
    %v6366 = vmax.f32 %v6362, 0.0
    %v6367 = vmin.f32 %v6363, 6.0
    %v6368 = vmin.f32 %v6364, 6.0
    %v6369 = vmin.f32 %v6365, 6.0
    %v6370 = vmin.f32 %v6366, 6.0
    %v6371 = vpack.c.bf16 %v6367, %v6367
    %v6372 = vpack.c.bf16 %v6368, %v6368
    %v6373 = vpack.c.bf16 %v6369, %v6369
    %v6374 = vpack.c.bf16 %v6370, %v6370
    %v6375 = vld [vmem:[#allocation9] sm:$0xf]
    %v6376 = vld [vmem:[#allocation9 + $0x4] sm:$0xf]
    %v6377 = vld [vmem:[#allocation9 + $0x8] sm:$0xf]
    %v6378 = vld [vmem:[#allocation9 + $0xc] sm:$0xf]
    %v6379 = vld [vmem:[#allocation9 + $0x10] sm:$0xf]
    %v6380 = vld [vmem:[#allocation9 + $0x14] sm:$0xf]
    %v6381 = vld [vmem:[#allocation9 + $0x18] sm:$0xf]
    %v6382 = vld [vmem:[#allocation9 + $0x1c] sm:$0xf]
    %v6383 = vld [vmem:[#allocation9 + $0x20] sm:$0xf]
    %v6384 = vld [vmem:[#allocation9 + $0x24] sm:$0xf]
    %v6385 = vld [vmem:[#allocation9 + $0x28] sm:$0xf]
    %v6386 = vld [vmem:[#allocation9 + $0x2c] sm:$0xf]
    %v6387 = vld [vmem:[#allocation9 + $0x30] sm:$0xf]
    %v6388 = vld [vmem:[#allocation9 + $0x34] sm:$0xf]
    %v6389 = vld [vmem:[#allocation9 + $0x38] sm:$0xf]
    %v6390 = vld [vmem:[#allocation9 + $0x3c] sm:$0xf]
    %v6391 = vld [vmem:[#allocation9 + $0x40] sm:$0xf]
    %v6392 = vld [vmem:[#allocation9 + $0x44] sm:$0xf]
    %v6393 = vld [vmem:[#allocation9 + $0x48] sm:$0xf]
    %v6394 = vld [vmem:[#allocation9 + $0x4c] sm:$0xf]
    %v6395 = vld [vmem:[#allocation9 + $0x50] sm:$0xf]
    %v6396 = vld [vmem:[#allocation9 + $0x54] sm:$0xf]
    %v6397 = vld [vmem:[#allocation9 + $0x58] sm:$0xf]
    %v6398 = vld [vmem:[#allocation9 + $0x5c] sm:$0xf]
    %v6399 = vld [vmem:[#allocation9 + $0x60] sm:$0xf]
    %v6400 = vld [vmem:[#allocation9 + $0x64] sm:$0xf]
    %v6401 = vld [vmem:[#allocation9 + $0x68] sm:$0xf]
    %v6402 = vld [vmem:[#allocation9 + $0x6c] sm:$0xf]
    %v6403 = vld [vmem:[#allocation9 + $0x70] sm:$0xf]
    %v6404 = vld [vmem:[#allocation9 + $0x74] sm:$0xf]
    %v6405 = vld [vmem:[#allocation9 + $0x78] sm:$0xf]
    %v6406 = vld [vmem:[#allocation9 + $0x7c] sm:$0xf]
    %v6407 = vld [vmem:[#allocation9 + $0x80] sm:$0xf]
    %v6408 = vld [vmem:[#allocation9 + $0x84] sm:$0xf]
    %v6409 = vld [vmem:[#allocation9 + $0x88] sm:$0xf]
    %v6410 = vld [vmem:[#allocation9 + $0x8c] sm:$0xf]
    %v6411 = vld [vmem:[#allocation9 + $0x90] sm:$0xf]
    %v6412 = vld [vmem:[#allocation9 + $0x94] sm:$0xf]
    %v6413 = vld [vmem:[#allocation9 + $0x98] sm:$0xf]
    %v6414 = vld [vmem:[#allocation9 + $0x9c] sm:$0xf]
    %v6415 = vld [vmem:[#allocation9 + $0xa0] sm:$0xf]
    %v6416 = vld [vmem:[#allocation9 + $0xa4] sm:$0xf]
    %v6417 = vld [vmem:[#allocation9 + $0xa8] sm:$0xf]
    %v6418 = vld [vmem:[#allocation9 + $0xac] sm:$0xf]
    %v6419 = vld [vmem:[#allocation9 + $0xb0] sm:$0xf]
    %v6420 = vld [vmem:[#allocation9 + $0xb4] sm:$0xf]
    %v6421 = vld [vmem:[#allocation9 + $0xb8] sm:$0xf]
    %v6422 = vld [vmem:[#allocation9 + $0xbc] sm:$0xf]
    %v6423 = vld [vmem:[#allocation9 + $0xc0] sm:$0xf]
    %v6424 = vld [vmem:[#allocation9 + $0xc4] sm:$0xf]
    %v6425 = vld [vmem:[#allocation9 + $0xc8] sm:$0xf]
    %v6426 = vld [vmem:[#allocation9 + $0xcc] sm:$0xf]
    %v6427 = vld [vmem:[#allocation9 + $0xd0] sm:$0xf]
    %v6428 = vld [vmem:[#allocation9 + $0xd4] sm:$0xf]
    %v6429 = vld [vmem:[#allocation9 + $0xd8] sm:$0xf]
    %v6430 = vld [vmem:[#allocation9 + $0xdc] sm:$0xf]
    %v6431 = vld [vmem:[#allocation9 + $0xe0] sm:$0xf]
    %v6432 = vld [vmem:[#allocation9 + $0xe4] sm:$0xf]
    %v6433 = vld [vmem:[#allocation9 + $0xe8] sm:$0xf]
    %v6434 = vld [vmem:[#allocation9 + $0xec] sm:$0xf]
    %v6435 = vld [vmem:[#allocation9 + $0xf0] sm:$0xf]
    %v6436 = vld [vmem:[#allocation9 + $0xf4] sm:$0xf]
    %v6437 = vld [vmem:[#allocation9 + $0xf8] sm:$0x3]
    %v6438 = vld [vmem:[%s10] sm:$0x1]
    %v6440 = vperm.slane %v6438, 0
    %v6505 = vunpack.c.l.b16 %v6375
    %v6506 = vunpack.c.l.b16 %v6376
    %v6507 = vunpack.c.l.b16 %v6377
    %v6508 = vunpack.c.l.b16 %v6378
    %v6509 = vunpack.c.l.b16 %v6379
    %v6510 = vunpack.c.l.b16 %v6380
    %v6511 = vunpack.c.l.b16 %v6381
    %v6512 = vunpack.c.l.b16 %v6382
    %v6513 = vunpack.c.l.b16 %v6383
    %v6514 = vunpack.c.l.b16 %v6384
    %v6515 = vunpack.c.l.b16 %v6385
    %v6516 = vunpack.c.l.b16 %v6386
    %v6517 = vunpack.c.l.b16 %v6387
    %v6518 = vunpack.c.l.b16 %v6388
    %v6519 = vunpack.c.l.b16 %v6389
    %v6520 = vunpack.c.l.b16 %v6390
    %v6521 = vunpack.c.l.b16 %v6391
    %v6522 = vunpack.c.l.b16 %v6392
    %v6523 = vunpack.c.l.b16 %v6393
    %v6524 = vunpack.c.l.b16 %v6394
    %v6525 = vunpack.c.l.b16 %v6395
    %v6526 = vunpack.c.l.b16 %v6396
    %v6527 = vunpack.c.l.b16 %v6397
    %v6528 = vunpack.c.l.b16 %v6398
    %v6529 = vunpack.c.l.b16 %v6399
    %v6530 = vunpack.c.l.b16 %v6400
    %v6531 = vunpack.c.l.b16 %v6401
    %v6532 = vunpack.c.l.b16 %v6402
    %v6533 = vunpack.c.l.b16 %v6403
    %v6534 = vunpack.c.l.b16 %v6404
    %v6535 = vunpack.c.l.b16 %v6405
    %v6536 = vunpack.c.l.b16 %v6406
    %v6537 = vunpack.c.l.b16 %v6407
    %v6538 = vunpack.c.l.b16 %v6408
    %v6539 = vunpack.c.l.b16 %v6409
    %v6540 = vunpack.c.l.b16 %v6410
    %v6541 = vunpack.c.l.b16 %v6411
    %v6542 = vunpack.c.l.b16 %v6412
    %v6543 = vunpack.c.l.b16 %v6413
    %v6544 = vunpack.c.l.b16 %v6414
    %v6545 = vunpack.c.l.b16 %v6415
    %v6546 = vunpack.c.l.b16 %v6416
    %v6547 = vunpack.c.l.b16 %v6417
    %v6548 = vunpack.c.l.b16 %v6418
    %v6549 = vunpack.c.l.b16 %v6419
    %v6550 = vunpack.c.l.b16 %v6420
    %v6551 = vunpack.c.l.b16 %v6421
    %v6552 = vunpack.c.l.b16 %v6422
    %v6553 = vunpack.c.l.b16 %v6423
    %v6554 = vunpack.c.l.b16 %v6424
    %v6555 = vunpack.c.l.b16 %v6425
    %v6556 = vunpack.c.l.b16 %v6426
    %v6557 = vunpack.c.l.b16 %v6427
    %v6558 = vunpack.c.l.b16 %v6428
    %v6559 = vunpack.c.l.b16 %v6429
    %v6560 = vunpack.c.l.b16 %v6430
    %v6561 = vunpack.c.l.b16 %v6431
    %v6562 = vunpack.c.l.b16 %v6432
    %v6563 = vunpack.c.l.b16 %v6433
    %v6564 = vunpack.c.l.b16 %v6434
    %v6565 = vunpack.c.l.b16 %v6435
    %v6566 = vunpack.c.l.b16 %v6436
    %v6567 = vunpack.c.l.b16 %v6437
    %v6568 = vpack.c.b16 %v6506, %v6505
    %v6569 = vpack.c.b16 %v6508, %v6507
    %v6570 = vpack.c.b16 %v6510, %v6509
    %v6571 = vpack.c.b16 %v6512, %v6511
    %v6572 = vpack.c.b16 %v6514, %v6513
    %v6573 = vpack.c.b16 %v6516, %v6515
    %v6574 = vpack.c.b16 %v6518, %v6517
    %v6575 = vpack.c.b16 %v6520, %v6519
    %v6576 = vpack.c.b16 %v6522, %v6521
    %v6577 = vpack.c.b16 %v6524, %v6523
    %v6578 = vpack.c.b16 %v6526, %v6525
    %v6579 = vpack.c.b16 %v6528, %v6527
    %v6580 = vpack.c.b16 %v6530, %v6529
    %v6581 = vpack.c.b16 %v6532, %v6531
    %v6582 = vpack.c.b16 %v6534, %v6533
    %v6583 = vpack.c.b16 %v6536, %v6535
    %v6584 = vpack.c.b16 %v6538, %v6537
    %v6585 = vpack.c.b16 %v6540, %v6539
    %v6586 = vpack.c.b16 %v6542, %v6541
    %v6587 = vpack.c.b16 %v6544, %v6543
    %v6588 = vpack.c.b16 %v6546, %v6545
    %v6589 = vpack.c.b16 %v6548, %v6547
    %v6590 = vpack.c.b16 %v6550, %v6549
    %v6591 = vpack.c.b16 %v6552, %v6551
    %v6592 = vpack.c.b16 %v6554, %v6553
    %v6593 = vpack.c.b16 %v6556, %v6555
    %v6594 = vpack.c.b16 %v6558, %v6557
    %v6595 = vpack.c.b16 %v6560, %v6559
    %v6596 = vpack.c.b16 %v6562, %v6561
    %v6597 = vpack.c.b16 %v6564, %v6563
    %v6598 = vpack.c.b16 %v6566, %v6565
    %v6599 = vpack.c.b16 %v6567, %v6567
    %vm6631 = vcmask 949248
    %v6633 = vsel %vm6631, %v6374, 0
    %vm6635 = vcmask 1041408
    %v6637 = vsel %vm6635, %v6599, 0
    %6639 = vmatpush.bf16.msra.mxu0 %v6575
    %6640 = vmatpush.bf16.msra.mxu0 %v6574
    %6641 = vmatpush.bf16.msra.mxu0 %v6573
    %6642 = vmatpush.bf16.msra.mxu0 %v6572
    %6643 = vmatpush.bf16.msra.mxu0 %v6571
    %6644 = vmatpush.bf16.msra.mxu0 %v6570
    %6645 = vmatpush.bf16.msra.mxu0 %v6569
    %6646 = vmatpush.bf16.msra.mxu0 %v6568
    %6647 = vmatmul.bf16.gmra.mxu0 %v6371
    %v6648 = vpop.f32.mrf.mxu0
    %v6649 = vadd.f32 %v6440, %v6648
    %v6650 = vpop.f32.mrf.mxu0
    %6651 = vdwg.mxu0
    %6652 = vmatpush.bf16.msra.mxu0 %v6583
    %6653 = vmatpush.bf16.msra.mxu0 %v6582
    %6654 = vmatpush.bf16.msra.mxu0 %v6581
    %6655 = vmatpush.bf16.msra.mxu0 %v6580
    %6656 = vmatpush.bf16.msra.mxu0 %v6579
    %6657 = vmatpush.bf16.msra.mxu0 %v6578
    %6658 = vmatpush.bf16.msra.mxu0 %v6577
    %6659 = vmatpush.bf16.msra.mxu0 %v6576
    %6660 = vmatmul.bf16.gmra.mxu0 %v6372
    %v6661 = vpop.f32.mrf.mxu0
    %v6662 = vadd.f32 %v6649, %v6661
    %v6663 = vpop.f32.mrf.mxu0
    %6664 = vdwg.mxu0
    %6665 = vmatpush.bf16.msra.mxu0 %v6591
    %6666 = vmatpush.bf16.msra.mxu0 %v6590
    %6667 = vmatpush.bf16.msra.mxu0 %v6589
    %6668 = vmatpush.bf16.msra.mxu0 %v6588
    %6669 = vmatpush.bf16.msra.mxu0 %v6587
    %6670 = vmatpush.bf16.msra.mxu0 %v6586
    %6671 = vmatpush.bf16.msra.mxu0 %v6585
    %6672 = vmatpush.bf16.msra.mxu0 %v6584
    %6673 = vmatmul.bf16.gmra.mxu0 %v6373
    %v6674 = vpop.f32.mrf.mxu0
    %v6675 = vadd.f32 %v6662, %v6674
    %v6676 = vpop.f32.mrf.mxu0
    %6677 = vdwg.mxu0
    %6678 = vmatpush.bf16.msra.mxu0 %v6637
    %6679 = vmatpush.bf16.msra.mxu0 %v6598
    %6680 = vmatpush.bf16.msra.mxu0 %v6597
    %6681 = vmatpush.bf16.msra.mxu0 %v6596
    %6682 = vmatpush.bf16.msra.mxu0 %v6595
    %6683 = vmatpush.bf16.msra.mxu0 %v6594
    %6684 = vmatpush.bf16.msra.mxu0 %v6593
    %6685 = vmatpush.bf16.msra.mxu0 %v6592
    %6686 = vmatmul.bf16.gmra.mxu0 %v6633
    %v6687 = vpop.f32.mrf.mxu0
    %v6688 = vadd.f32 %v6675, %v6687
    %v6689 = vpop.f32.mrf.mxu0
    %6690 = vdwg.mxu0
    %vm6691 = vcmask 80896
    %v6692 = vsel %vm6691, %v6688, -inf
    %6693 = vmax.xlane.f32.xlu0 %v6692
    %v6694 = vpop.xlane.xlu0 %6693
    %v6695 = vsub.f32 %v6688, %v6694
    %v6696 = vmul.f32 %v6695, 1.442695
    %v6697 = vpow.pop %v6696
    %v6698 = vsel %vm6691, %v6697, 0.0
    %6699 = vadd.xlane.f32.xlu0 %v6698
    %v6700 = vpop.xlane.xlu0 %6699
    %v6701 = vlog2.pop %v6700
    %v6702 = vmul.f32 %v6701, 0.6931472
    %v6703 = vsub.f32 %v6695, %v6702
    %6704 = vst.msk [vmem:[%s11] sm:$0xff] %vm6691, %v6703
    // Predicated region
    $region66: #{forward.1} parent=1 // pred_check
      _
    $region67: #{forward.1} parent=1 // pred_check_branch
      %6706 = sbr.rel (0) target = $region69
    $region68: #{forward.1} parent=1 // pred_region
      _
    $region69: #{forward.1} parent=1 // pred_fallthru
      _
    // Predicated region
    $region70: #{forward.1} parent=1 // pred_check
      _
    $region71: #{forward.1} parent=1 // pred_check_branch
      %6708 = sbr.rel (0) target = $region73
    $region72: #{forward.1} parent=1 // pred_region
      _
    $region73: #{forward.1} parent=1 // pred_fallthru
      _
    %6709 = vsyncpa [#allocation3], 1
    %6710 = vsyncpa [#allocation5], 1
    %6711 = vsyncpa [#allocation8], 1

</llo_original>
